<compile_context>
chip_gen: v7x
topology: tpu7x:2x2x1
jax: 0.10.0
libtpu: 0.0.40
codegen_flags: <defaults>
</compile_context>

<pallas_src>
import functools

import jax
import jax.numpy as jnp
from jax import lax
from jax.experimental import pallas as pl
from jax.experimental.pallas import tpu as pltpu

EPS = 1e-6


def _vmem_limit_bytes():
    # Explicit scoped-VMEM budget (defaults are only 16 MiB v5e / 32 MiB
    # v6e,v7x).  Use ~3/4 of physical capacity when queryable (=> ~96 MiB on
    # v5e/v6e, ~48 MiB on v7x), otherwise a safe 48 MiB that fits every chip.
    try:
        cap = int(pltpu.get_tpu_info().vmem_capacity_bytes)
        if cap >= 32 * 1024 * 1024:
            return min((cap * 3) // 4, 96 * 1024 * 1024)
    except Exception:
        pass
    return 48 * 1024 * 1024


# --------------------------------------------------------------------------
# Kernel 1a: token-tiled GroupNorm(32) statistics.
# Grid: (B, N/tm) with the token axis as a reduction ("arbitrary").
# Accumulates per-channel sum / sum-of-squares in VMEM scratch; at the last
# token tile aggregates channels -> groups via a lane-dense membership mask
# and emits per-channel affine scale/shift.
# --------------------------------------------------------------------------
def _gn_stats_kernel(x_ref, mask_ref, mask_t_ref, gamma_ref, beta_ref,
                     scale_ref, shift_ref, sum_sc, sq_sc, *, group_count):
    ti = pl.program_id(1)

    @pl.when(ti == 0)
    def _():
        sum_sc[...] = jnp.zeros_like(sum_sc)
        sq_sc[...] = jnp.zeros_like(sq_sc)

    x = x_ref[0]                                             # (tm, Cp) f32
    sum_sc[...] += jnp.sum(x, axis=0, keepdims=True)         # (1, Cp)
    sq_sc[...] += jnp.sum(x * x, axis=0, keepdims=True)      # (1, Cp)

    @pl.when(ti == pl.num_programs(1) - 1)
    def _():
        # Fold sum & sumsq into one (2, Cp) x (Cp, Gp) matmul (lane-dense Gp).
        stats_c = jnp.concatenate([sum_sc[...], sq_sc[...]], axis=0)   # (2, Cp)
        stats_g = jnp.dot(stats_c, mask_ref[...],
                          preferred_element_type=jnp.float32)          # (2, Gp)
        cnt = jnp.float32(group_count)
        mean_g = stats_g[0:1, :] / cnt
        # TODO(synk): one-pass E[x^2]-E[x]^2 variance (clamped); switch to a
        # centered two-pass reduction if tighter tolerance is ever needed.
        var_g = jnp.maximum(stats_g[1:2, :] / cnt - mean_g * mean_g, 0.0)
        rstd_g = lax.rsqrt(var_g + EPS)
        gstats = jnp.concatenate([mean_g, rstd_g], axis=0)             # (2, Gp)
        cstats = jnp.dot(gstats, mask_t_ref[...],
                         preferred_element_type=jnp.float32)           # (2, Cp)
        mean_c = cstats[0:1, :]
        rstd_c = cstats[1:2, :]
        scale_c = rstd_c * gamma_ref[...]                              # (1, Cp)
        shift_c = beta_ref[...] - mean_c * scale_c                     # (1, Cp)
        scale_ref[0] = scale_c
        shift_ref[0] = shift_c


# --------------------------------------------------------------------------
# Kernel 1b: token-tiled normalize + fused (pre-transposed, pre-scaled) QKV.
# Grid: (B, N/tm), fully parallel.
# --------------------------------------------------------------------------
def _norm_qkv_kernel(x_ref, scale_ref, shift_ref, wqkv_ref, bqkv_ref, qkv_ref):
    h = x_ref[0] * scale_ref[0] + shift_ref[0]               # (tm, Cp) f32
    qkv = jnp.dot(h.astype(jnp.bfloat16), wqkv_ref[...],
                  preferred_element_type=jnp.float32) + bqkv_ref[...]
    qkv_ref[0] = qkv.astype(jnp.bfloat16)                    # (tm, 3*Cp)


# --------------------------------------------------------------------------
# Kernel 2 (general): flash-style attention (online softmax over kv tiles)
# + proj_out (pre-transposed) + residual.  Grid: (B, q_tiles, kv_tiles).
# --------------------------------------------------------------------------
def _attn_proj_kernel(x_ref, q_ref, k_ref, v_ref, wp_ref, bp_ref, out_ref,
                      m_sc, l_sc, acc_sc):
    ki = pl.program_id(2)

    @pl.when(ki == 0)
    def _():
        m_sc[...] = jnp.full_like(m_sc, -jnp.inf)
        l_sc[...] = jnp.zeros_like(l_sc)
        acc_sc[...] = jnp.zeros_like(acc_sc)

    q = q_ref[0]                                   # (tq, Cp) bf16 (scale folded)
    k = k_ref[0]                                   # (tk, Cp) bf16
    v = v_ref[0]                                   # (tk, Cp) bf16

    # q . k^T without materializing a transpose: contract the last dims.
    s = lax.dot_general(q, k, (((1,), (1,)), ((), ())),
                        preferred_element_type=jnp.float32)        # (tq, tk)

    m_new = jnp.maximum(m_sc[...], jnp.max(s, axis=-1, keepdims=True))
    alpha = jnp.exp(m_sc[...] - m_new)
    p = jnp.exp(s - m_new)
    l_sc[...] = alpha * l_sc[...] + jnp.sum(p, axis=-1, keepdims=True)
    acc_sc[...] = alpha * acc_sc[...] + jnp.dot(
        p.astype(jnp.bfloat16), v, preferred_element_type=jnp.float32)
    m_sc[...] = m_new

    @pl.when(ki == pl.num_programs(2) - 1)
    def _():
        o = acc_sc[...] * pl.reciprocal(l_sc[...], approx=True)    # (tq, Cp)
        y = jnp.dot(o.astype(jnp.bfloat16), wp_ref[...],
                    preferred_element_type=jnp.float32) + bp_ref[...]
        out_ref[0] = x_ref[0] + y                                  # residual


# --------------------------------------------------------------------------
# Kernel 2 (single kv step, tk == n): plain softmax, no online-softmax
# accumulators / rescale.  Grid: (B, q_tiles).
# --------------------------------------------------------------------------
def _attn_proj_single_kernel(x_ref, q_ref, k_ref, v_ref, wp_ref, bp_ref,
                             out_ref):
    q = q_ref[0]                                   # (tq, Cp) bf16
    k = k_ref[0]                                   # (n,  Cp) bf16
    v = v_ref[0]                                   # (n,  Cp) bf16
    s = lax.dot_general(q, k, (((1,), (1,)), ((), ())),
                        preferred_element_type=jnp.float32)        # (tq, n)
    m = jnp.max(s, axis=-1, keepdims=True)
    p = jnp.exp(s - m)
    l = jnp.sum(p, axis=-1, keepdims=True)
    o = jnp.dot(p.astype(jnp.bfloat16), v, preferred_element_type=jnp.float32)
    o = o * pl.reciprocal(l, approx=True)
    y = jnp.dot(o.astype(jnp.bfloat16), wp_ref[...],
                preferred_element_type=jnp.float32) + bp_ref[...]
    out_ref[0] = x_ref[0] + y


# --------------------------------------------------------------------------
# Wrapper: NCHW -> (B, N, Cp) tokens, weight fusion / transposition / padding,
# three pallas_calls, back to NCHW.
# --------------------------------------------------------------------------
def spatial_self_attention(x_nchw, params, *, num_groups=32,
                           tm=None, tq=None, tk=None):
    b, c, h, w = x_nchw.shape
    n = h * w
    assert c % num_groups == 0
    c_pad = ((c + 127) // 128) * 128               # lane-dense channel padding
    g_pad = ((num_groups + 127) // 128) * 128      # lane-dense group padding

    # Tile defaults (perf review): ~512-token tiles amortize per-step overhead
    # and K/V re-reads while keeping per-step blocks a few MiB; for small
    # images use a single kv step so the online-softmax machinery disappears.
    if tm is None:
        tm = min(512, n)
    if tq is None:
        tq = min(512, n)
    if tk is None:
        tk = n if n <= 1024 else 512
    assert n % tm == 0 and n % tq == 0 and n % tk == 0
    assert tm % 8 == 0 and tq % 8 == 0 and tk % 8 == 0

    vmem_limit = _vmem_limit_bytes()

    # NCHW -> (B, N, Cp) tokens (channels-last), zero-padded channels.
    x_tok = jnp.transpose(x_nchw, (0, 2, 3, 1)).reshape(b, n, c).astype(jnp.float32)
    if c_pad != c:
        x_tok = jnp.pad(x_tok, ((0, 0), (0, 0), (0, c_pad - c)))

    # Channel -> group membership mask; padded channels/groups belong nowhere.
    cg = c // num_groups
    ch = jnp.arange(c_pad)
    gr = jnp.arange(g_pad)
    mask = ((ch[:, None] // cg == gr[None, :])
            & (ch[:, None] < c) & (gr[None, :] < num_groups)).astype(jnp.float32)
    mask_t = mask.T                                                # (Gp, Cp)

    # GroupNorm affine params, zero-padded.
    gamma = jnp.zeros((1, c_pad), jnp.float32).at[0, :c].set(
        params["gn_gamma"].astype(jnp.float32))
    beta = jnp.zeros((1, c_pad), jnp.float32).at[0, :c].set(
        params["gn_beta"].astype(jnp.float32))

    # Fused, pre-transposed QKV weight; 1/sqrt(C) folded into the q block.
    scale_attn = float(c) ** -0.5
    wqkv_t = jnp.zeros((c_pad, 3 * c_pad), jnp.float32)
    wqkv_t = wqkv_t.at[:c, 0 * c_pad:0 * c_pad + c].set(params["wq"].T * scale_attn)
    wqkv_t = wqkv_t.at[:c, 1 * c_pad:1 * c_pad + c].set(params["wk"].T)
    wqkv_t = wqkv_t.at[:c, 2 * c_pad:2 * c_pad + c].set(params["wv"].T)
    wqkv_t = wqkv_t.astype(jnp.bfloat16)

    bqkv = jnp.zeros((1, 3 * c_pad), jnp.float32)
    bqkv = bqkv.at[0, 0 * c_pad:0 * c_pad + c].set(params["bq"] * scale_attn)
    bqkv = bqkv.at[0, 1 * c_pad:1 * c_pad + c].set(params["bk"])
    bqkv = bqkv.at[0, 2 * c_pad:2 * c_pad + c].set(params["bv"])

    wp_t = (jnp.zeros((c_pad, c_pad), jnp.float32)
            .at[:c, :c].set(params["wp"].T).astype(jnp.bfloat16))
    bp = jnp.zeros((1, c_pad), jnp.float32).at[0, :c].set(params["bp"])

    # ---------------- pass 1a: token-tiled GroupNorm statistics ----------------
    scale_c, shift_c = pl.pallas_call(
        functools.partial(_gn_stats_kernel, group_count=float(n * cg)),
        out_shape=(jax.ShapeDtypeStruct((b, 1, c_pad), jnp.float32),
                   jax.ShapeDtypeStruct((b, 1, c_pad), jnp.float32)),
        grid_spec=pltpu.PrefetchScalarGridSpec(
            num_scalar_prefetch=0,
            grid=(b, n // tm),
            in_specs=[
                pl.BlockSpec((1, tm, c_pad), lambda bi, ti: (bi, ti, 0)),    # x
                pl.BlockSpec((c_pad, g_pad), lambda bi, ti: (0, 0)),         # mask
                pl.BlockSpec((g_pad, c_pad), lambda bi, ti: (0, 0)),         # mask^T
                pl.BlockSpec((1, c_pad), lambda bi, ti: (0, 0)),             # gamma
                pl.BlockSpec((1, c_pad), lambda bi, ti: (0, 0)),             # beta
            ],
            out_specs=[
                pl.BlockSpec((1, 1, c_pad), lambda bi, ti: (bi, 0, 0)),      # scale
                pl.BlockSpec((1, 1, c_pad), lambda bi, ti: (bi, 0, 0)),      # shift
            ],
            scratch_shapes=[pltpu.VMEM((1, c_pad), jnp.float32),   # sum
                            pltpu.VMEM((1, c_pad), jnp.float32)],  # sumsq
        ),
        compiler_params=pltpu.CompilerParams(
            dimension_semantics=("parallel", "arbitrary"),
            vmem_limit_bytes=vmem_limit),
    )(x_tok, mask, mask_t, gamma, beta)

    # ---------------- pass 1b: token-tiled normalize + fused QKV ----------------
    qkv = pl.pallas_call(
        _norm_qkv_kernel,
        out_shape=jax.ShapeDtypeStruct((b, n, 3 * c_pad), jnp.bfloat16),
        grid_spec=pltpu.PrefetchScalarGridSpec(
            num_scalar_prefetch=0,
            grid=(b, n // tm),
            in_specs=[
                pl.BlockSpec((1, tm, c_pad), lambda bi, ti: (bi, ti, 0)),    # x
                pl.BlockSpec((1, 1, c_pad), lambda bi, ti: (bi, 0, 0)),      # scale
                pl.BlockSpec((1, 1, c_pad), lambda bi, ti: (bi, 0, 0)),      # shift
                pl.BlockSpec((c_pad, 3 * c_pad), lambda bi, ti: (0, 0)),     # Wqkv^T
                pl.BlockSpec((1, 3 * c_pad), lambda bi, ti: (0, 0)),         # bqkv
            ],
            out_specs=pl.BlockSpec((1, tm, 3 * c_pad), lambda bi, ti: (bi, ti, 0)),
        ),
        compiler_params=pltpu.CompilerParams(
            dimension_semantics=("parallel", "parallel"),
            vmem_limit_bytes=vmem_limit),
    )(x_tok, scale_c, shift_c, wqkv_t, bqkv)

    # ------- pass 2: attention + proj_out + residual -------
    # q / k / v are read from the same fused qkv tensor via block indices
    # 0 / 1 / 2 along the last (3*Cp) axis.
    if tk == n:
        # Single kv step: no online-softmax machinery, K/V resident across
        # q tiles (constant block index), grid (B, q_tiles).
        attn_call = pl.pallas_call(
            _attn_proj_single_kernel,
            out_shape=jax.ShapeDtypeStruct((b, n, c_pad), jnp.float32),
            grid_spec=pltpu.PrefetchScalarGridSpec(
                num_scalar_prefetch=0,
                grid=(b, n // tq),
                in_specs=[
                    pl.BlockSpec((1, tq, c_pad), lambda bi, qi: (bi, qi, 0)),  # x
                    pl.BlockSpec((1, tq, c_pad), lambda bi, qi: (bi, qi, 0)),  # q
                    pl.BlockSpec((1, n, c_pad), lambda bi, qi: (bi, 0, 1)),    # k
                    pl.BlockSpec((1, n, c_pad), lambda bi, qi: (bi, 0, 2)),    # v
                    pl.BlockSpec((c_pad, c_pad), lambda bi, qi: (0, 0)),       # Wp^T
                    pl.BlockSpec((1, c_pad), lambda bi, qi: (0, 0)),           # bp
                ],
                out_specs=pl.BlockSpec((1, tq, c_pad), lambda bi, qi: (bi, qi, 0)),
            ),
            input_output_aliases={0: 0},   # reuse x_tok HBM buffer for the output
            compiler_params=pltpu.CompilerParams(
                dimension_semantics=("parallel", "parallel"),
                vmem_limit_bytes=vmem_limit),
        )
    else:
        attn_call = pl.pallas_call(
            _attn_proj_kernel,
            out_shape=jax.ShapeDtypeStruct((b, n, c_pad), jnp.float32),
            grid_spec=pltpu.PrefetchScalarGridSpec(
                num_scalar_prefetch=0,
                grid=(b, n // tq, n // tk),
                in_specs=[
                    pl.BlockSpec((1, tq, c_pad), lambda bi, qi, ki: (bi, qi, 0)),  # x
                    pl.BlockSpec((1, tq, c_pad), lambda bi, qi, ki: (bi, qi, 0)),  # q
                    pl.BlockSpec((1, tk, c_pad), lambda bi, qi, ki: (bi, ki, 1)),  # k
                    pl.BlockSpec((1, tk, c_pad), lambda bi, qi, ki: (bi, ki, 2)),  # v
                    pl.BlockSpec((c_pad, c_pad), lambda bi, qi, ki: (0, 0)),       # Wp^T
                    pl.BlockSpec((1, c_pad), lambda bi, qi, ki: (0, 0)),           # bp
                ],
                out_specs=pl.BlockSpec((1, tq, c_pad),
                                       lambda bi, qi, ki: (bi, qi, 0)),
                scratch_shapes=[
                    pltpu.VMEM((tq, 1), jnp.float32),        # running max
                    pltpu.VMEM((tq, 1), jnp.float32),        # running denom
                    pltpu.VMEM((tq, c_pad), jnp.float32),    # output accumulator
                ],
            ),
            input_output_aliases={0: 0},   # reuse x_tok HBM buffer for the output
            compiler_params=pltpu.CompilerParams(
                dimension_semantics=("parallel", "parallel", "arbitrary"),
                vmem_limit_bytes=vmem_limit),
        )
    out_tok = attn_call(x_tok, qkv, qkv, qkv, wp_t, bp)

    # (B, N, Cp) -> NCHW (drop channel padding)
    out_tok = out_tok[:, :, :c]
    return jnp.transpose(out_tok.reshape(b, h, w, c), (0, 3, 1, 2))


# --------------------------------------------------------------------------
# Pure-JAX reference of the PyTorch forward (f32), NCHW in/out.
# --------------------------------------------------------------------------
def reference(x_nchw, params, *, num_groups=32):
    b, c, h, w = x_nchw.shape
    x = x_nchw.astype(jnp.float32)
    xg = x.reshape(b, num_groups, c // num_groups, h, w)
    mean = jnp.mean(xg, axis=(2, 3, 4), keepdims=True)
    var = jnp.var(xg, axis=(2, 3, 4), keepdims=True)
    hn = ((xg - mean) / jnp.sqrt(var + EPS)).reshape(b, c, h, w)
    hn = hn * params["gn_gamma"].reshape(1, c, 1, 1) + params["gn_beta"].reshape(1, c, 1, 1)

    def conv1x1(t, wgt, bias):
        return jnp.einsum("oc,bchw->bohw", wgt, t) + bias.reshape(1, c, 1, 1)

    q = conv1x1(hn, params["wq"], params["bq"])
    k = conv1x1(hn, params["wk"], params["bk"])
    v = conv1x1(hn, params["wv"], params["bv"])
    q = q.reshape(b, c, h * w).transpose(0, 2, 1)
    k = k.reshape(b, c, h * w)
    w_ = jnp.einsum("bij,bjk->bik", q, k) * (int(c) ** -0.5)
    w_ = jax.nn.softmax(w_, axis=2)
    v = v.reshape(b, c, h * w)
    w_t = jnp.transpose(w_, (0, 2, 1))
    ho = jnp.einsum("bij,bjk->bik", v, w_t).reshape(b, c, h, w)
    ho = conv1x1(ho, params["wp"], params["bp"])
    return x + ho


def init_params(key, c):
    ks = jax.random.split(key, 10)
    s = 0.05
    return {
        "gn_gamma": jnp.ones((c,), jnp.float32)
                    + 0.1 * jax.random.normal(ks[0], (c,), jnp.float32),
        "gn_beta": 0.1 * jax.random.normal(ks[1], (c,), jnp.float32),
        "wq": s * jax.random.normal(ks[2], (c, c), jnp.float32),
        "bq": s * jax.random.normal(ks[3], (c,), jnp.float32),
        "wk": s * jax.random.normal(ks[4], (c, c), jnp.float32),
        "bk": s * jax.random.normal(ks[5], (c,), jnp.float32),
        "wv": s * jax.random.normal(ks[6], (c, c), jnp.float32),
        "bv": s * jax.random.normal(ks[7], (c,), jnp.float32),
        "wp": s * jax.random.normal(ks[8], (c, c), jnp.float32),
        "bp": s * jax.random.normal(ks[9], (c,), jnp.float32),
    }


if __name__ == "__main__":
    key = jax.random.PRNGKey(0)
    k_x, k_p = jax.random.split(key)

    B, C, H, W = 2, 64, 16, 16   # GroupNorm(32) requires C % 32 == 0
    x = jax.random.normal(k_x, (B, C, H, W), jnp.float32)
    params = init_params(k_p, C)

    ref = reference(x, params)

    # Small explicit tiles: exercises multi-tile GroupNorm stats accumulation,
    # multiple q tiles and the online-softmax kv loop (general attention kernel).
    fn_small = jax.jit(functools.partial(spatial_self_attention,
                                         tm=64, tq=128, tk=128))
    out_small = jax.block_until_ready(fn_small(x, params))
    assert out_small.shape == (B, C, H, W)
    err_small = float(jnp.max(jnp.abs(out_small - ref)))
    # bf16 MXU operands + approx reciprocal => slightly looser tolerance than f32.
    assert err_small < 5e-3, err_small

    # Default tiles: single-kv-step specialized kernel (no online softmax).
    fn_default = jax.jit(spatial_self_attention)
    out_default = jax.block_until_ready(fn_default(x, params))
    err_default = float(jnp.max(jnp.abs(out_default - ref)))
    assert err_default < 5e-3, err_default

    print("KERNEL_OK")
</pallas_src>

<mosaic_0001>
module attributes {stable_mosaic.version = 11 : i64} {
  func.func @_gn_stats_kernel(%arg0: i32, %arg1: i32, %arg2: memref<1x64x128xf32, #tpu.memory_space<vmem>>, %arg3: memref<128x128xf32, #tpu.memory_space<vmem>>, %arg4: memref<128x128xf32, #tpu.memory_space<vmem>>, %arg5: memref<1x128xf32, #tpu.memory_space<vmem>>, %arg6: memref<1x128xf32, #tpu.memory_space<vmem>>, %arg7: memref<1x1x128xf32, #tpu.memory_space<vmem>>, %arg8: memref<1x1x128xf32, #tpu.memory_space<vmem>>, %arg9: memref<1x128xf32, #tpu.memory_space<vmem>>, %arg10: memref<1x128xf32, #tpu.memory_space<vmem>>) attributes {dimension_semantics = [#tpu.dimension_semantics<parallel>, #tpu.dimension_semantics<arbitrary>], iteration_bounds = array<i64: 2, 4>, scalar_prefetch = 0 : i64, scratch_operands = 2 : i64, tpu.core_type = #tpu.core_type<tc>, window_params = [{transform_indices = @transform_0, window_bounds = array<i64: 1, 64, 128>}, {pipeline_mode = #tpu.pipeline_mode<synchronous>, transform_indices = @transform_1, window_bounds = array<i64: 128, 128>}, {pipeline_mode = #tpu.pipeline_mode<synchronous>, transform_indices = @transform_2, window_bounds = array<i64: 128, 128>}, {pipeline_mode = #tpu.pipeline_mode<synchronous>, transform_indices = @transform_3, window_bounds = array<i64: 1, 128>}, {pipeline_mode = #tpu.pipeline_mode<synchronous>, transform_indices = @transform_4, window_bounds = array<i64: 1, 128>}, {transform_indices = @transform_5, window_bounds = array<i64: 1, 1, 128>}, {transform_indices = @transform_6, window_bounds = array<i64: 1, 1, 128>}]} {
    %c0_i32 = arith.constant 0 : i32
    %0 = arith.cmpi eq, %arg1, %c0_i32 : i32
    %1 = arith.extui %0 : i1 to i32
    %c0_i32_0 = arith.constant 0 : i32
    %2 = arith.cmpi ne, %1, %c0_i32_0 : i32
    scf.if %2 {
      %cst_13 = arith.constant 0.000000e+00 : f32
      %19 = vector.broadcast %cst_13 : f32 to vector<1x128xf32>
      %c0_14 = arith.constant 0 : index
      %c0_15 = arith.constant 0 : index
      %20 = vector.load %arg9[%c0_14, %c0_15] : memref<1x128xf32, #tpu.memory_space<vmem>>, vector<1x128xf32>
      tpu.vector_store %arg9[%c0_14, %c0_15], %19 {strides = array<i32>} : memref<1x128xf32, #tpu.memory_space<vmem>>, vector<1x128xf32>,
      %cst_16 = arith.constant 0.000000e+00 : f32
      %21 = vector.broadcast %cst_16 : f32 to vector<1x128xf32>
      %c0_17 = arith.constant 0 : index
      %c0_18 = arith.constant 0 : index
      %22 = vector.load %arg10[%c0_17, %c0_18] : memref<1x128xf32, #tpu.memory_space<vmem>>, vector<1x128xf32>
      tpu.vector_store %arg10[%c0_17, %c0_18], %21 {strides = array<i32>} : memref<1x128xf32, #tpu.memory_space<vmem>>, vector<1x128xf32>,
    } else {
    }
    %c0 = arith.constant 0 : index
    %c0_1 = arith.constant 0 : index
    %c0_2 = arith.constant 0 : index
    %3 = vector.load %arg2[%c0, %c0_1, %c0_2] : memref<1x64x128xf32, #tpu.memory_space<vmem>>, vector<1x64x128xf32>
    %4 = vector.shape_cast %3 : vector<1x64x128xf32> to vector<64x128xf32>
    %c0_3 = arith.constant 0 : index
    %c0_4 = arith.constant 0 : index
    %5 = vector.load %arg9[%c0_3, %c0_4] : memref<1x128xf32, #tpu.memory_space<vmem>>, vector<1x128xf32>
    %cst = arith.constant dense<0.000000e+00> : vector<128xf32>
    %6 = vector.multi_reduction <add>, %4, %cst [0] : vector<64x128xf32> to vector<128xf32>
    %7 = vector.shape_cast %6 : vector<128xf32> to vector<1x128xf32>
    %8 = arith.addf %5, %7 : vector<1x128xf32>
    %c0_5 = arith.constant 0 : index
    %c0_6 = arith.constant 0 : index
    %9 = vector.load %arg9[%c0_5, %c0_6] : memref<1x128xf32, #tpu.memory_space<vmem>>, vector<1x128xf32>
    tpu.vector_store %arg9[%c0_5, %c0_6], %8 {strides = array<i32>} : memref<1x128xf32, #tpu.memory_space<vmem>>, vector<1x128xf32>,
    %c0_7 = arith.constant 0 : index
    %c0_8 = arith.constant 0 : index
    %10 = vector.load %arg10[%c0_7, %c0_8] : memref<1x128xf32, #tpu.memory_space<vmem>>, vector<1x128xf32>
    %11 = arith.mulf %4, %4 : vector<64x128xf32>
    %cst_9 = arith.constant dense<0.000000e+00> : vector<128xf32>
    %12 = vector.multi_reduction <add>, %11, %cst_9 [0] : vector<64x128xf32> to vector<128xf32>
    %13 = vector.shape_cast %12 : vector<128xf32> to vector<1x128xf32>
    %14 = arith.addf %10, %13 : vector<1x128xf32>
    %c0_10 = arith.constant 0 : index
    %c0_11 = arith.constant 0 : index
    %15 = vector.load %arg10[%c0_10, %c0_11] : memref<1x128xf32, #tpu.memory_space<vmem>>, vector<1x128xf32>
    tpu.vector_store %arg10[%c0_10, %c0_11], %14 {strides = array<i32>} : memref<1x128xf32, #tpu.memory_space<vmem>>, vector<1x128xf32>,
    %c3_i32 = arith.constant 3 : i32
    %16 = arith.cmpi eq, %arg1, %c3_i32 : i32
    %17 = arith.extui %16 : i1 to i32
    %c0_i32_12 = arith.constant 0 : i32
    %18 = arith.cmpi ne, %17, %c0_i32_12 : i32
    scf.if %18 {
      %c0_13 = arith.constant 0 : index
      %c0_14 = arith.constant 0 : index
      %19 = vector.load %arg9[%c0_13, %c0_14] : memref<1x128xf32, #tpu.memory_space<vmem>>, vector<1x128xf32>
      %c0_15 = arith.constant 0 : index
      %c0_16 = arith.constant 0 : index
      %20 = vector.load %arg10[%c0_15, %c0_16] : memref<1x128xf32, #tpu.memory_space<vmem>>, vector<1x128xf32>
      %21 = tpu.concatenate %19, %20 in 0 : vector<1x128xf32>, vector<1x128xf32> -> vector<2x128xf32>
      %c0_17 = arith.constant 0 : index
      %c0_18 = arith.constant 0 : index
      %22 = vector.load %arg3[%c0_17, %c0_18] : memref<128x128xf32, #tpu.memory_space<vmem>>, vector<128x128xf32>
      %cst_19 = arith.constant dense<0.000000e+00> : vector<2x128xf32>
      %23 = tpu.matmul %21, %22, %cst_19 {dimension_numbers = #tpu.dot_dimension_numbers<[1], [0], [0], [1], [0, 0, 1, 1], [], []>} : vector<2x128xf32>, vector<128x128xf32>, vector<2x128xf32> -> vector<2x128xf32>
      %24 = vector.extract_strided_slice %23 {offsets = [0, 0], sizes = [1, 128], strides = [1, 1]} : vector<2x128xf32> to vector<1x128xf32>
      %cst_20 = arith.constant 5.120000e+02 : f32
      %25 = vector.broadcast %cst_20 : f32 to vector<1x128xf32>
      %26 = arith.divf %24, %25 : vector<1x128xf32>
      %27 = vector.extract_strided_slice %23 {offsets = [1, 0], sizes = [1, 128], strides = [1, 1]} : vector<2x128xf32> to vector<1x128xf32>
      %cst_21 = arith.constant 5.120000e+02 : f32
      %28 = vector.broadcast %cst_21 : f32 to vector<1x128xf32>
      %29 = arith.divf %27, %28 : vector<1x128xf32>
      %30 = arith.mulf %26, %26 : vector<1x128xf32>
      %31 = arith.subf %29, %30 : vector<1x128xf32>
      %cst_22 = arith.constant 0.000000e+00 : f32
      %32 = vector.broadcast %cst_22 : f32 to vector<1x128xf32>
      %33 = arith.maximumf %31, %32 : vector<1x128xf32>
      %cst_23 = arith.constant 9.99999997E-7 : f32
      %34 = vector.broadcast %cst_23 : f32 to vector<1x128xf32>
      %35 = arith.addf %33, %34 : vector<1x128xf32>
      %36 = math.rsqrt %35 : vector<1x128xf32>
      %37 = tpu.concatenate %26, %36 in 0 : vector<1x128xf32>, vector<1x128xf32> -> vector<2x128xf32>
      %c0_24 = arith.constant 0 : index
      %c0_25 = arith.constant 0 : index
      %38 = vector.load %arg4[%c0_24, %c0_25] : memref<128x128xf32, #tpu.memory_space<vmem>>, vector<128x128xf32>
      %cst_26 = arith.constant dense<0.000000e+00> : vector<2x128xf32>
      %39 = tpu.matmul %37, %38, %cst_26 {dimension_numbers = #tpu.dot_dimension_numbers<[1], [0], [0], [1], [0, 0, 1, 1], [], []>} : vector<2x128xf32>, vector<128x128xf32>, vector<2x128xf32> -> vector<2x128xf32>
      %40 = vector.extract_strided_slice %39 {offsets = [0, 0], sizes = [1, 128], strides = [1, 1]} : vector<2x128xf32> to vector<1x128xf32>
      %41 = vector.extract_strided_slice %39 {offsets = [1, 0], sizes = [1, 128], strides = [1, 1]} : vector<2x128xf32> to vector<1x128xf32>
      %c0_27 = arith.constant 0 : index
      %c0_28 = arith.constant 0 : index
      %42 = vector.load %arg5[%c0_27, %c0_28] : memref<1x128xf32, #tpu.memory_space<vmem>>, vector<1x128xf32>
      %43 = arith.mulf %41, %42 : vector<1x128xf32>
      %c0_29 = arith.constant 0 : index
      %c0_30 = arith.constant 0 : index
      %44 = vector.load %arg6[%c0_29, %c0_30] : memref<1x128xf32, #tpu.memory_space<vmem>>, vector<1x128xf32>
      %45 = arith.mulf %40, %43 : vector<1x128xf32>
      %46 = arith.subf %44, %45 : vector<1x128xf32>
      %c0_31 = arith.constant 0 : index
      %c0_32 = arith.constant 0 : index
      %c0_33 = arith.constant 0 : index
      %47 = vector.load %arg7[%c0_31, %c0_32, %c0_33] : memref<1x1x128xf32, #tpu.memory_space<vmem>>, vector<1x1x128xf32>
      %48 = vector.shape_cast %47 : vector<1x1x128xf32> to vector<1x128xf32>
      %49 = vector.shape_cast %43 : vector<1x128xf32> to vector<1x1x128xf32>
      tpu.vector_store %arg7[%c0_31, %c0_32, %c0_33], %49 {strides = array<i32>} : memref<1x1x128xf32, #tpu.memory_space<vmem>>, vector<1x1x128xf32>,
      %c0_34 = arith.constant 0 : index
      %c0_35 = arith.constant 0 : index
      %c0_36 = arith.constant 0 : index
      %50 = vector.load %arg8[%c0_34, %c0_35, %c0_36] : memref<1x1x128xf32, #tpu.memory_space<vmem>>, vector<1x1x128xf32>
      %51 = vector.shape_cast %50 : vector<1x1x128xf32> to vector<1x128xf32>
      %52 = vector.shape_cast %46 : vector<1x128xf32> to vector<1x1x128xf32>
      tpu.vector_store %arg8[%c0_34, %c0_35, %c0_36], %52 {strides = array<i32>} : memref<1x1x128xf32, #tpu.memory_space<vmem>>, vector<1x1x128xf32>,
    } else {
    }
    return
  }
  func.func @transform_0(%arg0: i32, %arg1: i32) -> (i32, i32, i32) {
    %c0_i32 = arith.constant 0 : i32
    %c0_i32_0 = arith.constant 0 : i32
    return %arg0, %arg1, %c0_i32 : i32, i32, i32
  }
  func.func @transform_1(%arg0: i32, %arg1: i32) -> (i32, i32) {
    %c0_i32 = arith.constant 0 : i32
    %c0_i32_0 = arith.constant 0 : i32
    %c0_i32_1 = arith.constant 0 : i32
    return %c0_i32, %c0_i32_0 : i32, i32
  }
  func.func @transform_2(%arg0: i32, %arg1: i32) -> (i32, i32) {
    %c0_i32 = arith.constant 0 : i32
    %c0_i32_0 = arith.constant 0 : i32
    %c0_i32_1 = arith.constant 0 : i32
    return %c0_i32, %c0_i32_0 : i32, i32
  }
  func.func @transform_3(%arg0: i32, %arg1: i32) -> (i32, i32) {
    %c0_i32 = arith.constant 0 : i32
    %c0_i32_0 = arith.constant 0 : i32
    %c0_i32_1 = arith.constant 0 : i32
    return %c0_i32, %c0_i32_0 : i32, i32
  }
  func.func @transform_4(%arg0: i32, %arg1: i32) -> (i32, i32) {
    %c0_i32 = arith.constant 0 : i32
    %c0_i32_0 = arith.constant 0 : i32
    %c0_i32_1 = arith.constant 0 : i32
    return %c0_i32, %c0_i32_0 : i32, i32
  }
  func.func @transform_5(%arg0: i32, %arg1: i32) -> (i32, i32, i32) {
    %c0_i32 = arith.constant 0 : i32
    %c0_i32_0 = arith.constant 0 : i32
    %c0_i32_1 = arith.constant 0 : i32
    return %arg0, %c0_i32, %c0_i32_0 : i32, i32, i32
  }
  func.func @transform_6(%arg0: i32, %arg1: i32) -> (i32, i32, i32) {
    %c0_i32 = arith.constant 0 : i32
    %c0_i32_0 = arith.constant 0 : i32
    %c0_i32_1 = arith.constant 0 : i32
    return %arg0, %c0_i32, %c0_i32_0 : i32, i32, i32
  }
}

module attributes {stable_mosaic.version = 11 : i64} {
  func.func @_norm_qkv_kernel(%arg0: i32, %arg1: i32, %arg2: memref<1x64x128xf32, #tpu.memory_space<vmem>>, %arg3: memref<1x1x128xf32, #tpu.memory_space<vmem>>, %arg4: memref<1x1x128xf32, #tpu.memory_space<vmem>>, %arg5: memref<128x384xbf16, #tpu.memory_space<vmem>>, %arg6: memref<1x384xf32, #tpu.memory_space<vmem>>, %arg7: memref<1x64x384xbf16, #tpu.memory_space<vmem>>) attributes {dimension_semantics = [#tpu.dimension_semantics<parallel>, #tpu.dimension_semantics<parallel>], iteration_bounds = array<i64: 2, 4>, scalar_prefetch = 0 : i64, scratch_operands = 0 : i64, tpu.core_type = #tpu.core_type<tc>, window_params = [{transform_indices = @transform_0, window_bounds = array<i64: 1, 64, 128>}, {transform_indices = @transform_1, window_bounds = array<i64: 1, 1, 128>}, {transform_indices = @transform_2, window_bounds = array<i64: 1, 1, 128>}, {pipeline_mode = #tpu.pipeline_mode<synchronous>, transform_indices = @transform_3, window_bounds = array<i64: 128, 384>}, {pipeline_mode = #tpu.pipeline_mode<synchronous>, transform_indices = @transform_4, window_bounds = array<i64: 1, 384>}, {transform_indices = @transform_5, window_bounds = array<i64: 1, 64, 384>}]} {
    %c0 = arith.constant 0 : index
    %c0_0 = arith.constant 0 : index
    %c0_1 = arith.constant 0 : index
    %0 = vector.load %arg2[%c0, %c0_0, %c0_1] : memref<1x64x128xf32, #tpu.memory_space<vmem>>, vector<1x64x128xf32>
    %1 = vector.shape_cast %0 : vector<1x64x128xf32> to vector<64x128xf32>
    %c0_2 = arith.constant 0 : index
    %c0_3 = arith.constant 0 : index
    %c0_4 = arith.constant 0 : index
    %2 = vector.load %arg3[%c0_2, %c0_3, %c0_4] : memref<1x1x128xf32, #tpu.memory_space<vmem>>, vector<1x1x128xf32>
    %3 = vector.shape_cast %2 : vector<1x1x128xf32> to vector<1x128xf32>
    %4 = vector.broadcast %3 : vector<1x128xf32> to vector<64x128xf32>
    %5 = arith.mulf %1, %4 : vector<64x128xf32>
    %c0_5 = arith.constant 0 : index
    %c0_6 = arith.constant 0 : index
    %c0_7 = arith.constant 0 : index
    %6 = vector.load %arg4[%c0_5, %c0_6, %c0_7] : memref<1x1x128xf32, #tpu.memory_space<vmem>>, vector<1x1x128xf32>
    %7 = vector.shape_cast %6 : vector<1x1x128xf32> to vector<1x128xf32>
    %8 = vector.broadcast %7 : vector<1x128xf32> to vector<64x128xf32>
    %9 = arith.addf %5, %8 : vector<64x128xf32>
    %10 = arith.truncf %9 : vector<64x128xf32> to vector<64x128xbf16>
    %c0_8 = arith.constant 0 : index
    %c0_9 = arith.constant 0 : index
    %11 = vector.load %arg5[%c0_8, %c0_9] : memref<128x384xbf16, #tpu.memory_space<vmem>>, vector<128x384xbf16>
    %cst = arith.constant dense<0.000000e+00> : vector<64x384xf32>
    %12 = tpu.matmul %10, %11, %cst {dimension_numbers = #tpu.dot_dimension_numbers<[1], [0], [0], [1], [0, 0, 1, 1], [], []>} : vector<64x128xbf16>, vector<128x384xbf16>, vector<64x384xf32> -> vector<64x384xf32>
    %c0_10 = arith.constant 0 : index
    %c0_11 = arith.constant 0 : index
    %13 = vector.load %arg6[%c0_10, %c0_11] : memref<1x384xf32, #tpu.memory_space<vmem>>, vector<1x384xf32>
    %14 = vector.broadcast %13 : vector<1x384xf32> to vector<64x384xf32>
    %15 = arith.addf %12, %14 : vector<64x384xf32>
    %16 = arith.truncf %15 : vector<64x384xf32> to vector<64x384xbf16>
    %c0_12 = arith.constant 0 : index
    %c0_13 = arith.constant 0 : index
    %c0_14 = arith.constant 0 : index
    %17 = vector.load %arg7[%c0_12, %c0_13, %c0_14] : memref<1x64x384xbf16, #tpu.memory_space<vmem>>, vector<1x64x384xbf16>
    %18 = vector.shape_cast %17 : vector<1x64x384xbf16> to vector<64x384xbf16>
    %19 = vector.shape_cast %16 : vector<64x384xbf16> to vector<1x64x384xbf16>
    tpu.vector_store %arg7[%c0_12, %c0_13, %c0_14], %19 {strides = array<i32>} : memref<1x64x384xbf16, #tpu.memory_space<vmem>>, vector<1x64x384xbf16>,
    return
  }
  func.func @transform_0(%arg0: i32, %arg1: i32) -> (i32, i32, i32) {
    %c0_i32 = arith.constant 0 : i32
    %c0_i32_0 = arith.constant 0 : i32
    return %arg0, %arg1, %c0_i32 : i32, i32, i32
  }
  func.func @transform_1(%arg0: i32, %arg1: i32) -> (i32, i32, i32) {
    %c0_i32 = arith.constant 0 : i32
    %c0_i32_0 = arith.constant 0 : i32
    %c0_i32_1 = arith.constant 0 : i32
    return %arg0, %c0_i32, %c0_i32_0 : i32, i32, i32
  }
  func.func @transform_2(%arg0: i32, %arg1: i32) -> (i32, i32, i32) {
    %c0_i32 = arith.constant 0 : i32
    %c0_i32_0 = arith.constant 0 : i32
    %c0_i32_1 = arith.constant 0 : i32
    return %arg0, %c0_i32, %c0_i32_0 : i32, i32, i32
  }
  func.func @transform_3(%arg0: i32, %arg1: i32) -> (i32, i32) {
    %c0_i32 = arith.constant 0 : i32
    %c0_i32_0 = arith.constant 0 : i32
    %c0_i32_1 = arith.constant 0 : i32
    return %c0_i32, %c0_i32_0 : i32, i32
  }
  func.func @transform_4(%arg0: i32, %arg1: i32) -> (i32, i32) {
    %c0_i32 = arith.constant 0 : i32
    %c0_i32_0 = arith.constant 0 : i32
    %c0_i32_1 = arith.constant 0 : i32
    return %c0_i32, %c0_i32_0 : i32, i32
  }
  func.func @transform_5(%arg0: i32, %arg1: i32) -> (i32, i32, i32) {
    %c0_i32 = arith.constant 0 : i32
    %c0_i32_0 = arith.constant 0 : i32
    return %arg0, %arg1, %c0_i32 : i32, i32, i32
  }
}

module attributes {stable_mosaic.version = 11 : i64} {
  func.func @_attn_proj_kernel(%arg0: i32, %arg1: i32, %arg2: i32, %arg3: memref<1x128x128xf32, #tpu.memory_space<vmem>>, %arg4: memref<1x128x128xbf16, #tpu.memory_space<vmem>>, %arg5: memref<1x128x128xbf16, #tpu.memory_space<vmem>>, %arg6: memref<1x128x128xbf16, #tpu.memory_space<vmem>>, %arg7: memref<128x128xbf16, #tpu.memory_space<vmem>>, %arg8: memref<1x128xf32, #tpu.memory_space<vmem>>, %arg9: memref<1x128x128xf32, #tpu.memory_space<vmem>>, %arg10: memref<128x1xf32, #tpu.memory_space<vmem>>, %arg11: memref<128x1xf32, #tpu.memory_space<vmem>>, %arg12: memref<128x128xf32, #tpu.memory_space<vmem>>) attributes {dimension_semantics = [#tpu.dimension_semantics<parallel>, #tpu.dimension_semantics<parallel>, #tpu.dimension_semantics<arbitrary>], iteration_bounds = array<i64: 2, 2, 2>, scalar_prefetch = 0 : i64, scratch_operands = 3 : i64, tpu.core_type = #tpu.core_type<tc>, window_params = [{transform_indices = @transform_0, window_bounds = array<i64: 1, 128, 128>}, {transform_indices = @transform_1, window_bounds = array<i64: 1, 128, 128>}, {transform_indices = @transform_2, window_bounds = array<i64: 1, 128, 128>}, {transform_indices = @transform_3, window_bounds = array<i64: 1, 128, 128>}, {pipeline_mode = #tpu.pipeline_mode<synchronous>, transform_indices = @transform_4, window_bounds = array<i64: 128, 128>}, {pipeline_mode = #tpu.pipeline_mode<synchronous>, transform_indices = @transform_5, window_bounds = array<i64: 1, 128>}, {transform_indices = @transform_6, window_bounds = array<i64: 1, 128, 128>}]} {
    %c0_i32 = arith.constant 0 : i32
    %0 = arith.cmpi eq, %arg2, %c0_i32 : i32
    %1 = arith.extui %0 : i1 to i32
    %c0_i32_0 = arith.constant 0 : i32
    %2 = arith.cmpi ne, %1, %c0_i32_0 : i32
    scf.if %2 {
      %cst_27 = arith.constant 0xFF800000 : f32
      %37 = vector.broadcast %cst_27 : f32 to vector<128x1xf32>
      %c0_28 = arith.constant 0 : index
      %c0_29 = arith.constant 0 : index
      %38 = vector.load %arg10[%c0_28, %c0_29] : memref<128x1xf32, #tpu.memory_space<vmem>>, vector<128x1xf32>
      tpu.vector_store %arg10[%c0_28, %c0_29], %37 {strides = array<i32>} : memref<128x1xf32, #tpu.memory_space<vmem>>, vector<128x1xf32>,
      %cst_30 = arith.constant 0.000000e+00 : f32
      %39 = vector.broadcast %cst_30 : f32 to vector<128x1xf32>
      %c0_31 = arith.constant 0 : index
      %c0_32 = arith.constant 0 : index
      %40 = vector.load %arg11[%c0_31, %c0_32] : memref<128x1xf32, #tpu.memory_space<vmem>>, vector<128x1xf32>
      tpu.vector_store %arg11[%c0_31, %c0_32], %39 {strides = array<i32>} : memref<128x1xf32, #tpu.memory_space<vmem>>, vector<128x1xf32>,
      %cst_33 = arith.constant 0.000000e+00 : f32
      %41 = vector.broadcast %cst_33 : f32 to vector<128x128xf32>
      %c0_34 = arith.constant 0 : index
      %c0_35 = arith.constant 0 : index
      %42 = vector.load %arg12[%c0_34, %c0_35] : memref<128x128xf32, #tpu.memory_space<vmem>>, vector<128x128xf32>
      tpu.vector_store %arg12[%c0_34, %c0_35], %41 {strides = array<i32>} : memref<128x128xf32, #tpu.memory_space<vmem>>, vector<128x128xf32>,
    } else {
    }
    %c0 = arith.constant 0 : index
    %c0_1 = arith.constant 0 : index
    %c0_2 = arith.constant 0 : index
    %3 = vector.load %arg4[%c0, %c0_1, %c0_2] : memref<1x128x128xbf16, #tpu.memory_space<vmem>>, vector<1x128x128xbf16>
    %4 = vector.shape_cast %3 : vector<1x128x128xbf16> to vector<128x128xbf16>
    %c0_3 = arith.constant 0 : index
    %c0_4 = arith.constant 0 : index
    %c0_5 = arith.constant 0 : index
    %5 = vector.load %arg5[%c0_3, %c0_4, %c0_5] : memref<1x128x128xbf16, #tpu.memory_space<vmem>>, vector<1x128x128xbf16>
    %6 = vector.shape_cast %5 : vector<1x128x128xbf16> to vector<128x128xbf16>
    %c0_6 = arith.constant 0 : index
    %c0_7 = arith.constant 0 : index
    %c0_8 = arith.constant 0 : index
    %7 = vector.load %arg6[%c0_6, %c0_7, %c0_8] : memref<1x128x128xbf16, #tpu.memory_space<vmem>>, vector<1x128x128xbf16>
    %8 = vector.shape_cast %7 : vector<1x128x128xbf16> to vector<128x128xbf16>
    %cst = arith.constant dense<0.000000e+00> : vector<128x128xf32>
    %9 = tpu.matmul %4, %6, %cst {dimension_numbers = #tpu.dot_dimension_numbers<[1], [1], [0], [0], [0, 0, 1, 0], [], []>} : vector<128x128xbf16>, vector<128x128xbf16>, vector<128x128xf32> -> vector<128x128xf32>
    %c0_9 = arith.constant 0 : index
    %c0_10 = arith.constant 0 : index
    %10 = vector.load %arg10[%c0_9, %c0_10] : memref<128x1xf32, #tpu.memory_space<vmem>>, vector<128x1xf32>
    %cst_11 = arith.constant dense<0xFF800000> : vector<128xf32>
    %11 = vector.multi_reduction <maximumf>, %9, %cst_11 [1] : vector<128x128xf32> to vector<128xf32>
    %12 = vector.shape_cast %11 : vector<128xf32> to vector<128x1xf32>
    %13 = arith.maximumf %10, %12 : vector<128x1xf32>
    %c0_12 = arith.constant 0 : index
    %c0_13 = arith.constant 0 : index
    %14 = vector.load %arg10[%c0_12, %c0_13] : memref<128x1xf32, #tpu.memory_space<vmem>>, vector<128x1xf32>
    %15 = arith.subf %14, %13 : vector<128x1xf32>
    %16 = math.exp %15 : vector<128x1xf32>
    %17 = vector.broadcast %13 : vector<128x1xf32> to vector<128x128xf32>
    %18 = arith.subf %9, %17 : vector<128x128xf32>
    %19 = math.exp %18 : vector<128x128xf32>
    %c0_14 = arith.constant 0 : index
    %c0_15 = arith.constant 0 : index
    %20 = vector.load %arg11[%c0_14, %c0_15] : memref<128x1xf32, #tpu.memory_space<vmem>>, vector<128x1xf32>
    %21 = arith.mulf %16, %20 : vector<128x1xf32>
    %cst_16 = arith.constant dense<0.000000e+00> : vector<128xf32>
    %22 = vector.multi_reduction <add>, %19, %cst_16 [1] : vector<128x128xf32> to vector<128xf32>
    %23 = vector.shape_cast %22 : vector<128xf32> to vector<128x1xf32>
    %24 = arith.addf %21, %23 : vector<128x1xf32>
    %c0_17 = arith.constant 0 : index
    %c0_18 = arith.constant 0 : index
    %25 = vector.load %arg11[%c0_17, %c0_18] : memref<128x1xf32, #tpu.memory_space<vmem>>, vector<128x1xf32>
    tpu.vector_store %arg11[%c0_17, %c0_18], %24 {strides = array<i32>} : memref<128x1xf32, #tpu.memory_space<vmem>>, vector<128x1xf32>,
    %c0_19 = arith.constant 0 : index
    %c0_20 = arith.constant 0 : index
    %26 = vector.load %arg12[%c0_19, %c0_20] : memref<128x128xf32, #tpu.memory_space<vmem>>, vector<128x128xf32>
    %27 = vector.broadcast %16 : vector<128x1xf32> to vector<128x128xf32>
    %28 = arith.mulf %27, %26 : vector<128x128xf32>
    %29 = arith.truncf %19 : vector<128x128xf32> to vector<128x128xbf16>
    %cst_21 = arith.constant dense<0.000000e+00> : vector<128x128xf32>
    %30 = tpu.matmul %29, %8, %cst_21 {dimension_numbers = #tpu.dot_dimension_numbers<[1], [0], [0], [1], [0, 0, 1, 1], [], []>} : vector<128x128xbf16>, vector<128x128xbf16>, vector<128x128xf32> -> vector<128x128xf32>
    %31 = arith.addf %28, %30 : vector<128x128xf32>
    %c0_22 = arith.constant 0 : index
    %c0_23 = arith.constant 0 : index
    %32 = vector.load %arg12[%c0_22, %c0_23] : memref<128x128xf32, #tpu.memory_space<vmem>>, vector<128x128xf32>
    tpu.vector_store %arg12[%c0_22, %c0_23], %31 {strides = array<i32>} : memref<128x128xf32, #tpu.memory_space<vmem>>, vector<128x128xf32>,
    %c0_24 = arith.constant 0 : index
    %c0_25 = arith.constant 0 : index
    %33 = vector.load %arg10[%c0_24, %c0_25] : memref<128x1xf32, #tpu.memory_space<vmem>>, vector<128x1xf32>
    tpu.vector_store %arg10[%c0_24, %c0_25], %13 {strides = array<i32>} : memref<128x1xf32, #tpu.memory_space<vmem>>, vector<128x1xf32>,
    %c1_i32 = arith.constant 1 : i32
    %34 = arith.cmpi eq, %arg2, %c1_i32 : i32
    %35 = arith.extui %34 : i1 to i32
    %c0_i32_26 = arith.constant 0 : i32
    %36 = arith.cmpi ne, %35, %c0_i32_26 : i32
    scf.if %36 {
      %c0_27 = arith.constant 0 : index
      %c0_28 = arith.constant 0 : index
      %37 = vector.load %arg12[%c0_27, %c0_28] : memref<128x128xf32, #tpu.memory_space<vmem>>, vector<128x128xf32>
      %c0_29 = arith.constant 0 : index
      %c0_30 = arith.constant 0 : index
      %38 = vector.load %arg11[%c0_29, %c0_30] : memref<128x1xf32, #tpu.memory_space<vmem>>, vector<128x1xf32>
      %39 = tpu.reciprocal %38 {approx = true} : vector<128x1xf32> -> vector<128x1xf32>
      %40 = vector.broadcast %39 : vector<128x1xf32> to vector<128x128xf32>
      %41 = arith.mulf %37, %40 : vector<128x128xf32>
      %42 = arith.truncf %41 : vector<128x128xf32> to vector<128x128xbf16>
      %c0_31 = arith.constant 0 : index
      %c0_32 = arith.constant 0 : index
      %43 = vector.load %arg7[%c0_31, %c0_32] : memref<128x128xbf16, #tpu.memory_space<vmem>>, vector<128x128xbf16>
      %cst_33 = arith.constant dense<0.000000e+00> : vector<128x128xf32>
      %44 = tpu.matmul %42, %43, %cst_33 {dimension_numbers = #tpu.dot_dimension_numbers<[1], [0], [0], [1], [0, 0, 1, 1], [], []>} : vector<128x128xbf16>, vector<128x128xbf16>, vector<128x128xf32> -> vector<128x128xf32>
      %c0_34 = arith.constant 0 : index
      %c0_35 = arith.constant 0 : index
      %45 = vector.load %arg8[%c0_34, %c0_35] : memref<1x128xf32, #tpu.memory_space<vmem>>, vector<1x128xf32>
      %46 = vector.broadcast %45 : vector<1x128xf32> to vector<128x128xf32>
      %47 = arith.addf %44, %46 : vector<128x128xf32>
      %c0_36 = arith.constant 0 : index
      %c0_37 = arith.constant 0 : index
      %c0_38 = arith.constant 0 : index
      %48 = vector.load %arg3[%c0_36, %c0_37, %c0_38] : memref<1x128x128xf32, #tpu.memory_space<vmem>>, vector<1x128x128xf32>
      %49 = vector.shape_cast %48 : vector<1x128x128xf32> to vector<128x128xf32>
      %50 = arith.addf %49, %47 : vector<128x128xf32>
      %c0_39 = arith.constant 0 : index
      %c0_40 = arith.constant 0 : index
      %c0_41 = arith.constant 0 : index
      %51 = vector.load %arg9[%c0_39, %c0_40, %c0_41] : memref<1x128x128xf32, #tpu.memory_space<vmem>>, vector<1x128x128xf32>
      %52 = vector.shape_cast %51 : vector<1x128x128xf32> to vector<128x128xf32>
      %53 = vector.shape_cast %50 : vector<128x128xf32> to vector<1x128x128xf32>
      tpu.vector_store %arg9[%c0_39, %c0_40, %c0_41], %53 {strides = array<i32>} : memref<1x128x128xf32, #tpu.memory_space<vmem>>, vector<1x128x128xf32>,
    } else {
    }
    return
  }
  func.func @transform_0(%arg0: i32, %arg1: i32, %arg2: i32) -> (i32, i32, i32) {
    %c0_i32 = arith.constant 0 : i32
    %c0_i32_0 = arith.constant 0 : i32
    return %arg0, %arg1, %c0_i32 : i32, i32, i32
  }
  func.func @transform_1(%arg0: i32, %arg1: i32, %arg2: i32) -> (i32, i32, i32) {
    %c0_i32 = arith.constant 0 : i32
    %c0_i32_0 = arith.constant 0 : i32
    return %arg0, %arg1, %c0_i32 : i32, i32, i32
  }
  func.func @transform_2(%arg0: i32, %arg1: i32, %arg2: i32) -> (i32, i32, i32) {
    %c1_i32 = arith.constant 1 : i32
    %c0_i32 = arith.constant 0 : i32
    return %arg0, %arg2, %c1_i32 : i32, i32, i32
  }
  func.func @transform_3(%arg0: i32, %arg1: i32, %arg2: i32) -> (i32, i32, i32) {
    %c2_i32 = arith.constant 2 : i32
    %c0_i32 = arith.constant 0 : i32
    return %arg0, %arg2, %c2_i32 : i32, i32, i32
  }
  func.func @transform_4(%arg0: i32, %arg1: i32, %arg2: i32) -> (i32, i32) {
    %c0_i32 = arith.constant 0 : i32
    %c0_i32_0 = arith.constant 0 : i32
    %c0_i32_1 = arith.constant 0 : i32
    return %c0_i32, %c0_i32_0 : i32, i32
  }
  func.func @transform_5(%arg0: i32, %arg1: i32, %arg2: i32) -> (i32, i32) {
    %c0_i32 = arith.constant 0 : i32
    %c0_i32_0 = arith.constant 0 : i32
    %c0_i32_1 = arith.constant 0 : i32
    return %c0_i32, %c0_i32_0 : i32, i32
  }
  func.func @transform_6(%arg0: i32, %arg1: i32, %arg2: i32) -> (i32, i32, i32) {
    %c0_i32 = arith.constant 0 : i32
    %c0_i32_0 = arith.constant 0 : i32
    return %arg0, %arg1, %c0_i32 : i32, i32, i32
  }
}

</mosaic_0001>

<llo_original>
// kernel: spatial_self_attention.3
$region0: #{spatial_self_attention.3}
  #allocation0 [shape = 'u32[]', space=smem, size = 0x4, offset = 0x4, fixed_abs, tag = 'smem constant byte address 0x4 - core index']
  #allocation1 [shape = 'u32[144,128]{1,0:T(1,128)}', space=vmem, size = 0x12000, scoped, tag = 'internal scratch']
  #allocation2 [shape = 'f32[1,128]{1,0:T(1,128)}', space=vmem, size = 0x200, scoped, tag = 'scratch operand']
  #allocation3 [shape = 'f32[1,128]{1,0:T(1,128)}', space=vmem, size = 0x200, scoped, tag = 'scratch operand']
  %s0 = inlined_call_operand.vmem [shape: f32[2,256,128], index: 0, kind: input, shape index: {}]
  %s1 = inlined_call_operand.vmem [shape: f32[128,128], index: 1, kind: input, shape index: {}]
  %s2 = inlined_call_operand.vmem [shape: f32[128,128], index: 2, kind: input, shape index: {}]
  %s3 = inlined_call_operand.vmem [shape: f32[1,128], index: 3, kind: input, shape index: {}]
  %s4 = inlined_call_operand.vmem [shape: f32[1,128], index: 4, kind: input, shape index: {}]
  %s5 = inlined_call_operand.vmem [shape: f32[2,1,128], index: 5, kind: output, shape index: {0}]
  %s6 = inlined_call_operand.vmem [shape: f32[2,1,128], index: 6, kind: output, shape index: {1}]
  %7 = xla_tuple %s5, %s6
  %s8 = sld [smem:[#allocation0]]
  $region69: #{spatial_self_attention.3} parent=0
    _
  %s10 = ssub.s32 1, %s8
  %s11 = scalar_select 0, %s10, %s8
  loop: start=0, step=1, limit=10
  $region2: #{spatial_self_attention.3} parent=0 // loop_pre_header
    _
  $region3: #{spatial_self_attention.3} parent=0 // loop_header
    %s13 = sphi 0, %s17
    %p14 = scmp.ge.s32.totalorder %s13, 10
    %s20 = sphi 0, %s32
    %s21 = sphi 0, %s28
    %s22 = sphi 0, %s20
    %s23 = sphi 0, %s21
    %s24 = sphi 0, %s22
    %s25 = sphi 0, %s23
    %s37 = sphi 0, %s39
    %s40 = sphi 0, %s37
    %s41 = sphi 0, %s40
    %s57 = sphi 0, %s41
    %s61 = sphi 0, %s61
    %s63 = sphi 0, %s61
    %s64 = sphi 0, %s63
    %s78 = sphi 0, %s64
    %s82 = sphi 0, %s82
    %s84 = sphi 0, %s82
    %s85 = sphi 0, %s84
    %s99 = sphi 0, %s85
    %s103 = sphi 0, %s103
    %s105 = sphi 0, %s103
    %s106 = sphi 0, %s105
    %s120 = sphi 0, %s106
    %s124 = sphi 0, %s124
    %s126 = sphi 0, %s124
    %s127 = sphi 0, %s126
    %s141 = sphi 0, %s127
    %s147 = sphi 0, %s149
    %s150 = sphi 0, %s147
    %s151 = sphi 0, %s150
    %s167 = sphi 0, %s151
    %s173 = sphi 0, %s175
    %s176 = sphi 0, %s173
    %s177 = sphi 0, %s176
    %s193 = sphi 0, %s177
  $region4: #{spatial_self_attention.3} parent=0 // loop_header_branch
    %16 = sbr.rel (%p14) target = $region8
  $region5: #{spatial_self_attention.3} parent=0 // loop_body
    %s18 = ssub.s32 %s13, 1
    %s19 = ssub.s32 %s13, 2
    %s26 = sadd.s32 1, %s21
    %p27 = scmp.ge.s32.totalorder %s26, 4
    %s28 = scalar_select %p27, 0, %s26
    %s29 = sadd.s32 1, %s20
    %s30 = scalar_select %p27, %s29, %s20
    %p31 = scmp.ge.s32.totalorder %s30, 2
    %s32 = scalar_select %p31, 0, %s30
    %s33 = ssub.s32 %s20, %s32
    %s34 = ssub.s32 %s21, %s28
    %s35 = sor.u32 %s33, %s34
    %p36 = scmp.eq.s32.totalorder %s35, 0
    %s38 = sadd.s32 %s37, 1
    %s39 = scalar_select %p36, %s37, %s38
    %p42 = pneg %p36
    %p43 = scmp.eq.s32.totalorder %s13, 7
    %p44 = por %p42, %p43
    %p45 = scmp.ne.s32.totalorder %s37, %s40
    %p46 = scmp.eq.s32.totalorder %s13, 0
    %p47 = por %p45, %p46
    %p48 = scmp.ne.s32.totalorder %s37, %s40
    %p49 = scmp.eq.s32.totalorder %s18, 7
    %p50 = por %p48, %p49
    %p51 = scmp.ne.s32.totalorder %s40, %s41
    %p52 = scmp.eq.s32.totalorder %s18, 0
    %p53 = por %p51, %p52
    %p54 = scmp.ne.s32.totalorder %s40, %s41
    %p55 = scmp.eq.s32.totalorder %s19, 7
    %p56 = por %p54, %p55
    %p58 = scmp.ne.s32.totalorder %s41, %s57
    %p59 = scmp.eq.s32.totalorder %s19, 0
    %p60 = por %p58, %p59
    %s62 = sadd.s32 %s61, 1
    %p65 = scmp.eq.s32.totalorder %s13, 7
    %p66 = scmp.ne.s32.totalorder %s61, %s63
    %p67 = scmp.eq.s32.totalorder %s13, 0
    %p68 = por %p66, %p67
    %p69 = scmp.ne.s32.totalorder %s61, %s63
    %p70 = scmp.eq.s32.totalorder %s18, 7
    %p71 = por %p69, %p70
    %p72 = scmp.ne.s32.totalorder %s63, %s64
    %p73 = scmp.eq.s32.totalorder %s18, 0
    %p74 = por %p72, %p73
    %p75 = scmp.ne.s32.totalorder %s63, %s64
    %p76 = scmp.eq.s32.totalorder %s19, 7
    %p77 = por %p75, %p76
    %p79 = scmp.ne.s32.totalorder %s64, %s78
    %p80 = scmp.eq.s32.totalorder %s19, 0
    %p81 = por %p79, %p80
    %s83 = sadd.s32 %s82, 1
    %p86 = scmp.eq.s32.totalorder %s13, 7
    %p87 = scmp.ne.s32.totalorder %s82, %s84
    %p88 = scmp.eq.s32.totalorder %s13, 0
    %p89 = por %p87, %p88
    %p90 = scmp.ne.s32.totalorder %s82, %s84
    %p91 = scmp.eq.s32.totalorder %s18, 7
    %p92 = por %p90, %p91
    %p93 = scmp.ne.s32.totalorder %s84, %s85
    %p94 = scmp.eq.s32.totalorder %s18, 0
    %p95 = por %p93, %p94
    %p96 = scmp.ne.s32.totalorder %s84, %s85
    %p97 = scmp.eq.s32.totalorder %s19, 7
    %p98 = por %p96, %p97
    %p100 = scmp.ne.s32.totalorder %s85, %s99
    %p101 = scmp.eq.s32.totalorder %s19, 0
    %p102 = por %p100, %p101
    %s104 = sadd.s32 %s103, 1
    %p107 = scmp.eq.s32.totalorder %s13, 7
    %p108 = scmp.ne.s32.totalorder %s103, %s105
    %p109 = scmp.eq.s32.totalorder %s13, 0
    %p110 = por %p108, %p109
    %p111 = scmp.ne.s32.totalorder %s103, %s105
    %p112 = scmp.eq.s32.totalorder %s18, 7
    %p113 = por %p111, %p112
    %p114 = scmp.ne.s32.totalorder %s105, %s106
    %p115 = scmp.eq.s32.totalorder %s18, 0
    %p116 = por %p114, %p115
    %p117 = scmp.ne.s32.totalorder %s105, %s106
    %p118 = scmp.eq.s32.totalorder %s19, 7
    %p119 = por %p117, %p118
    %p121 = scmp.ne.s32.totalorder %s106, %s120
    %p122 = scmp.eq.s32.totalorder %s19, 0
    %p123 = por %p121, %p122
    %s125 = sadd.s32 %s124, 1
    %p128 = scmp.eq.s32.totalorder %s13, 7
    %p129 = scmp.ne.s32.totalorder %s124, %s126
    %p130 = scmp.eq.s32.totalorder %s13, 0
    %p131 = por %p129, %p130
    %p132 = scmp.ne.s32.totalorder %s124, %s126
    %p133 = scmp.eq.s32.totalorder %s18, 7
    %p134 = por %p132, %p133
    %p135 = scmp.ne.s32.totalorder %s126, %s127
    %p136 = scmp.eq.s32.totalorder %s18, 0
    %p137 = por %p135, %p136
    %p138 = scmp.ne.s32.totalorder %s126, %s127
    %p139 = scmp.eq.s32.totalorder %s19, 7
    %p140 = por %p138, %p139
    %p142 = scmp.ne.s32.totalorder %s127, %s141
    %p143 = scmp.eq.s32.totalorder %s19, 0
    %p144 = por %p142, %p143
    %s145 = ssub.s32 %s20, %s32
    %p146 = scmp.eq.s32.totalorder %s145, 0
    %s148 = sadd.s32 %s147, 1
    %s149 = scalar_select %p146, %s147, %s148
    %p152 = pneg %p146
    %p153 = scmp.eq.s32.totalorder %s13, 7
    %p154 = por %p152, %p153
    %p155 = scmp.ne.s32.totalorder %s147, %s150
    %p156 = scmp.eq.s32.totalorder %s13, 0
    %p157 = por %p155, %p156
    %p158 = scmp.ne.s32.totalorder %s147, %s150
    %p159 = scmp.eq.s32.totalorder %s18, 7
    %p160 = por %p158, %p159
    %p161 = scmp.ne.s32.totalorder %s150, %s151
    %p162 = scmp.eq.s32.totalorder %s18, 0
    %p163 = por %p161, %p162
    %p164 = scmp.ne.s32.totalorder %s150, %s151
    %p165 = scmp.eq.s32.totalorder %s19, 7
    %p166 = por %p164, %p165
    %p168 = scmp.ne.s32.totalorder %s151, %s167
    %p169 = scmp.eq.s32.totalorder %s19, 0
    %p170 = por %p168, %p169
    %s171 = ssub.s32 %s20, %s32
    %p172 = scmp.eq.s32.totalorder %s171, 0
    %s174 = sadd.s32 %s173, 1
    %s175 = scalar_select %p172, %s173, %s174
    %p178 = pneg %p172
    %p179 = scmp.eq.s32.totalorder %s13, 7
    %p180 = por %p178, %p179
    %p181 = scmp.ne.s32.totalorder %s173, %s176
    %p182 = scmp.eq.s32.totalorder %s13, 0
    %p183 = por %p181, %p182
    %p184 = scmp.ne.s32.totalorder %s173, %s176
    %p185 = scmp.eq.s32.totalorder %s18, 7
    %p186 = por %p184, %p185
    %p187 = scmp.ne.s32.totalorder %s176, %s177
    %p188 = scmp.eq.s32.totalorder %s18, 0
    %p189 = por %p187, %p188
    %p190 = scmp.ne.s32.totalorder %s176, %s177
    %p191 = scmp.eq.s32.totalorder %s19, 7
    %p192 = por %p190, %p191
    %p194 = scmp.ne.s32.totalorder %s177, %s193
    %p195 = scmp.eq.s32.totalorder %s19, 0
    %p196 = por %p194, %p195
    %p197 = scmp.le.s32.totalorder 1, %s13
    %p198 = scmp.lt.s32.totalorder %s13, 9
    %p199 = pnand %p197, %p198
    %p200 = pneg %p199
    // Predicated region
    $region9: #{spatial_self_attention.3} parent=5 // pred_check
      _
    $region10: #{spatial_self_attention.3} parent=5 // pred_check_branch
      %202 = sbr.rel (%p199) target = $region12
    $region11: #{spatial_self_attention.3} parent=5 // pred_region
      %s203 = ssub.s32 %s13, 1
      // Predicated region
      $region13: #{spatial_self_attention.3} parent=11 // pred_check
        %p204 = pneg %p74
      $region14: #{spatial_self_attention.3} parent=11 // pred_check_branch
        %206 = sbr.rel (%p204) target = $region16
      $region15: #{spatial_self_attention.3} parent=11 // pred_region
        _
      $region16: #{spatial_self_attention.3} parent=11 // pred_fallthru
        _
      // Predicated region
      $region17: #{spatial_self_attention.3} parent=11 // pred_check
        %p207 = pneg %p95
      $region18: #{spatial_self_attention.3} parent=11 // pred_check_branch
        %209 = sbr.rel (%p207) target = $region20
      $region19: #{spatial_self_attention.3} parent=11 // pred_region
        _
      $region20: #{spatial_self_attention.3} parent=11 // pred_fallthru
        _
      // Predicated region
      $region21: #{spatial_self_attention.3} parent=11 // pred_check
        %p210 = pneg %p116
      $region22: #{spatial_self_attention.3} parent=11 // pred_check_branch
        %212 = sbr.rel (%p210) target = $region24
      $region23: #{spatial_self_attention.3} parent=11 // pred_region
        _
      $region24: #{spatial_self_attention.3} parent=11 // pred_fallthru
        _
      // Predicated region
      $region25: #{spatial_self_attention.3} parent=11 // pred_check
        %p213 = pneg %p137
      $region26: #{spatial_self_attention.3} parent=11 // pred_check_branch
        %215 = sbr.rel (%p213) target = $region28
      $region27: #{spatial_self_attention.3} parent=11 // pred_region
        _
      $region28: #{spatial_self_attention.3} parent=11 // pred_fallthru
        _
    $region12: #{spatial_self_attention.3} parent=5 // pred_fallthru
      _
    %p216 = scmp.lt.s32.totalorder %s13, 8
    // Predicated region
    $region29: #{spatial_self_attention.3} parent=5 // pred_check
      %p217 = pneg %p216
    $region30: #{spatial_self_attention.3} parent=5 // pred_check_branch
      %219 = sbr.rel (%p217) target = $region32
    $region31: #{spatial_self_attention.3} parent=5 // pred_region
      // Predicated region
      $region33: #{spatial_self_attention.3} parent=31 // pred_check
        %p220 = pneg %p47
      $region34: #{spatial_self_attention.3} parent=31 // pred_check_branch
        %222 = sbr.rel (%p220) target = $region36
      $region35: #{spatial_self_attention.3} parent=31 // pred_region
        %s223 = smul.u32 8, %s21
        %p224 = scmp.lt.s32.totalorder %s20, 1
        %s225 = scalar_select %p224, %s20, 1
        %p226 = scmp.lt.s32.totalorder %s223, 31
        %s227 = scalar_select %p226, %s223, 31
        %s228 = smul.addr %s225, 32
        %s229 = sadd.s32 %s227, %s228
        %s230 = smul.addr %s229, 8
        %s231 = scalar_lea.vmem %s0, %s230
        %s232 = smul.u32 8, %s21
      $region36: #{spatial_self_attention.3} parent=31 // pred_fallthru
        _
    $region32: #{spatial_self_attention.3} parent=5 // pred_fallthru
      _
    %p233 = scmp.le.s32.totalorder 1, %s13
    %p234 = scmp.lt.s32.totalorder %s13, 9
    %p235 = pnand %p233, %p234
    %p236 = pneg %p235
    // Predicated region
    $region37: #{spatial_self_attention.3} parent=5 // pred_check
      _
    $region38: #{spatial_self_attention.3} parent=5 // pred_check_branch
      %238 = sbr.rel (%p235) target = $region40
    $region39: #{spatial_self_attention.3} parent=5 // pred_region
      %s239 = ssub.s32 %s13, 1
      %s240 = smul.u32 8, %s23
      %p241 = scmp.lt.s32.totalorder %s22, 1
      %s242 = scalar_select %p241, %s22, 1
      %p243 = scmp.lt.s32.totalorder %s240, 31
      %s244 = scalar_select %p243, %s240, 31
      %s245 = smul.addr %s242, 32
      %s246 = sadd.s32 %s244, %s245
      %s247 = smul.addr %s246, 8
      %s248 = scalar_lea.vmem %s0, %s247
      %p249 = pneg %p53
      %p250 = pneg %p50
      %p251 = pneg %p74
      %p252 = pneg %p71
      %p253 = pneg %p95
      %p254 = pneg %p92
      %p255 = pneg %p116
      %p256 = pneg %p113
      %p257 = pneg %p137
      %p258 = pneg %p134
      %p259 = pneg %p163
      %p260 = pneg %p160
      %p261 = scmp.lt.s32.totalorder %s22, 1
      %s262 = scalar_select %p261, %s22, 1
      %s263 = scalar_lea.vmem %s5, %s262
      %p264 = pneg %p189
      %p265 = pneg %p186
      %p266 = scmp.lt.s32.totalorder %s22, 1
      %s267 = scalar_select %p266, %s22, 1
      %s268 = scalar_lea.vmem %s6, %s267
      %s269 = smul.u32 8, %s23
      %p270 = scmp.lt.s32.totalorder %s22, 1
      %s271 = scalar_select %p270, %s22, 1
      %p272 = scmp.lt.s32.totalorder %s269, 31
      %s273 = scalar_select %p272, %s269, 31
      %s274 = smul.addr %s271, 32
      %s275 = sadd.s32 %s273, %s274
      %s276 = smul.addr %s275, 8
      %s277 = scalar_lea.vmem %s0, %s276
      %s278 = smul.u32 8, %s23
      %p279 = scmp.lt.s32.totalorder %s22, 1
      %s280 = scalar_select %p279, %s22, 1
      %s281 = scalar_lea.vmem %s5, %s280
      %p282 = scmp.lt.s32.totalorder %s22, 1
      %s283 = scalar_select %p282, %s22, 1
      %s284 = scalar_lea.vmem %s6, %s283
      %p285 = scmp.eq.s32.totalorder %s23, 0
      // Predicated region
      $region41: #{spatial_self_attention.3} parent=39 // pred_check
        %p286 = pneg %p285
      $region42: #{spatial_self_attention.3} parent=39 // pred_check_branch
        %288 = sbr.rel (%p286) target = $region44
      $region43: #{spatial_self_attention.3} parent=39 // pred_region
        %289 = vst [vmem:[#allocation2] sm:$0x1] 0.0
        %290 = vst [vmem:[#allocation3] sm:$0x1] 0.0
      $region44: #{spatial_self_attention.3} parent=39 // pred_fallthru
        _
      %v291 = vld [vmem:[%s277] sm:$0xff]
      %v292 = vld [vmem:[%s277 + $0x8] sm:$0xff]
      %v293 = vld [vmem:[%s277 + $0x10] sm:$0xff]
      %v294 = vld [vmem:[%s277 + $0x18] sm:$0xff]
      %v295 = vld [vmem:[%s277 + $0x20] sm:$0xff]
      %v296 = vld [vmem:[%s277 + $0x28] sm:$0xff]
      %v297 = vld [vmem:[%s277 + $0x30] sm:$0xff]
      %v298 = vld [vmem:[%s277 + $0x38] sm:$0xff]
      %v299 = vld [vmem:[#allocation2] sm:$0x1]
      %v300 = vadd.f32 %v291, %v292
      %v301 = vadd.f32 %v300, %v293
      %v302 = vadd.f32 %v301, %v294
      %v303 = vadd.f32 %v302, %v295
      %v304 = vadd.f32 %v303, %v296
      %v305 = vadd.f32 %v304, %v297
      %v306 = vadd.f32 %v305, %v298
      %v307 = vrot.slane %v306, 4
      %v308 = vadd.f32 %v306, %v307
      %v309 = vrot.slane %v308, 2
      %v310 = vadd.f32 %v308, %v309
      %v311 = vrot.slane %v310, 1
      %v312 = vadd.f32 %v310, %v311
      %v313 = vadd.f32 %v299, %v312
      %314 = vst [vmem:[#allocation2] sm:$0x1] %v313
      %v315 = vld [vmem:[#allocation3] sm:$0x1]
      %v316 = vmul.f32 %v291, %v291
      %v317 = vmul.f32 %v292, %v292
      %v318 = vmul.f32 %v293, %v293
      %v319 = vmul.f32 %v294, %v294
      %v320 = vmul.f32 %v295, %v295
      %v321 = vmul.f32 %v296, %v296
      %v322 = vmul.f32 %v297, %v297
      %v323 = vmul.f32 %v298, %v298
      %v324 = vadd.f32 %v316, %v317
      %v325 = vadd.f32 %v324, %v318
      %v326 = vadd.f32 %v325, %v319
      %v327 = vadd.f32 %v326, %v320
      %v328 = vadd.f32 %v327, %v321
      %v329 = vadd.f32 %v328, %v322
      %v330 = vadd.f32 %v329, %v323
      %v331 = vrot.slane %v330, 4
      %v332 = vadd.f32 %v330, %v331
      %v333 = vrot.slane %v332, 2
      %v334 = vadd.f32 %v332, %v333
      %v335 = vrot.slane %v334, 1
      %v336 = vadd.f32 %v334, %v335
      %v337 = vadd.f32 %v315, %v336
      %338 = vst [vmem:[#allocation3] sm:$0x1] %v337
      %p339 = scmp.eq.s32.totalorder %s23, 3
      // Predicated region
      $region45: #{spatial_self_attention.3} parent=39 // pred_check
        %p340 = pneg %p339
      $region46: #{spatial_self_attention.3} parent=39 // pred_check_branch
        %342 = sbr.rel (%p340) target = $region48
      $region47: #{spatial_self_attention.3} parent=39 // pred_region
        %v343 = vld [vmem:[#allocation2] sm:$0x1]
        %v344 = vld [vmem:[#allocation3] sm:$0x1]
        %v346 = vlaneseq
        %v347 = vshrl.u32 %v346, 7
        %v348 = vsub.s32 0, %v347
        %v349 = vrot.slane %v344, %v348
        %vm351 = vcmask 1040384
        %v352 = vsel %vm351, %v343, %v349
        %v353 = vld [vmem:[%s1] sm:$0xff]
        %v354 = vld [vmem:[%s1 + $0x8] sm:$0xff]
        %v355 = vld [vmem:[%s1 + $0x10] sm:$0xff]
        %v356 = vld [vmem:[%s1 + $0x18] sm:$0xff]
        %v357 = vld [vmem:[%s1 + $0x20] sm:$0xff]
        %v358 = vld [vmem:[%s1 + $0x28] sm:$0xff]
        %v359 = vld [vmem:[%s1 + $0x30] sm:$0xff]
        %v360 = vld [vmem:[%s1 + $0x38] sm:$0xff]
        %v361 = vld [vmem:[%s1 + $0x40] sm:$0xff]
        %v362 = vld [vmem:[%s1 + $0x48] sm:$0xff]
        %v363 = vld [vmem:[%s1 + $0x50] sm:$0xff]
        %v364 = vld [vmem:[%s1 + $0x58] sm:$0xff]
        %v365 = vld [vmem:[%s1 + $0x60] sm:$0xff]
        %v366 = vld [vmem:[%s1 + $0x68] sm:$0xff]
        %v367 = vld [vmem:[%s1 + $0x70] sm:$0xff]
        %v368 = vld [vmem:[%s1 + $0x78] sm:$0xff]
        %369 = vmatprep.subr.mxu0 0.0
        %370 = vmatpush1.msra.mxu0 %v353
        %371 = vmatprep.subr.mxu0 0.0
        %372 = vmatpush1.msra.mxu0 %v354
        %373 = vmatprep.subr.mxu0 0.0
        %374 = vmatpush1.msra.mxu0 %v355
        %375 = vmatprep.subr.mxu0 0.0
        %376 = vmatpush1.msra.mxu0 %v356
        %377 = vmatprep.subr.mxu0 0.0
        %378 = vmatpush1.msra.mxu0 %v357
        %379 = vmatprep.subr.mxu0 0.0
        %380 = vmatpush1.msra.mxu0 %v358
        %381 = vmatprep.subr.mxu0 0.0
        %382 = vmatpush1.msra.mxu0 %v359
        %383 = vmatprep.subr.mxu0 0.0
        %384 = vmatpush1.msra.mxu0 %v360
        %385 = vmatprep.subr.mxu0 0.0
        %386 = vmatpush1.msra.mxu0 %v361
        %387 = vmatprep.subr.mxu0 0.0
        %388 = vmatpush1.msra.mxu0 %v362
        %389 = vmatprep.subr.mxu0 0.0
        %390 = vmatpush1.msra.mxu0 %v363
        %391 = vmatprep.subr.mxu0 0.0
        %392 = vmatpush1.msra.mxu0 %v364
        %393 = vmatprep.subr.mxu0 0.0
        %394 = vmatpush1.msra.mxu0 %v365
        %395 = vmatprep.subr.mxu0 0.0
        %396 = vmatpush1.msra.mxu0 %v366
        %397 = vmatprep.subr.mxu0 0.0
        %398 = vmatpush1.msra.mxu0 %v367
        %399 = vmatprep.subr.mxu0 0.0
        %400 = vmatpush1.msra.mxu0 %v368
        %401 = vmatprep.subr.mxu0 0.0
        %402 = vmatpush1.msra.mxu0 0.0
        %403 = vmatprep.subr.mxu0 0.0
        %404 = vmatpush1.msra.mxu0 0.0
        %405 = vmatprep.subr.mxu0 0.0
        %406 = vmatpush1.msra.mxu0 0.0
        %407 = vmatprep.subr.mxu0 0.0
        %408 = vmatpush1.msra.mxu0 0.0
        %409 = vmatprep.subr.mxu0 0.0
        %410 = vmatpush1.msra.mxu0 0.0
        %411 = vmatprep.subr.mxu0 0.0
        %412 = vmatpush1.msra.mxu0 0.0
        %413 = vmatprep.subr.mxu0 0.0
        %414 = vmatpush1.msra.mxu0 0.0
        %415 = vmatprep.subr.mxu0 0.0
        %416 = vmatpush1.msra.mxu0 0.0
        %417 = vmatprep.subr.mxu0 0.0
        %418 = vmatpush1.msra.mxu0 0.0
        %419 = vmatprep.subr.mxu0 0.0
        %420 = vmatpush1.msra.mxu0 0.0
        %421 = vmatprep.subr.mxu0 0.0
        %422 = vmatpush1.msra.mxu0 0.0
        %423 = vmatprep.subr.mxu0 0.0
        %424 = vmatpush1.msra.mxu0 0.0
        %425 = vmatprep.subr.mxu0 0.0
        %426 = vmatpush1.msra.mxu0 0.0
        %427 = vmatprep.subr.mxu0 0.0
        %428 = vmatpush1.msra.mxu0 0.0
        %429 = vmatprep.subr.mxu0 0.0
        %430 = vmatpush1.msra.mxu0 0.0
        %431 = vmatprep.subr.mxu0 0.0
        %432 = vmatpush1.msra.mxu0 0.0
        %433 = vmatprep.mubr.f32.mxu0 0.0
        %434 = vmatmul.mubr.f32.gmra.mrb[0].mxu0 %v352
        %v435 = vpop.f32.mrb[0].mxu0
        %v436 = vadd.f32 0.0, %v435
        %v437 = vpop.f32.mrb[0].mxu0
        %438 = vdwg.mxu0
        %v439 = vrcp.pop 512.0
        %v440 = vmul.f32 %v436, %v439
        %v441 = vmul.f32 %v440, %v440
        %v443 = vrot.slane %v441, 7
        %v445 = vsub.f32 %v440, %v443
        %v446 = vmax.f32 %v445, 0.0
        %v447 = vadd.f32 %v446, 1e-06
        %v448 = vrsqrt.pop %v447
        %v449 = vsel %vm351, %v440, %v448
        %v450 = vld [vmem:[%s2] sm:$0xff]
        %v451 = vld [vmem:[%s2 + $0x8] sm:$0xff]
        %v452 = vld [vmem:[%s2 + $0x10] sm:$0xff]
        %v453 = vld [vmem:[%s2 + $0x18] sm:$0xff]
        %v454 = vld [vmem:[%s2 + $0x20] sm:$0xff]
        %v455 = vld [vmem:[%s2 + $0x28] sm:$0xff]
        %v456 = vld [vmem:[%s2 + $0x30] sm:$0xff]
        %v457 = vld [vmem:[%s2 + $0x38] sm:$0xff]
        %v458 = vld [vmem:[%s2 + $0x40] sm:$0xff]
        %v459 = vld [vmem:[%s2 + $0x48] sm:$0xff]
        %v460 = vld [vmem:[%s2 + $0x50] sm:$0xff]
        %v461 = vld [vmem:[%s2 + $0x58] sm:$0xff]
        %v462 = vld [vmem:[%s2 + $0x60] sm:$0xff]
        %v463 = vld [vmem:[%s2 + $0x68] sm:$0xff]
        %v464 = vld [vmem:[%s2 + $0x70] sm:$0xff]
        %v465 = vld [vmem:[%s2 + $0x78] sm:$0xff]
        %466 = vmatprep.subr.mxu0 0.0
        %467 = vmatpush1.msra.mxu0 %v450
        %468 = vmatprep.subr.mxu0 0.0
        %469 = vmatpush1.msra.mxu0 %v451
        %470 = vmatprep.subr.mxu0 0.0
        %471 = vmatpush1.msra.mxu0 %v452
        %472 = vmatprep.subr.mxu0 0.0
        %473 = vmatpush1.msra.mxu0 %v453
        %474 = vmatprep.subr.mxu0 0.0
        %475 = vmatpush1.msra.mxu0 %v454
        %476 = vmatprep.subr.mxu0 0.0
        %477 = vmatpush1.msra.mxu0 %v455
        %478 = vmatprep.subr.mxu0 0.0
        %479 = vmatpush1.msra.mxu0 %v456
        %480 = vmatprep.subr.mxu0 0.0
        %481 = vmatpush1.msra.mxu0 %v457
        %482 = vmatprep.subr.mxu0 0.0
        %483 = vmatpush1.msra.mxu0 %v458
        %484 = vmatprep.subr.mxu0 0.0
        %485 = vmatpush1.msra.mxu0 %v459
        %486 = vmatprep.subr.mxu0 0.0
        %487 = vmatpush1.msra.mxu0 %v460
        %488 = vmatprep.subr.mxu0 0.0
        %489 = vmatpush1.msra.mxu0 %v461
        %490 = vmatprep.subr.mxu0 0.0
        %491 = vmatpush1.msra.mxu0 %v462
        %492 = vmatprep.subr.mxu0 0.0
        %493 = vmatpush1.msra.mxu0 %v463
        %494 = vmatprep.subr.mxu0 0.0
        %495 = vmatpush1.msra.mxu0 %v464
        %496 = vmatprep.subr.mxu0 0.0
        %497 = vmatpush1.msra.mxu0 %v465
        %498 = vmatprep.subr.mxu0 0.0
        %499 = vmatpush1.msra.mxu0 0.0
        %500 = vmatprep.subr.mxu0 0.0
        %501 = vmatpush1.msra.mxu0 0.0
        %502 = vmatprep.subr.mxu0 0.0
        %503 = vmatpush1.msra.mxu0 0.0
        %504 = vmatprep.subr.mxu0 0.0
        %505 = vmatpush1.msra.mxu0 0.0
        %506 = vmatprep.subr.mxu0 0.0
        %507 = vmatpush1.msra.mxu0 0.0
        %508 = vmatprep.subr.mxu0 0.0
        %509 = vmatpush1.msra.mxu0 0.0
        %510 = vmatprep.subr.mxu0 0.0
        %511 = vmatpush1.msra.mxu0 0.0
        %512 = vmatprep.subr.mxu0 0.0
        %513 = vmatpush1.msra.mxu0 0.0
        %514 = vmatprep.subr.mxu0 0.0
        %515 = vmatpush1.msra.mxu0 0.0
        %516 = vmatprep.subr.mxu0 0.0
        %517 = vmatpush1.msra.mxu0 0.0
        %518 = vmatprep.subr.mxu0 0.0
        %519 = vmatpush1.msra.mxu0 0.0
        %520 = vmatprep.subr.mxu0 0.0
        %521 = vmatpush1.msra.mxu0 0.0
        %522 = vmatprep.subr.mxu0 0.0
        %523 = vmatpush1.msra.mxu0 0.0
        %524 = vmatprep.subr.mxu0 0.0
        %525 = vmatpush1.msra.mxu0 0.0
        %526 = vmatprep.subr.mxu0 0.0
        %527 = vmatpush1.msra.mxu0 0.0
        %528 = vmatprep.subr.mxu0 0.0
        %529 = vmatpush1.msra.mxu0 0.0
        %530 = vmatprep.mubr.f32.mxu0 0.0
        %531 = vmatmul.mubr.f32.gmra.mrb[0].mxu0 %v449
        %v532 = vpop.f32.mrb[0].mxu0
        %v533 = vadd.f32 0.0, %v532
        %v534 = vpop.f32.mrb[0].mxu0
        %535 = vdwg.mxu0
        %v536 = vld [vmem:[%s3] sm:$0x1]
        %v538 = vlaneseq
        %v539 = vshrl.u32 %v538, 7
        %v540 = vsub.s32 0, %v539
        %v541 = vrot.slane %v536, %v540
        %v543 = vmul.f32 %v533, %v541
        %v544 = vld [vmem:[%s4] sm:$0x1]
        %v546 = vrot.slane %v543, 1
        %v548 = vmul.f32 %v533, %v546
        %v549 = vsub.f32 %v544, %v548
        %550 = vst [vmem:[%s281 - $0x1] sm:$0x2] %v543
        %551 = vst [vmem:[%s284] sm:$0x1] %v549
      $region48: #{spatial_self_attention.3} parent=39 // pred_fallthru
        _
      %p552 = scmp.lt.s32.totalorder %s22, 1
      %s553 = scalar_select %p552, %s22, 1
      %s554 = scalar_lea.vmem %s5, %s553
      %p555 = scmp.lt.s32.totalorder %s22, 1
      %s556 = scalar_select %p555, %s22, 1
      %s557 = scalar_lea.vmem %s6, %s556
      // Predicated region
      $region49: #{spatial_self_attention.3} parent=39 // pred_check
        %p558 = pneg %p160
      $region50: #{spatial_self_attention.3} parent=39 // pred_check_branch
        %560 = sbr.rel (%p558) target = $region52
      $region51: #{spatial_self_attention.3} parent=39 // pred_region
        _
      $region52: #{spatial_self_attention.3} parent=39 // pred_fallthru
        _
      // Predicated region
      $region53: #{spatial_self_attention.3} parent=39 // pred_check
        %p561 = pneg %p186
      $region54: #{spatial_self_attention.3} parent=39 // pred_check_branch
        %563 = sbr.rel (%p561) target = $region56
      $region55: #{spatial_self_attention.3} parent=39 // pred_region
        _
      $region56: #{spatial_self_attention.3} parent=39 // pred_fallthru
        _
    $region40: #{spatial_self_attention.3} parent=5 // pred_fallthru
      _
    %p564 = scmp.le.s32.totalorder 2, %s13
    // Predicated region
    $region57: #{spatial_self_attention.3} parent=5 // pred_check
      %p565 = pneg %p564
    $region58: #{spatial_self_attention.3} parent=5 // pred_check_branch
      %567 = sbr.rel (%p565) target = $region60
    $region59: #{spatial_self_attention.3} parent=5 // pred_region
      %s568 = ssub.s32 %s13, 2
      // Predicated region
      $region61: #{spatial_self_attention.3} parent=59 // pred_check
        %p569 = pneg %p166
      $region62: #{spatial_self_attention.3} parent=59 // pred_check_branch
        %571 = sbr.rel (%p569) target = $region64
      $region63: #{spatial_self_attention.3} parent=59 // pred_region
        %p572 = scmp.lt.s32.totalorder %s24, 1
        %s573 = scalar_select %p572, %s24, 1
        %s574 = scalar_lea.vmem %s5, %s573
      $region64: #{spatial_self_attention.3} parent=59 // pred_fallthru
        _
      // Predicated region
      $region65: #{spatial_self_attention.3} parent=59 // pred_check
        %p575 = pneg %p192
      $region66: #{spatial_self_attention.3} parent=59 // pred_check_branch
        %577 = sbr.rel (%p575) target = $region68
      $region67: #{spatial_self_attention.3} parent=59 // pred_region
        %p578 = scmp.lt.s32.totalorder %s24, 1
        %s579 = scalar_select %p578, %s24, 1
        %s580 = scalar_lea.vmem %s6, %s579
      $region68: #{spatial_self_attention.3} parent=59 // pred_fallthru
        _
    $region60: #{spatial_self_attention.3} parent=5 // pred_fallthru
      _
  $region6: #{spatial_self_attention.3} parent=0 // loop_footer
    %s17 = sadd.s32 1, %s13
  $region7: #{spatial_self_attention.3} parent=0 // loop_footer_branch
    %12 = sbr.rel target = $region3
  $region8: #{spatial_self_attention.3} parent=0 // loop_exit
    _

// kernel: spatial_self_attention.4
$region0: #{spatial_self_attention.4}
  #allocation0 [shape = 'u32[]', space=smem, size = 0x4, offset = 0x4, fixed_abs, tag = 'smem constant byte address 0x4 - core index']
  #allocation1 [shape = 'u32[144,128]{1,0:T(1,128)}', space=vmem, size = 0x12000, scoped, tag = 'internal scratch']
  %s0 = inlined_call_operand.vmem [shape: f32[2,256,128], index: 0, kind: input, shape index: {}]
  %s1 = inlined_call_operand.vmem [shape: f32[2,1,128], index: 1, kind: input, shape index: {}]
  %s2 = inlined_call_operand.vmem [shape: f32[2,1,128], index: 2, kind: input, shape index: {}]
  %s3 = inlined_call_operand.vmem [shape: bf16[128,384], index: 3, kind: input, shape index: {}]
  %s4 = inlined_call_operand.vmem [shape: f32[1,384], index: 4, kind: input, shape index: {}]
  %s5 = inlined_call_operand.vmem [shape: bf16[2,256,384], index: 5, kind: output, shape index: {}]
  %s6 = sld [smem:[#allocation0]]
  $region53: #{spatial_self_attention.4} parent=0
    _
  %s8 = ssub.s32 1, %s6
  %s9 = scalar_select 0, %s8, %s6
  loop: start=0, step=1, limit=10
  $region2: #{spatial_self_attention.4} parent=0 // loop_pre_header
    _
  $region3: #{spatial_self_attention.4} parent=0 // loop_header
    %s11 = sphi 0, %s15
    %p12 = scmp.ge.s32.totalorder %s11, 10
    %s18 = sphi 0, %s30
    %s19 = sphi 0, %s26
    %s20 = sphi 0, %s18
    %s21 = sphi 0, %s19
    %s22 = sphi 0, %s20
    %s23 = sphi 0, %s21
    %s35 = sphi 0, %s37
    %s38 = sphi 0, %s35
    %s39 = sphi 0, %s38
    %s55 = sphi 0, %s39
    %s61 = sphi 0, %s63
    %s64 = sphi 0, %s61
    %s65 = sphi 0, %s64
    %s81 = sphi 0, %s65
    %s87 = sphi 0, %s89
    %s90 = sphi 0, %s87
    %s91 = sphi 0, %s90
    %s107 = sphi 0, %s91
    %s111 = sphi 0, %s111
    %s113 = sphi 0, %s111
    %s114 = sphi 0, %s113
    %s128 = sphi 0, %s114
    %s132 = sphi 0, %s132
    %s134 = sphi 0, %s132
    %s135 = sphi 0, %s134
    %s149 = sphi 0, %s135
    %s157 = sphi 0, %s159
    %s160 = sphi 0, %s157
    %s161 = sphi 0, %s160
    %s177 = sphi 0, %s161
  $region4: #{spatial_self_attention.4} parent=0 // loop_header_branch
    %14 = sbr.rel (%p12) target = $region8
  $region5: #{spatial_self_attention.4} parent=0 // loop_body
    %s16 = ssub.s32 %s11, 1
    %s17 = ssub.s32 %s11, 2
    %s24 = sadd.s32 1, %s19
    %p25 = scmp.ge.s32.totalorder %s24, 4
    %s26 = scalar_select %p25, 0, %s24
    %s27 = sadd.s32 1, %s18
    %s28 = scalar_select %p25, %s27, %s18
    %p29 = scmp.ge.s32.totalorder %s28, 2
    %s30 = scalar_select %p29, 0, %s28
    %s31 = ssub.s32 %s18, %s30
    %s32 = ssub.s32 %s19, %s26
    %s33 = sor.u32 %s31, %s32
    %p34 = scmp.eq.s32.totalorder %s33, 0
    %s36 = sadd.s32 %s35, 1
    %s37 = scalar_select %p34, %s35, %s36
    %p40 = pneg %p34
    %p41 = scmp.eq.s32.totalorder %s11, 7
    %p42 = por %p40, %p41
    %p43 = scmp.ne.s32.totalorder %s35, %s38
    %p44 = scmp.eq.s32.totalorder %s11, 0
    %p45 = por %p43, %p44
    %p46 = scmp.ne.s32.totalorder %s35, %s38
    %p47 = scmp.eq.s32.totalorder %s16, 7
    %p48 = por %p46, %p47
    %p49 = scmp.ne.s32.totalorder %s38, %s39
    %p50 = scmp.eq.s32.totalorder %s16, 0
    %p51 = por %p49, %p50
    %p52 = scmp.ne.s32.totalorder %s38, %s39
    %p53 = scmp.eq.s32.totalorder %s17, 7
    %p54 = por %p52, %p53
    %p56 = scmp.ne.s32.totalorder %s39, %s55
    %p57 = scmp.eq.s32.totalorder %s17, 0
    %p58 = por %p56, %p57
    %s59 = ssub.s32 %s18, %s30
    %p60 = scmp.eq.s32.totalorder %s59, 0
    %s62 = sadd.s32 %s61, 1
    %s63 = scalar_select %p60, %s61, %s62
    %p66 = pneg %p60
    %p67 = scmp.eq.s32.totalorder %s11, 7
    %p68 = por %p66, %p67
    %p69 = scmp.ne.s32.totalorder %s61, %s64
    %p70 = scmp.eq.s32.totalorder %s11, 0
    %p71 = por %p69, %p70
    %p72 = scmp.ne.s32.totalorder %s61, %s64
    %p73 = scmp.eq.s32.totalorder %s16, 7
    %p74 = por %p72, %p73
    %p75 = scmp.ne.s32.totalorder %s64, %s65
    %p76 = scmp.eq.s32.totalorder %s16, 0
    %p77 = por %p75, %p76
    %p78 = scmp.ne.s32.totalorder %s64, %s65
    %p79 = scmp.eq.s32.totalorder %s17, 7
    %p80 = por %p78, %p79
    %p82 = scmp.ne.s32.totalorder %s65, %s81
    %p83 = scmp.eq.s32.totalorder %s17, 0
    %p84 = por %p82, %p83
    %s85 = ssub.s32 %s18, %s30
    %p86 = scmp.eq.s32.totalorder %s85, 0
    %s88 = sadd.s32 %s87, 1
    %s89 = scalar_select %p86, %s87, %s88
    %p92 = pneg %p86
    %p93 = scmp.eq.s32.totalorder %s11, 7
    %p94 = por %p92, %p93
    %p95 = scmp.ne.s32.totalorder %s87, %s90
    %p96 = scmp.eq.s32.totalorder %s11, 0
    %p97 = por %p95, %p96
    %p98 = scmp.ne.s32.totalorder %s87, %s90
    %p99 = scmp.eq.s32.totalorder %s16, 7
    %p100 = por %p98, %p99
    %p101 = scmp.ne.s32.totalorder %s90, %s91
    %p102 = scmp.eq.s32.totalorder %s16, 0
    %p103 = por %p101, %p102
    %p104 = scmp.ne.s32.totalorder %s90, %s91
    %p105 = scmp.eq.s32.totalorder %s17, 7
    %p106 = por %p104, %p105
    %p108 = scmp.ne.s32.totalorder %s91, %s107
    %p109 = scmp.eq.s32.totalorder %s17, 0
    %p110 = por %p108, %p109
    %s112 = sadd.s32 %s111, 1
    %p115 = scmp.eq.s32.totalorder %s11, 7
    %p116 = scmp.ne.s32.totalorder %s111, %s113
    %p117 = scmp.eq.s32.totalorder %s11, 0
    %p118 = por %p116, %p117
    %p119 = scmp.ne.s32.totalorder %s111, %s113
    %p120 = scmp.eq.s32.totalorder %s16, 7
    %p121 = por %p119, %p120
    %p122 = scmp.ne.s32.totalorder %s113, %s114
    %p123 = scmp.eq.s32.totalorder %s16, 0
    %p124 = por %p122, %p123
    %p125 = scmp.ne.s32.totalorder %s113, %s114
    %p126 = scmp.eq.s32.totalorder %s17, 7
    %p127 = por %p125, %p126
    %p129 = scmp.ne.s32.totalorder %s114, %s128
    %p130 = scmp.eq.s32.totalorder %s17, 0
    %p131 = por %p129, %p130
    %s133 = sadd.s32 %s132, 1
    %p136 = scmp.eq.s32.totalorder %s11, 7
    %p137 = scmp.ne.s32.totalorder %s132, %s134
    %p138 = scmp.eq.s32.totalorder %s11, 0
    %p139 = por %p137, %p138
    %p140 = scmp.ne.s32.totalorder %s132, %s134
    %p141 = scmp.eq.s32.totalorder %s16, 7
    %p142 = por %p140, %p141
    %p143 = scmp.ne.s32.totalorder %s134, %s135
    %p144 = scmp.eq.s32.totalorder %s16, 0
    %p145 = por %p143, %p144
    %p146 = scmp.ne.s32.totalorder %s134, %s135
    %p147 = scmp.eq.s32.totalorder %s17, 7
    %p148 = por %p146, %p147
    %p150 = scmp.ne.s32.totalorder %s135, %s149
    %p151 = scmp.eq.s32.totalorder %s17, 0
    %p152 = por %p150, %p151
    %s153 = ssub.s32 %s18, %s30
    %s154 = ssub.s32 %s19, %s26
    %s155 = sor.u32 %s153, %s154
    %p156 = scmp.eq.s32.totalorder %s155, 0
    %s158 = sadd.s32 %s157, 1
    %s159 = scalar_select %p156, %s157, %s158
    %p162 = pneg %p156
    %p163 = scmp.eq.s32.totalorder %s11, 7
    %p164 = por %p162, %p163
    %p165 = scmp.ne.s32.totalorder %s157, %s160
    %p166 = scmp.eq.s32.totalorder %s11, 0
    %p167 = por %p165, %p166
    %p168 = scmp.ne.s32.totalorder %s157, %s160
    %p169 = scmp.eq.s32.totalorder %s16, 7
    %p170 = por %p168, %p169
    %p171 = scmp.ne.s32.totalorder %s160, %s161
    %p172 = scmp.eq.s32.totalorder %s16, 0
    %p173 = por %p171, %p172
    %p174 = scmp.ne.s32.totalorder %s160, %s161
    %p175 = scmp.eq.s32.totalorder %s17, 7
    %p176 = por %p174, %p175
    %p178 = scmp.ne.s32.totalorder %s161, %s177
    %p179 = scmp.eq.s32.totalorder %s17, 0
    %p180 = por %p178, %p179
    %p181 = scmp.le.s32.totalorder 1, %s11
    %p182 = scmp.lt.s32.totalorder %s11, 9
    %p183 = pnand %p181, %p182
    %p184 = pneg %p183
    // Predicated region
    $region9: #{spatial_self_attention.4} parent=5 // pred_check
      _
    $region10: #{spatial_self_attention.4} parent=5 // pred_check_branch
      %186 = sbr.rel (%p183) target = $region12
    $region11: #{spatial_self_attention.4} parent=5 // pred_region
      %s187 = ssub.s32 %s11, 1
      // Predicated region
      $region13: #{spatial_self_attention.4} parent=11 // pred_check
        %p188 = pneg %p124
      $region14: #{spatial_self_attention.4} parent=11 // pred_check_branch
        %190 = sbr.rel (%p188) target = $region16
      $region15: #{spatial_self_attention.4} parent=11 // pred_region
        _
      $region16: #{spatial_self_attention.4} parent=11 // pred_fallthru
        _
      // Predicated region
      $region17: #{spatial_self_attention.4} parent=11 // pred_check
        %p191 = pneg %p145
      $region18: #{spatial_self_attention.4} parent=11 // pred_check_branch
        %193 = sbr.rel (%p191) target = $region20
      $region19: #{spatial_self_attention.4} parent=11 // pred_region
        _
      $region20: #{spatial_self_attention.4} parent=11 // pred_fallthru
        _
    $region12: #{spatial_self_attention.4} parent=5 // pred_fallthru
      _
    %p194 = scmp.lt.s32.totalorder %s11, 8
    // Predicated region
    $region21: #{spatial_self_attention.4} parent=5 // pred_check
      %p195 = pneg %p194
    $region22: #{spatial_self_attention.4} parent=5 // pred_check_branch
      %197 = sbr.rel (%p195) target = $region24
    $region23: #{spatial_self_attention.4} parent=5 // pred_region
      // Predicated region
      $region25: #{spatial_self_attention.4} parent=23 // pred_check
        %p198 = pneg %p45
      $region26: #{spatial_self_attention.4} parent=23 // pred_check_branch
        %200 = sbr.rel (%p198) target = $region28
      $region27: #{spatial_self_attention.4} parent=23 // pred_region
        %s201 = smul.u32 8, %s19
        %p202 = scmp.lt.s32.totalorder %s18, 1
        %s203 = scalar_select %p202, %s18, 1
        %p204 = scmp.lt.s32.totalorder %s201, 31
        %s205 = scalar_select %p204, %s201, 31
        %s206 = smul.addr %s203, 32
        %s207 = sadd.s32 %s205, %s206
        %s208 = smul.addr %s207, 8
        %s209 = scalar_lea.vmem %s0, %s208
        %s210 = smul.u32 8, %s19
      $region28: #{spatial_self_attention.4} parent=23 // pred_fallthru
        _
      // Predicated region
      $region29: #{spatial_self_attention.4} parent=23 // pred_check
        %p211 = pneg %p71
      $region30: #{spatial_self_attention.4} parent=23 // pred_check_branch
        %213 = sbr.rel (%p211) target = $region32
      $region31: #{spatial_self_attention.4} parent=23 // pred_region
        %p214 = scmp.lt.s32.totalorder %s18, 1
        %s215 = scalar_select %p214, %s18, 1
        %s216 = scalar_lea.vmem %s1, %s215
      $region32: #{spatial_self_attention.4} parent=23 // pred_fallthru
        _
      // Predicated region
      $region33: #{spatial_self_attention.4} parent=23 // pred_check
        %p217 = pneg %p97
      $region34: #{spatial_self_attention.4} parent=23 // pred_check_branch
        %219 = sbr.rel (%p217) target = $region36
      $region35: #{spatial_self_attention.4} parent=23 // pred_region
        %p220 = scmp.lt.s32.totalorder %s18, 1
        %s221 = scalar_select %p220, %s18, 1
        %s222 = scalar_lea.vmem %s2, %s221
      $region36: #{spatial_self_attention.4} parent=23 // pred_fallthru
        _
    $region24: #{spatial_self_attention.4} parent=5 // pred_fallthru
      _
    %p223 = scmp.le.s32.totalorder 1, %s11
    %p224 = scmp.lt.s32.totalorder %s11, 9
    %p225 = pnand %p223, %p224
    %p226 = pneg %p225
    // Predicated region
    $region37: #{spatial_self_attention.4} parent=5 // pred_check
      _
    $region38: #{spatial_self_attention.4} parent=5 // pred_check_branch
      %228 = sbr.rel (%p225) target = $region40
    $region39: #{spatial_self_attention.4} parent=5 // pred_region
      %s229 = ssub.s32 %s11, 1
      %s230 = smul.u32 8, %s21
      %p231 = scmp.lt.s32.totalorder %s20, 1
      %s232 = scalar_select %p231, %s20, 1
      %p233 = scmp.lt.s32.totalorder %s230, 31
      %s234 = scalar_select %p233, %s230, 31
      %s235 = smul.addr %s232, 32
      %s236 = sadd.s32 %s234, %s235
      %s237 = smul.addr %s236, 8
      %s238 = scalar_lea.vmem %s0, %s237
      %p239 = pneg %p51
      %p240 = pneg %p48
      %p241 = scmp.lt.s32.totalorder %s20, 1
      %s242 = scalar_select %p241, %s20, 1
      %s243 = scalar_lea.vmem %s1, %s242
      %p244 = pneg %p77
      %p245 = pneg %p74
      %p246 = scmp.lt.s32.totalorder %s20, 1
      %s247 = scalar_select %p246, %s20, 1
      %s248 = scalar_lea.vmem %s2, %s247
      %p249 = pneg %p103
      %p250 = pneg %p100
      %p251 = pneg %p124
      %p252 = pneg %p121
      %p253 = pneg %p145
      %p254 = pneg %p142
      %p255 = pneg %p173
      %p256 = pneg %p170
      %s257 = smul.u32 8, %s21
      %p258 = scmp.lt.s32.totalorder %s20, 1
      %s259 = scalar_select %p258, %s20, 1
      %p260 = scmp.lt.s32.totalorder %s257, 31
      %s261 = scalar_select %p260, %s257, 31
      %s262 = smul.addr %s261, 3
      %s263 = smul.addr %s259, 96
      %s264 = sadd.s32 %s262, %s263
      %s265 = smul.addr %s264, 4
      %s266 = scalar_lea.vmem %s5, %s265
      %s267 = smul.u32 8, %s21
      %p268 = scmp.lt.s32.totalorder %s20, 1
      %s269 = scalar_select %p268, %s20, 1
      %p270 = scmp.lt.s32.totalorder %s267, 31
      %s271 = scalar_select %p270, %s267, 31
      %s272 = smul.addr %s269, 32
      %s273 = sadd.s32 %s271, %s272
      %s274 = smul.addr %s273, 8
      %s275 = scalar_lea.vmem %s0, %s274
      %s276 = smul.u32 8, %s21
      %p277 = scmp.lt.s32.totalorder %s20, 1
      %s278 = scalar_select %p277, %s20, 1
      %s279 = scalar_lea.vmem %s1, %s278
      %p280 = scmp.lt.s32.totalorder %s20, 1
      %s281 = scalar_select %p280, %s20, 1
      %s282 = scalar_lea.vmem %s2, %s281
      %s283 = smul.u32 8, %s21
      %p284 = scmp.lt.s32.totalorder %s20, 1
      %s285 = scalar_select %p284, %s20, 1
      %p286 = scmp.lt.s32.totalorder %s283, 31
      %s287 = scalar_select %p286, %s283, 31
      %s288 = smul.addr %s287, 3
      %s289 = smul.addr %s285, 96
      %s290 = sadd.s32 %s288, %s289
      %s291 = smul.addr %s290, 4
      %s292 = scalar_lea.vmem %s5, %s291
      %s293 = smul.u32 8, %s21
      %v295 = vld [vmem:[%s275] sm:$0xff]
      %v296 = vld [vmem:[%s275 + $0x8] sm:$0xff]
      %v297 = vld [vmem:[%s275 + $0x10] sm:$0xff]
      %v298 = vld [vmem:[%s275 + $0x18] sm:$0xff]
      %v299 = vld [vmem:[%s275 + $0x20] sm:$0xff]
      %v300 = vld [vmem:[%s275 + $0x28] sm:$0xff]
      %v301 = vld [vmem:[%s275 + $0x30] sm:$0xff]
      %v302 = vld [vmem:[%s275 + $0x38] sm:$0xff]
      %v303 = vld [vmem:[%s279] sm:$0x1]
      %v305 = vlaneseq
      %v306 = vshrl.u32 %v305, 7
      %v307 = vsub.s32 0, %v306
      %v308 = vrot.slane %v303, %v307
      %v310 = vmul.f32 %v295, %v308
      %v311 = vmul.f32 %v296, %v308
      %v312 = vmul.f32 %v297, %v308
      %v313 = vmul.f32 %v298, %v308
      %v314 = vmul.f32 %v299, %v308
      %v315 = vmul.f32 %v300, %v308
      %v316 = vmul.f32 %v301, %v308
      %v317 = vmul.f32 %v302, %v308
      %v318 = vld [vmem:[%s282] sm:$0x1]
      %v320 = vlaneseq
      %v321 = vshrl.u32 %v320, 7
      %v322 = vsub.s32 0, %v321
      %v323 = vrot.slane %v318, %v322
      %v325 = vadd.f32 %v310, %v323
      %v326 = vadd.f32 %v311, %v323
      %v327 = vadd.f32 %v312, %v323
      %v328 = vadd.f32 %v313, %v323
      %v329 = vadd.f32 %v314, %v323
      %v330 = vadd.f32 %v315, %v323
      %v331 = vadd.f32 %v316, %v323
      %v332 = vadd.f32 %v317, %v323
      %v333 = vpack.c.bf16 %v326, %v325
      %v334 = vpack.c.bf16 %v328, %v327
      %v335 = vpack.c.bf16 %v330, %v329
      %v336 = vpack.c.bf16 %v332, %v331
      %v337 = vld [vmem:[%s3] sm:$0xff]
      %v338 = vld [vmem:[%s3 + $0x8] sm:$0xf]
      %v339 = vld [vmem:[%s3 + $0xc] sm:$0xff]
      %v340 = vld [vmem:[%s3 + $0x14] sm:$0xf]
      %v341 = vld [vmem:[%s3 + $0x18] sm:$0xff]
      %v342 = vld [vmem:[%s3 + $0x20] sm:$0xf]
      %v343 = vld [vmem:[%s3 + $0x24] sm:$0xff]
      %v344 = vld [vmem:[%s3 + $0x2c] sm:$0xf]
      %v345 = vld [vmem:[%s3 + $0x30] sm:$0xff]
      %v346 = vld [vmem:[%s3 + $0x38] sm:$0xf]
      %v347 = vld [vmem:[%s3 + $0x3c] sm:$0xff]
      %v348 = vld [vmem:[%s3 + $0x44] sm:$0xf]
      %v349 = vld [vmem:[%s3 + $0x48] sm:$0xff]
      %v350 = vld [vmem:[%s3 + $0x50] sm:$0xf]
      %v351 = vld [vmem:[%s3 + $0x54] sm:$0xff]
      %v352 = vld [vmem:[%s3 + $0x5c] sm:$0xf]
      %v353 = vld [vmem:[%s3 + $0x60] sm:$0xff]
      %v354 = vld [vmem:[%s3 + $0x68] sm:$0xf]
      %v355 = vld [vmem:[%s3 + $0x6c] sm:$0xff]
      %v356 = vld [vmem:[%s3 + $0x74] sm:$0xf]
      %v357 = vld [vmem:[%s3 + $0x78] sm:$0xff]
      %v358 = vld [vmem:[%s3 + $0x80] sm:$0xf]
      %v359 = vld [vmem:[%s3 + $0x84] sm:$0xff]
      %v360 = vld [vmem:[%s3 + $0x8c] sm:$0xf]
      %v361 = vld [vmem:[%s3 + $0x90] sm:$0xff]
      %v362 = vld [vmem:[%s3 + $0x98] sm:$0xf]
      %v363 = vld [vmem:[%s3 + $0x9c] sm:$0xff]
      %v364 = vld [vmem:[%s3 + $0xa4] sm:$0xf]
      %v365 = vld [vmem:[%s3 + $0xa8] sm:$0xff]
      %v366 = vld [vmem:[%s3 + $0xb0] sm:$0xf]
      %v367 = vld [vmem:[%s3 + $0xb4] sm:$0xff]
      %v368 = vld [vmem:[%s3 + $0xbc] sm:$0xf]
      %v369 = vld [vmem:[%s4] sm:$0x7]
      %v371 = vlaneseq
      %v372 = vshrl.u32 %v371, 7
      %v373 = vsub.s32 0, %v372
      %v374 = vrot.slane %v369, %v373
      %v375 = vlaneseq
      %v376 = vshrl.u32 %v375, 7
      %v377 = vsub.s32 1, %v376
      %v378 = vrot.slane %v369, %v377
      %v379 = vlaneseq
      %v380 = vshrl.u32 %v379, 7
      %v381 = vsub.s32 2, %v380
      %v382 = vrot.slane %v369, %v381
      %v418 = vunpack.c.l.b16 %v337
      %v419 = vunpack.c.h.b16 %v337
      %v420 = vunpack.c.l.b16 %v338
      %v421 = vunpack.c.l.b16 %v339
      %v422 = vunpack.c.h.b16 %v339
      %v423 = vunpack.c.l.b16 %v340
      %v424 = vunpack.c.l.b16 %v341
      %v425 = vunpack.c.h.b16 %v341
      %v426 = vunpack.c.l.b16 %v342
      %v427 = vunpack.c.l.b16 %v343
      %v428 = vunpack.c.h.b16 %v343
      %v429 = vunpack.c.l.b16 %v344
      %v430 = vunpack.c.l.b16 %v345
      %v431 = vunpack.c.h.b16 %v345
      %v432 = vunpack.c.l.b16 %v346
      %v433 = vunpack.c.l.b16 %v347
      %v434 = vunpack.c.h.b16 %v347
      %v435 = vunpack.c.l.b16 %v348
      %v436 = vunpack.c.l.b16 %v349
      %v437 = vunpack.c.h.b16 %v349
      %v438 = vunpack.c.l.b16 %v350
      %v439 = vunpack.c.l.b16 %v351
      %v440 = vunpack.c.h.b16 %v351
      %v441 = vunpack.c.l.b16 %v352
      %v442 = vunpack.c.l.b16 %v353
      %v443 = vunpack.c.h.b16 %v353
      %v444 = vunpack.c.l.b16 %v354
      %v445 = vunpack.c.l.b16 %v355
      %v446 = vunpack.c.h.b16 %v355
      %v447 = vunpack.c.l.b16 %v356
      %v448 = vunpack.c.l.b16 %v357
      %v449 = vunpack.c.h.b16 %v357
      %v450 = vunpack.c.l.b16 %v358
      %v451 = vunpack.c.l.b16 %v359
      %v452 = vunpack.c.h.b16 %v359
      %v453 = vunpack.c.l.b16 %v360
      %v454 = vunpack.c.l.b16 %v361
      %v455 = vunpack.c.h.b16 %v361
      %v456 = vunpack.c.l.b16 %v362
      %v457 = vunpack.c.l.b16 %v363
      %v458 = vunpack.c.h.b16 %v363
      %v459 = vunpack.c.l.b16 %v364
      %v460 = vunpack.c.l.b16 %v365
      %v461 = vunpack.c.h.b16 %v365
      %v462 = vunpack.c.l.b16 %v366
      %v463 = vunpack.c.l.b16 %v367
      %v464 = vunpack.c.h.b16 %v367
      %v465 = vunpack.c.l.b16 %v368
      %v466 = vpack.c.b16 %v421, %v418
      %v467 = vpack.c.b16 %v422, %v419
      %v468 = vpack.c.b16 %v423, %v420
      %v469 = vpack.c.b16 %v427, %v424
      %v470 = vpack.c.b16 %v428, %v425
      %v471 = vpack.c.b16 %v429, %v426
      %v472 = vpack.c.b16 %v433, %v430
      %v473 = vpack.c.b16 %v434, %v431
      %v474 = vpack.c.b16 %v435, %v432
      %v475 = vpack.c.b16 %v439, %v436
      %v476 = vpack.c.b16 %v440, %v437
      %v477 = vpack.c.b16 %v441, %v438
      %v478 = vpack.c.b16 %v445, %v442
      %v479 = vpack.c.b16 %v446, %v443
      %v480 = vpack.c.b16 %v447, %v444
      %v481 = vpack.c.b16 %v451, %v448
      %v482 = vpack.c.b16 %v452, %v449
      %v483 = vpack.c.b16 %v453, %v450
      %v484 = vpack.c.b16 %v457, %v454
      %v485 = vpack.c.b16 %v458, %v455
      %v486 = vpack.c.b16 %v459, %v456
      %v487 = vpack.c.b16 %v463, %v460
      %v488 = vpack.c.b16 %v464, %v461
      %v489 = vpack.c.b16 %v465, %v462
      %514 = vmatprep.subr.bf16.mxu0 %v467
      %515 = vmatpush1.bf16.msra.mxu0 %v466
      %516 = vmatprep.subr.bf16.mxu0 %v470
      %517 = vmatpush1.bf16.msra.mxu0 %v469
      %518 = vmatprep.subr.bf16.mxu0 %v473
      %519 = vmatpush1.bf16.msra.mxu0 %v472
      %520 = vmatprep.subr.bf16.mxu0 %v476
      %521 = vmatpush1.bf16.msra.mxu0 %v475
      %522 = vmatprep.subr.bf16.mxu0 %v479
      %523 = vmatpush1.bf16.msra.mxu0 %v478
      %524 = vmatprep.subr.bf16.mxu0 %v482
      %525 = vmatpush1.bf16.msra.mxu0 %v481
      %526 = vmatprep.subr.bf16.mxu0 %v485
      %527 = vmatpush1.bf16.msra.mxu0 %v484
      %528 = vmatprep.subr.bf16.mxu0 %v488
      %529 = vmatpush1.bf16.msra.mxu0 %v487
      %530 = vmatprep.subr.bf16.mxu0 0
      %531 = vmatpush1.bf16.msra.mxu0 0
      %532 = vmatprep.subr.bf16.mxu0 0
      %533 = vmatpush1.bf16.msra.mxu0 0
      %534 = vmatprep.subr.bf16.mxu0 0
      %535 = vmatpush1.bf16.msra.mxu0 0
      %536 = vmatprep.subr.bf16.mxu0 0
      %537 = vmatpush1.bf16.msra.mxu0 0
      %538 = vmatprep.subr.bf16.mxu0 0
      %539 = vmatpush1.bf16.msra.mxu0 0
      %540 = vmatprep.subr.bf16.mxu0 0
      %541 = vmatpush1.bf16.msra.mxu0 0
      %542 = vmatprep.subr.bf16.mxu0 0
      %543 = vmatpush1.bf16.msra.mxu0 0
      %544 = vmatprep.subr.bf16.mxu0 0
      %545 = vmatpush1.bf16.msra.mxu0 0
      %546 = vmatprep.mubr.bf16.mxu0 0
      %547 = vmatmul.mubr.bf16.gmra.mrb[0].mxu0 %v333
      %v548 = vpop.f32.mrb[0].mxu0
      %v549 = vadd.f32 %v374, %v548
      %v550 = vpop.f32.mrb[0].mxu0
      %v551 = vadd.f32 %v378, %v550
      %v552 = vpop.f32.mrb[0].mxu0
      %v553 = vadd.f32 %v374, %v552
      %v554 = vpop.f32.mrb[0].mxu0
      %v555 = vadd.f32 %v378, %v554
      %556 = vmatprep.mubr.bf16.mxu0 0
      %557 = vmatmul.mubr.bf16.gmra.mrb[0].mxu0 %v334
      %v558 = vpop.f32.mrb[0].mxu0
      %v559 = vadd.f32 %v374, %v558
      %v560 = vpop.f32.mrb[0].mxu0
      %v561 = vadd.f32 %v378, %v560
      %v562 = vpop.f32.mrb[0].mxu0
      %v563 = vadd.f32 %v374, %v562
      %v564 = vpop.f32.mrb[0].mxu0
      %v565 = vadd.f32 %v378, %v564
      %566 = vmatprep.mubr.bf16.mxu0 0
      %567 = vmatmul.mubr.bf16.gmra.mrb[0].mxu0 %v335
      %v568 = vpop.f32.mrb[0].mxu0
      %v569 = vadd.f32 %v374, %v568
      %v570 = vpop.f32.mrb[0].mxu0
      %v571 = vadd.f32 %v378, %v570
      %v572 = vpop.f32.mrb[0].mxu0
      %v573 = vadd.f32 %v374, %v572
      %v574 = vpop.f32.mrb[0].mxu0
      %v575 = vadd.f32 %v378, %v574
      %576 = vmatprep.mubr.bf16.mxu0 0
      %577 = vmatmul.mubr.bf16.gmra.mrb[0].mxu0 %v336
      %v578 = vpop.f32.mrb[0].mxu0
      %v579 = vadd.f32 %v374, %v578
      %v580 = vpop.f32.mrb[0].mxu0
      %v581 = vadd.f32 %v378, %v580
      %v582 = vpop.f32.mrb[0].mxu0
      %v583 = vadd.f32 %v374, %v582
      %v584 = vpop.f32.mrb[0].mxu0
      %v585 = vadd.f32 %v378, %v584
      %586 = vdwg.mxu0
      %587 = vmatprep.subr.bf16.mxu0 0
      %588 = vmatpush1.bf16.msra.mxu0 %v468
      %589 = vmatprep.subr.bf16.mxu0 0
      %590 = vmatpush1.bf16.msra.mxu0 %v471
      %591 = vmatprep.subr.bf16.mxu0 0
      %592 = vmatpush1.bf16.msra.mxu0 %v474
      %593 = vmatprep.subr.bf16.mxu0 0
      %594 = vmatpush1.bf16.msra.mxu0 %v477
      %595 = vmatprep.subr.bf16.mxu0 0
      %596 = vmatpush1.bf16.msra.mxu0 %v480
      %597 = vmatprep.subr.bf16.mxu0 0
      %598 = vmatpush1.bf16.msra.mxu0 %v483
      %599 = vmatprep.subr.bf16.mxu0 0
      %600 = vmatpush1.bf16.msra.mxu0 %v486
      %601 = vmatprep.subr.bf16.mxu0 0
      %602 = vmatpush1.bf16.msra.mxu0 %v489
      %603 = vmatprep.subr.bf16.mxu0 0
      %604 = vmatpush1.bf16.msra.mxu0 0
      %605 = vmatprep.subr.bf16.mxu0 0
      %606 = vmatpush1.bf16.msra.mxu0 0
      %607 = vmatprep.subr.bf16.mxu0 0
      %608 = vmatpush1.bf16.msra.mxu0 0
      %609 = vmatprep.subr.bf16.mxu0 0
      %610 = vmatpush1.bf16.msra.mxu0 0
      %611 = vmatprep.subr.bf16.mxu0 0
      %612 = vmatpush1.bf16.msra.mxu0 0
      %613 = vmatprep.subr.bf16.mxu0 0
      %614 = vmatpush1.bf16.msra.mxu0 0
      %615 = vmatprep.subr.bf16.mxu0 0
      %616 = vmatpush1.bf16.msra.mxu0 0
      %617 = vmatprep.subr.bf16.mxu0 0
      %618 = vmatpush1.bf16.msra.mxu0 0
      %619 = vmatprep.mubr.bf16.mxu0 0
      %620 = vmatmul.mubr.bf16.gmra.mrb[0].mxu0 %v333
      %v621 = vpop.f32.mrb[0].mxu0
      %v622 = vadd.f32 %v382, %v621
      %v623 = vpop.f32.mrb[0].mxu0
      %v624 = vpop.f32.mrb[0].mxu0
      %v625 = vadd.f32 %v382, %v624
      %v626 = vpop.f32.mrb[0].mxu0
      %627 = vmatprep.mubr.bf16.mxu0 0
      %628 = vmatmul.mubr.bf16.gmra.mrb[0].mxu0 %v334
      %v629 = vpop.f32.mrb[0].mxu0
      %v630 = vadd.f32 %v382, %v629
      %v631 = vpop.f32.mrb[0].mxu0
      %v632 = vpop.f32.mrb[0].mxu0
      %v633 = vadd.f32 %v382, %v632
      %v634 = vpop.f32.mrb[0].mxu0
      %635 = vmatprep.mubr.bf16.mxu0 0
      %636 = vmatmul.mubr.bf16.gmra.mrb[0].mxu0 %v335
      %v637 = vpop.f32.mrb[0].mxu0
      %v638 = vadd.f32 %v382, %v637
      %v639 = vpop.f32.mrb[0].mxu0
      %v640 = vpop.f32.mrb[0].mxu0
      %v641 = vadd.f32 %v382, %v640
      %v642 = vpop.f32.mrb[0].mxu0
      %643 = vmatprep.mubr.bf16.mxu0 0
      %644 = vmatmul.mubr.bf16.gmra.mrb[0].mxu0 %v336
      %v645 = vpop.f32.mrb[0].mxu0
      %v646 = vadd.f32 %v382, %v645
      %v647 = vpop.f32.mrb[0].mxu0
      %v648 = vpop.f32.mrb[0].mxu0
      %v649 = vadd.f32 %v382, %v648
      %v650 = vpop.f32.mrb[0].mxu0
      %651 = vdwg.mxu0
      %v652 = vpack.c.bf16 %v553, %v549
      %v653 = vpack.c.bf16 %v555, %v551
      %v654 = vpack.c.bf16 %v625, %v622
      %v655 = vpack.c.bf16 %v563, %v559
      %v656 = vpack.c.bf16 %v565, %v561
      %v657 = vpack.c.bf16 %v633, %v630
      %v658 = vpack.c.bf16 %v573, %v569
      %v659 = vpack.c.bf16 %v575, %v571
      %v660 = vpack.c.bf16 %v641, %v638
      %v661 = vpack.c.bf16 %v583, %v579
      %v662 = vpack.c.bf16 %v585, %v581
      %v663 = vpack.c.bf16 %v649, %v646
      %v676 = vunpack.c.l.b16 %v652
      %v677 = vunpack.c.l.b16 %v653
      %v678 = vunpack.c.l.b16 %v654
      %v679 = vunpack.c.h.b16 %v652
      %v680 = vunpack.c.h.b16 %v653
      %v681 = vunpack.c.h.b16 %v654
      %v682 = vunpack.c.l.b16 %v655
      %v683 = vunpack.c.l.b16 %v656
      %v684 = vunpack.c.l.b16 %v657
      %v685 = vunpack.c.h.b16 %v655
      %v686 = vunpack.c.h.b16 %v656
      %v687 = vunpack.c.h.b16 %v657
      %v688 = vunpack.c.l.b16 %v658
      %v689 = vunpack.c.l.b16 %v659
      %v690 = vunpack.c.l.b16 %v660
      %v691 = vunpack.c.h.b16 %v658
      %v692 = vunpack.c.h.b16 %v659
      %v693 = vunpack.c.h.b16 %v660
      %v694 = vunpack.c.l.b16 %v661
      %v695 = vunpack.c.l.b16 %v662
      %v696 = vunpack.c.l.b16 %v663
      %v697 = vunpack.c.h.b16 %v661
      %v698 = vunpack.c.h.b16 %v662
      %v699 = vunpack.c.h.b16 %v663
      %v700 = vpack.c.b16 %v677, %v676
      %v701 = vpack.c.b16 %v678, %v678
      %v702 = vpack.c.b16 %v680, %v679
      %v703 = vpack.c.b16 %v681, %v681
      %v704 = vpack.c.b16 %v683, %v682
      %v705 = vpack.c.b16 %v684, %v684
      %v706 = vpack.c.b16 %v686, %v685
      %v707 = vpack.c.b16 %v687, %v687
      %v708 = vpack.c.b16 %v689, %v688
      %v709 = vpack.c.b16 %v690, %v690
      %v710 = vpack.c.b16 %v692, %v691
      %v711 = vpack.c.b16 %v693, %v693
      %v712 = vpack.c.b16 %v695, %v694
      %v713 = vpack.c.b16 %v696, %v696
      %v714 = vpack.c.b16 %v698, %v697
      %v715 = vpack.c.b16 %v699, %v699
      %732 = vst [vmem:[%s292] sm:$0xff] %v700
      %733 = vst [vmem:[%s292 + $0x8] sm:$0xf] %v701
      %734 = vst [vmem:[%s292 + $0xc] sm:$0xff] %v702
      %735 = vst [vmem:[%s292 + $0x14] sm:$0xf] %v703
      %736 = vst [vmem:[%s292 + $0x18] sm:$0xff] %v704
      %737 = vst [vmem:[%s292 + $0x20] sm:$0xf] %v705
      %738 = vst [vmem:[%s292 + $0x24] sm:$0xff] %v706
      %739 = vst [vmem:[%s292 + $0x2c] sm:$0xf] %v707
      %740 = vst [vmem:[%s292 + $0x30] sm:$0xff] %v708
      %741 = vst [vmem:[%s292 + $0x38] sm:$0xf] %v709
      %742 = vst [vmem:[%s292 + $0x3c] sm:$0xff] %v710
      %743 = vst [vmem:[%s292 + $0x44] sm:$0xf] %v711
      %744 = vst [vmem:[%s292 + $0x48] sm:$0xff] %v712
      %745 = vst [vmem:[%s292 + $0x50] sm:$0xf] %v713
      %746 = vst [vmem:[%s292 + $0x54] sm:$0xff] %v714
      %747 = vst [vmem:[%s292 + $0x5c] sm:$0xf] %v715
      %s748 = smul.u32 8, %s21
      %p749 = scmp.lt.s32.totalorder %s20, 1
      %s750 = scalar_select %p749, %s20, 1
      %p751 = scmp.lt.s32.totalorder %s748, 31
      %s752 = scalar_select %p751, %s748, 31
      %s753 = smul.addr %s752, 3
      %s754 = smul.addr %s750, 96
      %s755 = sadd.s32 %s753, %s754
      %s756 = smul.addr %s755, 4
      %s757 = scalar_lea.vmem %s5, %s756
      // Predicated region
      $region41: #{spatial_self_attention.4} parent=39 // pred_check
        %p758 = pneg %p170
      $region42: #{spatial_self_attention.4} parent=39 // pred_check_branch
        %760 = sbr.rel (%p758) target = $region44
      $region43: #{spatial_self_attention.4} parent=39 // pred_region
        %s761 = smul.u32 8, %s21
      $region44: #{spatial_self_attention.4} parent=39 // pred_fallthru
        _
    $region40: #{spatial_self_attention.4} parent=5 // pred_fallthru
      _
    %p762 = scmp.le.s32.totalorder 2, %s11
    // Predicated region
    $region45: #{spatial_self_attention.4} parent=5 // pred_check
      %p763 = pneg %p762
    $region46: #{spatial_self_attention.4} parent=5 // pred_check_branch
      %765 = sbr.rel (%p763) target = $region48
    $region47: #{spatial_self_attention.4} parent=5 // pred_region
      %s766 = ssub.s32 %s11, 2
      // Predicated region
      $region49: #{spatial_self_attention.4} parent=47 // pred_check
        %p767 = pneg %p176
      $region50: #{spatial_self_attention.4} parent=47 // pred_check_branch
        %769 = sbr.rel (%p767) target = $region52
      $region51: #{spatial_self_attention.4} parent=47 // pred_region
        %s770 = smul.u32 8, %s23
        %p771 = scmp.lt.s32.totalorder %s22, 1
        %s772 = scalar_select %p771, %s22, 1
        %p773 = scmp.lt.s32.totalorder %s770, 31
        %s774 = scalar_select %p773, %s770, 31
        %s775 = smul.addr %s774, 3
        %s776 = smul.addr %s772, 96
        %s777 = sadd.s32 %s775, %s776
        %s778 = smul.addr %s777, 4
        %s779 = scalar_lea.vmem %s5, %s778
      $region52: #{spatial_self_attention.4} parent=47 // pred_fallthru
        _
    $region48: #{spatial_self_attention.4} parent=5 // pred_fallthru
      _
  $region6: #{spatial_self_attention.4} parent=0 // loop_footer
    %s15 = sadd.s32 1, %s11
  $region7: #{spatial_self_attention.4} parent=0 // loop_footer_branch
    %10 = sbr.rel target = $region3
  $region8: #{spatial_self_attention.4} parent=0 // loop_exit
    _

// kernel: spatial_self_attention.5
$region0: #{spatial_self_attention.5}
  #allocation0 [shape = 'u32[]', space=smem, size = 0x4, offset = 0x4, fixed_abs, tag = 'smem constant byte address 0x4 - core index']
  #allocation1 [shape = 'u32[144,128]{1,0:T(1,128)}', space=vmem, size = 0x12000, scoped, tag = 'internal scratch']
  #allocation2 [shape = 'f32[128,1]{1,0:T(8,128)}', space=vmem, size = 0x10000, scoped, tag = 'scratch operand']
  #allocation3 [shape = 'f32[128,1]{1,0:T(8,128)}', space=vmem, size = 0x10000, scoped, tag = 'scratch operand']
  #allocation4 [shape = 'f32[128,128]{1,0:T(8,128)}', space=vmem, size = 0x10000, scoped, tag = 'scratch operand']
  %s0 = inlined_call_operand.vmem [shape: f32[2,256,128], index: 0, kind: input, shape index: {}, may-alias: {0,6}]
  %s1 = inlined_call_operand.vmem [shape: bf16[2,256,384], index: 1, kind: input, shape index: {}, may-alias: {1,2,3}]
  %s2 = inlined_call_operand.vmem [shape: bf16[2,256,384], index: 2, kind: input, shape index: {}, may-alias: {1,2,3}]
  %s3 = inlined_call_operand.vmem [shape: bf16[2,256,384], index: 3, kind: input, shape index: {}, may-alias: {1,2,3}]
  %s4 = inlined_call_operand.vmem [shape: bf16[128,128], index: 4, kind: input, shape index: {}]
  %s5 = inlined_call_operand.vmem [shape: f32[1,128], index: 5, kind: input, shape index: {}]
  %s6 = inlined_call_operand.vmem [shape: f32[2,256,128], index: 6, kind: output, shape index: {}, may-alias: {0,6}]
  %s7 = sld [smem:[#allocation0]]
  $region188: #{spatial_self_attention.5} parent=0
    _
  %s9 = ssub.s32 1, %s7
  %s10 = scalar_select 0, %s9, %s7
  $region1: #{spatial_self_attention.5} parent=0
    #allocation5 [shape = 'u8[65536]{0}', space=vmem, size = 0x10000, scoped, tag = 'input window, operand 1']
    #allocation6 [shape = 'u8[65536]{0}', space=vmem, size = 0x10000, scoped, tag = 'input window, operand 2']
    #allocation7 [shape = 'u8[65536]{0}', space=vmem, size = 0x10000, scoped, tag = 'input window, operand 3']
    loop: start=0, step=1, limit=10
    $region2: #{spatial_self_attention.5} parent=1 // loop_pre_header
      _
    $region3: #{spatial_self_attention.5} parent=1 // loop_header
      %s12 = sphi 0, %s16
      %p13 = scmp.ge.s32.totalorder %s12, 10
      %s19 = sphi 0, %s38
      %s20 = sphi 0, %s34
      %s21 = sphi 0, %s30
      %s22 = sphi 0, %s19
      %s23 = sphi 0, %s20
      %s24 = sphi 0, %s21
      %s25 = sphi 0, %s22
      %s26 = sphi 0, %s23
      %s27 = sphi 0, %s24
      %s43 = sphi 0, %s45
      %s46 = sphi 0, %s43
      %s47 = sphi 0, %s46
      %s63 = sphi 0, %s47
      %s71 = sphi 0, %s73
      %s74 = sphi 0, %s71
      %s75 = sphi 0, %s74
      %s91 = sphi 0, %s75
      %s99 = sphi 0, %s101
      %s102 = sphi 0, %s99
      %s103 = sphi 0, %s102
      %s119 = sphi 0, %s103
      %s127 = sphi 0, %s129
      %s130 = sphi 0, %s127
      %s131 = sphi 0, %s130
      %s147 = sphi 0, %s131
      %s151 = sphi 0, %s151
      %s153 = sphi 0, %s151
      %s154 = sphi 0, %s153
      %s168 = sphi 0, %s154
      %s172 = sphi 0, %s172
      %s174 = sphi 0, %s172
      %s175 = sphi 0, %s174
      %s189 = sphi 0, %s175
      %s197 = sphi 0, %s199
      %s200 = sphi 0, %s197
      %s201 = sphi 0, %s200
      %s217 = sphi 0, %s201
    $region4: #{spatial_self_attention.5} parent=1 // loop_header_branch
      %15 = sbr.rel (%p13) target = $region8
    $region5: #{spatial_self_attention.5} parent=1 // loop_body
      %s17 = ssub.s32 %s12, 1
      %s18 = ssub.s32 %s12, 2
      %s28 = sadd.s32 1, %s21
      %p29 = scmp.ge.s32.totalorder %s28, 2
      %s30 = scalar_select %p29, 0, %s28
      %s31 = sadd.s32 1, %s20
      %s32 = scalar_select %p29, %s31, %s20
      %p33 = scmp.ge.s32.totalorder %s32, 2
      %s34 = scalar_select %p33, 0, %s32
      %s35 = sadd.s32 1, %s19
      %s36 = scalar_select %p33, %s35, %s19
      %p37 = scmp.ge.s32.totalorder %s36, 2
      %s38 = scalar_select %p37, 0, %s36
      %s39 = ssub.s32 %s19, %s38
      %s40 = ssub.s32 %s20, %s34
      %s41 = sor.u32 %s39, %s40
      %p42 = scmp.eq.s32.totalorder %s41, 0
      %s44 = sadd.s32 %s43, 1
      %s45 = scalar_select %p42, %s43, %s44
      %p48 = pneg %p42
      %p49 = scmp.eq.s32.totalorder %s12, 7
      %p50 = por %p48, %p49
      %p51 = scmp.ne.s32.totalorder %s43, %s46
      %p52 = scmp.eq.s32.totalorder %s12, 0
      %p53 = por %p51, %p52
      %p54 = scmp.ne.s32.totalorder %s43, %s46
      %p55 = scmp.eq.s32.totalorder %s17, 7
      %p56 = por %p54, %p55
      %p57 = scmp.ne.s32.totalorder %s46, %s47
      %p58 = scmp.eq.s32.totalorder %s17, 0
      %p59 = por %p57, %p58
      %p60 = scmp.ne.s32.totalorder %s46, %s47
      %p61 = scmp.eq.s32.totalorder %s18, 7
      %p62 = por %p60, %p61
      %p64 = scmp.ne.s32.totalorder %s47, %s63
      %p65 = scmp.eq.s32.totalorder %s18, 0
      %p66 = por %p64, %p65
      %s67 = ssub.s32 %s19, %s38
      %s68 = ssub.s32 %s20, %s34
      %s69 = sor.u32 %s67, %s68
      %p70 = scmp.eq.s32.totalorder %s69, 0
      %s72 = sadd.s32 %s71, 1
      %s73 = scalar_select %p70, %s71, %s72
      %p76 = pneg %p70
      %p77 = scmp.eq.s32.totalorder %s12, 7
      %p78 = por %p76, %p77
      %p79 = scmp.ne.s32.totalorder %s71, %s74
      %p80 = scmp.eq.s32.totalorder %s12, 0
      %p81 = por %p79, %p80
      %p82 = scmp.ne.s32.totalorder %s71, %s74
      %p83 = scmp.eq.s32.totalorder %s17, 7
      %p84 = por %p82, %p83
      %p85 = scmp.ne.s32.totalorder %s74, %s75
      %p86 = scmp.eq.s32.totalorder %s17, 0
      %p87 = por %p85, %p86
      %p88 = scmp.ne.s32.totalorder %s74, %s75
      %p89 = scmp.eq.s32.totalorder %s18, 7
      %p90 = por %p88, %p89
      %p92 = scmp.ne.s32.totalorder %s75, %s91
      %p93 = scmp.eq.s32.totalorder %s18, 0
      %p94 = por %p92, %p93
      %s95 = ssub.s32 %s19, %s38
      %s96 = ssub.s32 %s21, %s30
      %s97 = sor.u32 %s95, %s96
      %p98 = scmp.eq.s32.totalorder %s97, 0
      %s100 = sadd.s32 %s99, 1
      %s101 = scalar_select %p98, %s99, %s100
      %p104 = pneg %p98
      %p105 = scmp.eq.s32.totalorder %s12, 7
      %p106 = por %p104, %p105
      %p107 = scmp.ne.s32.totalorder %s99, %s102
      %p108 = scmp.eq.s32.totalorder %s12, 0
      %p109 = por %p107, %p108
      %p110 = scmp.ne.s32.totalorder %s99, %s102
      %p111 = scmp.eq.s32.totalorder %s17, 7
      %p112 = por %p110, %p111
      %p113 = scmp.ne.s32.totalorder %s102, %s103
      %p114 = scmp.eq.s32.totalorder %s17, 0
      %p115 = por %p113, %p114
      %p116 = scmp.ne.s32.totalorder %s102, %s103
      %p117 = scmp.eq.s32.totalorder %s18, 7
      %p118 = por %p116, %p117
      %p120 = scmp.ne.s32.totalorder %s103, %s119
      %p121 = scmp.eq.s32.totalorder %s18, 0
      %p122 = por %p120, %p121
      %s123 = ssub.s32 %s19, %s38
      %s124 = ssub.s32 %s21, %s30
      %s125 = sor.u32 %s123, %s124
      %p126 = scmp.eq.s32.totalorder %s125, 0
      %s128 = sadd.s32 %s127, 1
      %s129 = scalar_select %p126, %s127, %s128
      %p132 = pneg %p126
      %p133 = scmp.eq.s32.totalorder %s12, 7
      %p134 = por %p132, %p133
      %p135 = scmp.ne.s32.totalorder %s127, %s130
      %p136 = scmp.eq.s32.totalorder %s12, 0
      %p137 = por %p135, %p136
      %p138 = scmp.ne.s32.totalorder %s127, %s130
      %p139 = scmp.eq.s32.totalorder %s17, 7
      %p140 = por %p138, %p139
      %p141 = scmp.ne.s32.totalorder %s130, %s131
      %p142 = scmp.eq.s32.totalorder %s17, 0
      %p143 = por %p141, %p142
      %p144 = scmp.ne.s32.totalorder %s130, %s131
      %p145 = scmp.eq.s32.totalorder %s18, 7
      %p146 = por %p144, %p145
      %p148 = scmp.ne.s32.totalorder %s131, %s147
      %p149 = scmp.eq.s32.totalorder %s18, 0
      %p150 = por %p148, %p149
      %s152 = sadd.s32 %s151, 1
      %p155 = scmp.eq.s32.totalorder %s12, 7
      %p156 = scmp.ne.s32.totalorder %s151, %s153
      %p157 = scmp.eq.s32.totalorder %s12, 0
      %p158 = por %p156, %p157
      %p159 = scmp.ne.s32.totalorder %s151, %s153
      %p160 = scmp.eq.s32.totalorder %s17, 7
      %p161 = por %p159, %p160
      %p162 = scmp.ne.s32.totalorder %s153, %s154
      %p163 = scmp.eq.s32.totalorder %s17, 0
      %p164 = por %p162, %p163
      %p165 = scmp.ne.s32.totalorder %s153, %s154
      %p166 = scmp.eq.s32.totalorder %s18, 7
      %p167 = por %p165, %p166
      %p169 = scmp.ne.s32.totalorder %s154, %s168
      %p170 = scmp.eq.s32.totalorder %s18, 0
      %p171 = por %p169, %p170
      %s173 = sadd.s32 %s172, 1
      %p176 = scmp.eq.s32.totalorder %s12, 7
      %p177 = scmp.ne.s32.totalorder %s172, %s174
      %p178 = scmp.eq.s32.totalorder %s12, 0
      %p179 = por %p177, %p178
      %p180 = scmp.ne.s32.totalorder %s172, %s174
      %p181 = scmp.eq.s32.totalorder %s17, 7
      %p182 = por %p180, %p181
      %p183 = scmp.ne.s32.totalorder %s174, %s175
      %p184 = scmp.eq.s32.totalorder %s17, 0
      %p185 = por %p183, %p184
      %p186 = scmp.ne.s32.totalorder %s174, %s175
      %p187 = scmp.eq.s32.totalorder %s18, 7
      %p188 = por %p186, %p187
      %p190 = scmp.ne.s32.totalorder %s175, %s189
      %p191 = scmp.eq.s32.totalorder %s18, 0
      %p192 = por %p190, %p191
      %s193 = ssub.s32 %s19, %s38
      %s194 = ssub.s32 %s20, %s34
      %s195 = sor.u32 %s193, %s194
      %p196 = scmp.eq.s32.totalorder %s195, 0
      %s198 = sadd.s32 %s197, 1
      %s199 = scalar_select %p196, %s197, %s198
      %p202 = pneg %p196
      %p203 = scmp.eq.s32.totalorder %s12, 7
      %p204 = por %p202, %p203
      %p205 = scmp.ne.s32.totalorder %s197, %s200
      %p206 = scmp.eq.s32.totalorder %s12, 0
      %p207 = por %p205, %p206
      %p208 = scmp.ne.s32.totalorder %s197, %s200
      %p209 = scmp.eq.s32.totalorder %s17, 7
      %p210 = por %p208, %p209
      %p211 = scmp.ne.s32.totalorder %s200, %s201
      %p212 = scmp.eq.s32.totalorder %s17, 0
      %p213 = por %p211, %p212
      %p214 = scmp.ne.s32.totalorder %s200, %s201
      %p215 = scmp.eq.s32.totalorder %s18, 7
      %p216 = por %p214, %p215
      %p218 = scmp.ne.s32.totalorder %s201, %s217
      %p219 = scmp.eq.s32.totalorder %s18, 0
      %p220 = por %p218, %p219
      %p221 = scmp.le.s32.totalorder 1, %s12
      %p222 = scmp.lt.s32.totalorder %s12, 9
      %p223 = pnand %p221, %p222
      %p224 = pneg %p223
      // Predicated region
      $region9: #{spatial_self_attention.5} parent=5 // pred_check
        _
      $region10: #{spatial_self_attention.5} parent=5 // pred_check_branch
        %226 = sbr.rel (%p223) target = $region12
      $region11: #{spatial_self_attention.5} parent=5 // pred_region
        %s227 = ssub.s32 %s12, 1
        // Predicated region
        $region13: #{spatial_self_attention.5} parent=11 // pred_check
          %p228 = pneg %p164
        $region14: #{spatial_self_attention.5} parent=11 // pred_check_branch
          %230 = sbr.rel (%p228) target = $region16
        $region15: #{spatial_self_attention.5} parent=11 // pred_region
          _
        $region16: #{spatial_self_attention.5} parent=11 // pred_fallthru
          _
        // Predicated region
        $region17: #{spatial_self_attention.5} parent=11 // pred_check
          %p231 = pneg %p185
        $region18: #{spatial_self_attention.5} parent=11 // pred_check_branch
          %233 = sbr.rel (%p231) target = $region20
        $region19: #{spatial_self_attention.5} parent=11 // pred_region
          _
        $region20: #{spatial_self_attention.5} parent=11 // pred_fallthru
          _
      $region12: #{spatial_self_attention.5} parent=5 // pred_fallthru
        _
      %p234 = scmp.lt.s32.totalorder %s12, 8
      // Predicated region
      $region21: #{spatial_self_attention.5} parent=5 // pred_check
        %p235 = pneg %p234
      $region22: #{spatial_self_attention.5} parent=5 // pred_check_branch
        %237 = sbr.rel (%p235) target = $region24
      $region23: #{spatial_self_attention.5} parent=5 // pred_region
        // Predicated region
        $region25: #{spatial_self_attention.5} parent=23 // pred_check
          %p238 = pneg %p53
        $region26: #{spatial_self_attention.5} parent=23 // pred_check_branch
          %240 = sbr.rel (%p238) target = $region28
        $region27: #{spatial_self_attention.5} parent=23 // pred_region
          %s241 = smul.u32 16, %s20
          %p242 = scmp.lt.s32.totalorder %s19, 1
          %s243 = scalar_select %p242, %s19, 1
          %p244 = scmp.lt.s32.totalorder %s241, 31
          %s245 = scalar_select %p244, %s241, 31
          %s246 = smul.addr %s243, 32
          %s247 = sadd.s32 %s245, %s246
          %s248 = smul.addr %s247, 8
          %s249 = scalar_lea.vmem %s0, %s248
          %s250 = smul.u32 16, %s20
        $region28: #{spatial_self_attention.5} parent=23 // pred_fallthru
          _
        // Predicated region
        $region29: #{spatial_self_attention.5} parent=23 // pred_check
          %p251 = pneg %p81
        $region30: #{spatial_self_attention.5} parent=23 // pred_check_branch
          %253 = sbr.rel (%p251) target = $region32
        $region31: #{spatial_self_attention.5} parent=23 // pred_region
          %s254 = sand.u32 %s71, 1
          %s255 = sand.u32 %s71, 1
          %s256 = smul.addr %s255, 64
          %s257 = scalar_lea.vmem [#allocation5], %s256
          %s258 = smul.u32 16, %s20
          %s259 = smul.addr %s258, 3
          %s260 = smul.addr %s19, 96
          %s261 = sadd.s32 %s259, %s260
          %s262 = smul.addr %s261, 4
          %s263 = scalar_lea.vmem %s1, %s262
          // Predicated region
          $region33: #{spatial_self_attention.5} parent=31 // pred_check
            _
          $region34: #{spatial_self_attention.5} parent=31 // pred_check_branch
            %265 = sbr.rel (0) target = $region36
          $region35: #{spatial_self_attention.5} parent=31 // pred_region
            // Predicated region
            $region37: #{spatial_self_attention.5} parent=35 // pred_check
              _
            $region38: #{spatial_self_attention.5} parent=35 // pred_check_branch
              %267 = sbr.rel target = $region40
            $region39: #{spatial_self_attention.5} parent=35 // pred_region
              // Predicated region
              $region52: #{spatial_self_attention.5} parent=39 // pred_check
                _
              $region53: #{spatial_self_attention.5} parent=39 // pred_check_branch
                %312 = sbr.rel (0) target = $region55
              $region54: #{spatial_self_attention.5} parent=39 // pred_region
                loop: start=0, step=1, limit=1
                $region56: #{spatial_self_attention.5} parent=54 // loop_pre_header
                  _
                $region57: #{spatial_self_attention.5} parent=54 // loop_header
                  %s314 = sphi 0, %s318
                  %p315 = scmp.ge.s32.totalorder %s314, 1
                  %s319 = sphi %s263, %s263
                  %s320 = sphi %s257, %s257
                $region58: #{spatial_self_attention.5} parent=54 // loop_header_branch
                  %317 = sbr.rel (%p315) target = $region62
                $region59: #{spatial_self_attention.5} parent=54 // loop_body
                  _
                $region60: #{spatial_self_attention.5} parent=54 // loop_footer
                  %s318 = sadd.s32 1, %s314
                $region61: #{spatial_self_attention.5} parent=54 // loop_footer_branch
                  %313 = sbr.rel target = $region57
                $region62: #{spatial_self_attention.5} parent=54 // loop_exit
                  _
                loop: start=0, step=1, limit=1
                $region63: #{spatial_self_attention.5} parent=54 // loop_pre_header
                  _
                $region64: #{spatial_self_attention.5} parent=54 // loop_header
                  %s323 = sphi 0, %s327
                  %p324 = scmp.ge.s32.totalorder %s323, 1
                  %s328 = sphi %s263, %s263
                  %s329 = sphi %s257, %s257
                $region65: #{spatial_self_attention.5} parent=54 // loop_header_branch
                  %326 = sbr.rel (%p324) target = $region69
                $region66: #{spatial_self_attention.5} parent=54 // loop_body
                  %v330 = vld [vmem:[%s328] sm:$0xf]
                  %331 = vst [vmem:[%s329] sm:$0xf] %v330
                  %v332 = vld [vmem:[%s328 + $0xc] sm:$0xf]
                  %333 = vst [vmem:[%s329 + $0x4] sm:$0xf] %v332
                  %v334 = vld [vmem:[%s328 + $0x18] sm:$0xf]
                  %335 = vst [vmem:[%s329 + $0x8] sm:$0xf] %v334
                  %v336 = vld [vmem:[%s328 + $0x24] sm:$0xf]
                  %337 = vst [vmem:[%s329 + $0xc] sm:$0xf] %v336
                  %v338 = vld [vmem:[%s328 + $0x30] sm:$0xf]
                  %339 = vst [vmem:[%s329 + $0x10] sm:$0xf] %v338
                  %v340 = vld [vmem:[%s328 + $0x3c] sm:$0xf]
                  %341 = vst [vmem:[%s329 + $0x14] sm:$0xf] %v340
                  %v342 = vld [vmem:[%s328 + $0x48] sm:$0xf]
                  %343 = vst [vmem:[%s329 + $0x18] sm:$0xf] %v342
                  %v344 = vld [vmem:[%s328 + $0x54] sm:$0xf]
                  %345 = vst [vmem:[%s329 + $0x1c] sm:$0xf] %v344
                  %v346 = vld [vmem:[%s328 + $0x60] sm:$0xf]
                  %347 = vst [vmem:[%s329 + $0x20] sm:$0xf] %v346
                  %v348 = vld [vmem:[%s328 + $0x6c] sm:$0xf]
                  %349 = vst [vmem:[%s329 + $0x24] sm:$0xf] %v348
                  %v350 = vld [vmem:[%s328 + $0x78] sm:$0xf]
                  %351 = vst [vmem:[%s329 + $0x28] sm:$0xf] %v350
                  %v352 = vld [vmem:[%s328 + $0x84] sm:$0xf]
                  %353 = vst [vmem:[%s329 + $0x2c] sm:$0xf] %v352
                  %v354 = vld [vmem:[%s328 + $0x90] sm:$0xf]
                  %355 = vst [vmem:[%s329 + $0x30] sm:$0xf] %v354
                  %v356 = vld [vmem:[%s328 + $0x9c] sm:$0xf]
                  %357 = vst [vmem:[%s329 + $0x34] sm:$0xf] %v356
                  %v358 = vld [vmem:[%s328 + $0xa8] sm:$0xf]
                  %359 = vst [vmem:[%s329 + $0x38] sm:$0xf] %v358
                  %v360 = vld [vmem:[%s328 + $0xb4] sm:$0xf]
                  %361 = vst [vmem:[%s329 + $0x3c] sm:$0xf] %v360
                $region67: #{spatial_self_attention.5} parent=54 // loop_footer
                  %s327 = sadd.s32 1, %s323
                $region68: #{spatial_self_attention.5} parent=54 // loop_footer_branch
                  %322 = sbr.rel target = $region64
                $region69: #{spatial_self_attention.5} parent=54 // loop_exit
                  _
              $region55: #{spatial_self_attention.5} parent=39 // pred_fallthru
                _
            $region40: #{spatial_self_attention.5} parent=35 // pred_fallthru
              _
            // Predicated region
            $region41: #{spatial_self_attention.5} parent=35 // pred_check
              _
            $region42: #{spatial_self_attention.5} parent=35 // pred_check_branch
              %269 = sbr.rel (0) target = $region44
            $region43: #{spatial_self_attention.5} parent=35 // pred_region
              loop: start=0, step=1, limit=1
              $region45: #{spatial_self_attention.5} parent=43 // loop_pre_header
                _
              $region46: #{spatial_self_attention.5} parent=43 // loop_header
                %s272 = sphi 0, %s276
                %p273 = scmp.ge.s32.totalorder %s272, 1
                %s277 = sphi %s263, %s263
                %s278 = sphi %s257, %s257
              $region47: #{spatial_self_attention.5} parent=43 // loop_header_branch
                %275 = sbr.rel (%p273) target = $region51
              $region48: #{spatial_self_attention.5} parent=43 // loop_body
                %v279 = vld [vmem:[%s277] sm:$0xf]
                %280 = vst [vmem:[%s278] sm:$0xf] %v279
                %v281 = vld [vmem:[%s277 + $0xc] sm:$0xf]
                %282 = vst [vmem:[%s278 + $0x4] sm:$0xf] %v281
                %v283 = vld [vmem:[%s277 + $0x18] sm:$0xf]
                %284 = vst [vmem:[%s278 + $0x8] sm:$0xf] %v283
                %v285 = vld [vmem:[%s277 + $0x24] sm:$0xf]
                %286 = vst [vmem:[%s278 + $0xc] sm:$0xf] %v285
                %v287 = vld [vmem:[%s277 + $0x30] sm:$0xf]
                %288 = vst [vmem:[%s278 + $0x10] sm:$0xf] %v287
                %v289 = vld [vmem:[%s277 + $0x3c] sm:$0xf]
                %290 = vst [vmem:[%s278 + $0x14] sm:$0xf] %v289
                %v291 = vld [vmem:[%s277 + $0x48] sm:$0xf]
                %292 = vst [vmem:[%s278 + $0x18] sm:$0xf] %v291
                %v293 = vld [vmem:[%s277 + $0x54] sm:$0xf]
                %294 = vst [vmem:[%s278 + $0x1c] sm:$0xf] %v293
                %v295 = vld [vmem:[%s277 + $0x60] sm:$0xf]
                %296 = vst [vmem:[%s278 + $0x20] sm:$0xf] %v295
                %v297 = vld [vmem:[%s277 + $0x6c] sm:$0xf]
                %298 = vst [vmem:[%s278 + $0x24] sm:$0xf] %v297
                %v299 = vld [vmem:[%s277 + $0x78] sm:$0xf]
                %300 = vst [vmem:[%s278 + $0x28] sm:$0xf] %v299
                %v301 = vld [vmem:[%s277 + $0x84] sm:$0xf]
                %302 = vst [vmem:[%s278 + $0x2c] sm:$0xf] %v301
                %v303 = vld [vmem:[%s277 + $0x90] sm:$0xf]
                %304 = vst [vmem:[%s278 + $0x30] sm:$0xf] %v303
                %v305 = vld [vmem:[%s277 + $0x9c] sm:$0xf]
                %306 = vst [vmem:[%s278 + $0x34] sm:$0xf] %v305
                %v307 = vld [vmem:[%s277 + $0xa8] sm:$0xf]
                %308 = vst [vmem:[%s278 + $0x38] sm:$0xf] %v307
                %v309 = vld [vmem:[%s277 + $0xb4] sm:$0xf]
                %310 = vst [vmem:[%s278 + $0x3c] sm:$0xf] %v309
              $region49: #{spatial_self_attention.5} parent=43 // loop_footer
                %s276 = sadd.s32 1, %s272
              $region50: #{spatial_self_attention.5} parent=43 // loop_footer_branch
                %271 = sbr.rel target = $region46
              $region51: #{spatial_self_attention.5} parent=43 // loop_exit
                _
            $region44: #{spatial_self_attention.5} parent=35 // pred_fallthru
              _
          $region36: #{spatial_self_attention.5} parent=31 // pred_fallthru
            _
          %362 = vnop
        $region32: #{spatial_self_attention.5} parent=23 // pred_fallthru
          _
        // Predicated region
        $region70: #{spatial_self_attention.5} parent=23 // pred_check
          %p363 = pneg %p109
        $region71: #{spatial_self_attention.5} parent=23 // pred_check_branch
          %365 = sbr.rel (%p363) target = $region73
        $region72: #{spatial_self_attention.5} parent=23 // pred_region
          %s366 = sand.u32 %s99, 1
          %s367 = sand.u32 %s99, 1
          %s368 = smul.addr %s367, 64
          %s369 = scalar_lea.vmem [#allocation6], %s368
          %s370 = smul.u32 16, %s21
          %s371 = smul.addr %s370, 3
          %s372 = sadd.s32 1, %s371
          %s373 = smul.addr %s19, 96
          %s374 = sadd.s32 %s372, %s373
          %s375 = smul.addr %s374, 4
          %s376 = scalar_lea.vmem %s2, %s375
          // Predicated region
          $region74: #{spatial_self_attention.5} parent=72 // pred_check
            _
          $region75: #{spatial_self_attention.5} parent=72 // pred_check_branch
            %378 = sbr.rel (0) target = $region77
          $region76: #{spatial_self_attention.5} parent=72 // pred_region
            // Predicated region
            $region78: #{spatial_self_attention.5} parent=76 // pred_check
              _
            $region79: #{spatial_self_attention.5} parent=76 // pred_check_branch
              %380 = sbr.rel target = $region81
            $region80: #{spatial_self_attention.5} parent=76 // pred_region
              // Predicated region
              $region93: #{spatial_self_attention.5} parent=80 // pred_check
                _
              $region94: #{spatial_self_attention.5} parent=80 // pred_check_branch
                %425 = sbr.rel (0) target = $region96
              $region95: #{spatial_self_attention.5} parent=80 // pred_region
                loop: start=0, step=1, limit=1
                $region97: #{spatial_self_attention.5} parent=95 // loop_pre_header
                  _
                $region98: #{spatial_self_attention.5} parent=95 // loop_header
                  %s427 = sphi 0, %s431
                  %p428 = scmp.ge.s32.totalorder %s427, 1
                  %s432 = sphi %s376, %s376
                  %s433 = sphi %s369, %s369
                $region99: #{spatial_self_attention.5} parent=95 // loop_header_branch
                  %430 = sbr.rel (%p428) target = $region103
                $region100: #{spatial_self_attention.5} parent=95 // loop_body
                  _
                $region101: #{spatial_self_attention.5} parent=95 // loop_footer
                  %s431 = sadd.s32 1, %s427
                $region102: #{spatial_self_attention.5} parent=95 // loop_footer_branch
                  %426 = sbr.rel target = $region98
                $region103: #{spatial_self_attention.5} parent=95 // loop_exit
                  _
                loop: start=0, step=1, limit=1
                $region104: #{spatial_self_attention.5} parent=95 // loop_pre_header
                  _
                $region105: #{spatial_self_attention.5} parent=95 // loop_header
                  %s436 = sphi 0, %s440
                  %p437 = scmp.ge.s32.totalorder %s436, 1
                  %s441 = sphi %s376, %s376
                  %s442 = sphi %s369, %s369
                $region106: #{spatial_self_attention.5} parent=95 // loop_header_branch
                  %439 = sbr.rel (%p437) target = $region110
                $region107: #{spatial_self_attention.5} parent=95 // loop_body
                  %v443 = vld [vmem:[%s441] sm:$0xf]
                  %444 = vst [vmem:[%s442] sm:$0xf] %v443
                  %v445 = vld [vmem:[%s441 + $0xc] sm:$0xf]
                  %446 = vst [vmem:[%s442 + $0x4] sm:$0xf] %v445
                  %v447 = vld [vmem:[%s441 + $0x18] sm:$0xf]
                  %448 = vst [vmem:[%s442 + $0x8] sm:$0xf] %v447
                  %v449 = vld [vmem:[%s441 + $0x24] sm:$0xf]
                  %450 = vst [vmem:[%s442 + $0xc] sm:$0xf] %v449
                  %v451 = vld [vmem:[%s441 + $0x30] sm:$0xf]
                  %452 = vst [vmem:[%s442 + $0x10] sm:$0xf] %v451
                  %v453 = vld [vmem:[%s441 + $0x3c] sm:$0xf]
                  %454 = vst [vmem:[%s442 + $0x14] sm:$0xf] %v453
                  %v455 = vld [vmem:[%s441 + $0x48] sm:$0xf]
                  %456 = vst [vmem:[%s442 + $0x18] sm:$0xf] %v455
                  %v457 = vld [vmem:[%s441 + $0x54] sm:$0xf]
                  %458 = vst [vmem:[%s442 + $0x1c] sm:$0xf] %v457
                  %v459 = vld [vmem:[%s441 + $0x60] sm:$0xf]
                  %460 = vst [vmem:[%s442 + $0x20] sm:$0xf] %v459
                  %v461 = vld [vmem:[%s441 + $0x6c] sm:$0xf]
                  %462 = vst [vmem:[%s442 + $0x24] sm:$0xf] %v461
                  %v463 = vld [vmem:[%s441 + $0x78] sm:$0xf]
                  %464 = vst [vmem:[%s442 + $0x28] sm:$0xf] %v463
                  %v465 = vld [vmem:[%s441 + $0x84] sm:$0xf]
                  %466 = vst [vmem:[%s442 + $0x2c] sm:$0xf] %v465
                  %v467 = vld [vmem:[%s441 + $0x90] sm:$0xf]
                  %468 = vst [vmem:[%s442 + $0x30] sm:$0xf] %v467
                  %v469 = vld [vmem:[%s441 + $0x9c] sm:$0xf]
                  %470 = vst [vmem:[%s442 + $0x34] sm:$0xf] %v469
                  %v471 = vld [vmem:[%s441 + $0xa8] sm:$0xf]
                  %472 = vst [vmem:[%s442 + $0x38] sm:$0xf] %v471
                  %v473 = vld [vmem:[%s441 + $0xb4] sm:$0xf]
                  %474 = vst [vmem:[%s442 + $0x3c] sm:$0xf] %v473
                $region108: #{spatial_self_attention.5} parent=95 // loop_footer
                  %s440 = sadd.s32 1, %s436
                $region109: #{spatial_self_attention.5} parent=95 // loop_footer_branch
                  %435 = sbr.rel target = $region105
                $region110: #{spatial_self_attention.5} parent=95 // loop_exit
                  _
              $region96: #{spatial_self_attention.5} parent=80 // pred_fallthru
                _
            $region81: #{spatial_self_attention.5} parent=76 // pred_fallthru
              _
            // Predicated region
            $region82: #{spatial_self_attention.5} parent=76 // pred_check
              _
            $region83: #{spatial_self_attention.5} parent=76 // pred_check_branch
              %382 = sbr.rel (0) target = $region85
            $region84: #{spatial_self_attention.5} parent=76 // pred_region
              loop: start=0, step=1, limit=1
              $region86: #{spatial_self_attention.5} parent=84 // loop_pre_header
                _
              $region87: #{spatial_self_attention.5} parent=84 // loop_header
                %s385 = sphi 0, %s389
                %p386 = scmp.ge.s32.totalorder %s385, 1
                %s390 = sphi %s376, %s376
                %s391 = sphi %s369, %s369
              $region88: #{spatial_self_attention.5} parent=84 // loop_header_branch
                %388 = sbr.rel (%p386) target = $region92
              $region89: #{spatial_self_attention.5} parent=84 // loop_body
                %v392 = vld [vmem:[%s390] sm:$0xf]
                %393 = vst [vmem:[%s391] sm:$0xf] %v392
                %v394 = vld [vmem:[%s390 + $0xc] sm:$0xf]
                %395 = vst [vmem:[%s391 + $0x4] sm:$0xf] %v394
                %v396 = vld [vmem:[%s390 + $0x18] sm:$0xf]
                %397 = vst [vmem:[%s391 + $0x8] sm:$0xf] %v396
                %v398 = vld [vmem:[%s390 + $0x24] sm:$0xf]
                %399 = vst [vmem:[%s391 + $0xc] sm:$0xf] %v398
                %v400 = vld [vmem:[%s390 + $0x30] sm:$0xf]
                %401 = vst [vmem:[%s391 + $0x10] sm:$0xf] %v400
                %v402 = vld [vmem:[%s390 + $0x3c] sm:$0xf]
                %403 = vst [vmem:[%s391 + $0x14] sm:$0xf] %v402
                %v404 = vld [vmem:[%s390 + $0x48] sm:$0xf]
                %405 = vst [vmem:[%s391 + $0x18] sm:$0xf] %v404
                %v406 = vld [vmem:[%s390 + $0x54] sm:$0xf]
                %407 = vst [vmem:[%s391 + $0x1c] sm:$0xf] %v406
                %v408 = vld [vmem:[%s390 + $0x60] sm:$0xf]
                %409 = vst [vmem:[%s391 + $0x20] sm:$0xf] %v408
                %v410 = vld [vmem:[%s390 + $0x6c] sm:$0xf]
                %411 = vst [vmem:[%s391 + $0x24] sm:$0xf] %v410
                %v412 = vld [vmem:[%s390 + $0x78] sm:$0xf]
                %413 = vst [vmem:[%s391 + $0x28] sm:$0xf] %v412
                %v414 = vld [vmem:[%s390 + $0x84] sm:$0xf]
                %415 = vst [vmem:[%s391 + $0x2c] sm:$0xf] %v414
                %v416 = vld [vmem:[%s390 + $0x90] sm:$0xf]
                %417 = vst [vmem:[%s391 + $0x30] sm:$0xf] %v416
                %v418 = vld [vmem:[%s390 + $0x9c] sm:$0xf]
                %419 = vst [vmem:[%s391 + $0x34] sm:$0xf] %v418
                %v420 = vld [vmem:[%s390 + $0xa8] sm:$0xf]
                %421 = vst [vmem:[%s391 + $0x38] sm:$0xf] %v420
                %v422 = vld [vmem:[%s390 + $0xb4] sm:$0xf]
                %423 = vst [vmem:[%s391 + $0x3c] sm:$0xf] %v422
              $region90: #{spatial_self_attention.5} parent=84 // loop_footer
                %s389 = sadd.s32 1, %s385
              $region91: #{spatial_self_attention.5} parent=84 // loop_footer_branch
                %384 = sbr.rel target = $region87
              $region92: #{spatial_self_attention.5} parent=84 // loop_exit
                _
            $region85: #{spatial_self_attention.5} parent=76 // pred_fallthru
              _
          $region77: #{spatial_self_attention.5} parent=72 // pred_fallthru
            _
          %475 = vnop
        $region73: #{spatial_self_attention.5} parent=23 // pred_fallthru
          _
        // Predicated region
        $region111: #{spatial_self_attention.5} parent=23 // pred_check
          %p476 = pneg %p137
        $region112: #{spatial_self_attention.5} parent=23 // pred_check_branch
          %478 = sbr.rel (%p476) target = $region114
        $region113: #{spatial_self_attention.5} parent=23 // pred_region
          %s479 = sand.u32 %s127, 1
          %s480 = sand.u32 %s127, 1
          %s481 = smul.addr %s480, 64
          %s482 = scalar_lea.vmem [#allocation7], %s481
          %s483 = smul.u32 16, %s21
          %s484 = smul.addr %s483, 3
          %s485 = sadd.s32 2, %s484
          %s486 = smul.addr %s19, 96
          %s487 = sadd.s32 %s485, %s486
          %s488 = smul.addr %s487, 4
          %s489 = scalar_lea.vmem %s3, %s488
          // Predicated region
          $region115: #{spatial_self_attention.5} parent=113 // pred_check
            _
          $region116: #{spatial_self_attention.5} parent=113 // pred_check_branch
            %491 = sbr.rel (0) target = $region118
          $region117: #{spatial_self_attention.5} parent=113 // pred_region
            // Predicated region
            $region119: #{spatial_self_attention.5} parent=117 // pred_check
              _
            $region120: #{spatial_self_attention.5} parent=117 // pred_check_branch
              %493 = sbr.rel target = $region122
            $region121: #{spatial_self_attention.5} parent=117 // pred_region
              // Predicated region
              $region134: #{spatial_self_attention.5} parent=121 // pred_check
                _
              $region135: #{spatial_self_attention.5} parent=121 // pred_check_branch
                %538 = sbr.rel (0) target = $region137
              $region136: #{spatial_self_attention.5} parent=121 // pred_region
                loop: start=0, step=1, limit=1
                $region138: #{spatial_self_attention.5} parent=136 // loop_pre_header
                  _
                $region139: #{spatial_self_attention.5} parent=136 // loop_header
                  %s540 = sphi 0, %s544
                  %p541 = scmp.ge.s32.totalorder %s540, 1
                  %s545 = sphi %s489, %s489
                  %s546 = sphi %s482, %s482
                $region140: #{spatial_self_attention.5} parent=136 // loop_header_branch
                  %543 = sbr.rel (%p541) target = $region144
                $region141: #{spatial_self_attention.5} parent=136 // loop_body
                  _
                $region142: #{spatial_self_attention.5} parent=136 // loop_footer
                  %s544 = sadd.s32 1, %s540
                $region143: #{spatial_self_attention.5} parent=136 // loop_footer_branch
                  %539 = sbr.rel target = $region139
                $region144: #{spatial_self_attention.5} parent=136 // loop_exit
                  _
                loop: start=0, step=1, limit=1
                $region145: #{spatial_self_attention.5} parent=136 // loop_pre_header
                  _
                $region146: #{spatial_self_attention.5} parent=136 // loop_header
                  %s549 = sphi 0, %s553
                  %p550 = scmp.ge.s32.totalorder %s549, 1
                  %s554 = sphi %s489, %s489
                  %s555 = sphi %s482, %s482
                $region147: #{spatial_self_attention.5} parent=136 // loop_header_branch
                  %552 = sbr.rel (%p550) target = $region151
                $region148: #{spatial_self_attention.5} parent=136 // loop_body
                  %v556 = vld [vmem:[%s554] sm:$0xf]
                  %557 = vst [vmem:[%s555] sm:$0xf] %v556
                  %v558 = vld [vmem:[%s554 + $0xc] sm:$0xf]
                  %559 = vst [vmem:[%s555 + $0x4] sm:$0xf] %v558
                  %v560 = vld [vmem:[%s554 + $0x18] sm:$0xf]
                  %561 = vst [vmem:[%s555 + $0x8] sm:$0xf] %v560
                  %v562 = vld [vmem:[%s554 + $0x24] sm:$0xf]
                  %563 = vst [vmem:[%s555 + $0xc] sm:$0xf] %v562
                  %v564 = vld [vmem:[%s554 + $0x30] sm:$0xf]
                  %565 = vst [vmem:[%s555 + $0x10] sm:$0xf] %v564
                  %v566 = vld [vmem:[%s554 + $0x3c] sm:$0xf]
                  %567 = vst [vmem:[%s555 + $0x14] sm:$0xf] %v566
                  %v568 = vld [vmem:[%s554 + $0x48] sm:$0xf]
                  %569 = vst [vmem:[%s555 + $0x18] sm:$0xf] %v568
                  %v570 = vld [vmem:[%s554 + $0x54] sm:$0xf]
                  %571 = vst [vmem:[%s555 + $0x1c] sm:$0xf] %v570
                  %v572 = vld [vmem:[%s554 + $0x60] sm:$0xf]
                  %573 = vst [vmem:[%s555 + $0x20] sm:$0xf] %v572
                  %v574 = vld [vmem:[%s554 + $0x6c] sm:$0xf]
                  %575 = vst [vmem:[%s555 + $0x24] sm:$0xf] %v574
                  %v576 = vld [vmem:[%s554 + $0x78] sm:$0xf]
                  %577 = vst [vmem:[%s555 + $0x28] sm:$0xf] %v576
                  %v578 = vld [vmem:[%s554 + $0x84] sm:$0xf]
                  %579 = vst [vmem:[%s555 + $0x2c] sm:$0xf] %v578
                  %v580 = vld [vmem:[%s554 + $0x90] sm:$0xf]
                  %581 = vst [vmem:[%s555 + $0x30] sm:$0xf] %v580
                  %v582 = vld [vmem:[%s554 + $0x9c] sm:$0xf]
                  %583 = vst [vmem:[%s555 + $0x34] sm:$0xf] %v582
                  %v584 = vld [vmem:[%s554 + $0xa8] sm:$0xf]
                  %585 = vst [vmem:[%s555 + $0x38] sm:$0xf] %v584
                  %v586 = vld [vmem:[%s554 + $0xb4] sm:$0xf]
                  %587 = vst [vmem:[%s555 + $0x3c] sm:$0xf] %v586
                $region149: #{spatial_self_attention.5} parent=136 // loop_footer
                  %s553 = sadd.s32 1, %s549
                $region150: #{spatial_self_attention.5} parent=136 // loop_footer_branch
                  %548 = sbr.rel target = $region146
                $region151: #{spatial_self_attention.5} parent=136 // loop_exit
                  _
              $region137: #{spatial_self_attention.5} parent=121 // pred_fallthru
                _
            $region122: #{spatial_self_attention.5} parent=117 // pred_fallthru
              _
            // Predicated region
            $region123: #{spatial_self_attention.5} parent=117 // pred_check
              _
            $region124: #{spatial_self_attention.5} parent=117 // pred_check_branch
              %495 = sbr.rel (0) target = $region126
            $region125: #{spatial_self_attention.5} parent=117 // pred_region
              loop: start=0, step=1, limit=1
              $region127: #{spatial_self_attention.5} parent=125 // loop_pre_header
                _
              $region128: #{spatial_self_attention.5} parent=125 // loop_header
                %s498 = sphi 0, %s502
                %p499 = scmp.ge.s32.totalorder %s498, 1
                %s503 = sphi %s489, %s489
                %s504 = sphi %s482, %s482
              $region129: #{spatial_self_attention.5} parent=125 // loop_header_branch
                %501 = sbr.rel (%p499) target = $region133
              $region130: #{spatial_self_attention.5} parent=125 // loop_body
                %v505 = vld [vmem:[%s503] sm:$0xf]
                %506 = vst [vmem:[%s504] sm:$0xf] %v505
                %v507 = vld [vmem:[%s503 + $0xc] sm:$0xf]
                %508 = vst [vmem:[%s504 + $0x4] sm:$0xf] %v507
                %v509 = vld [vmem:[%s503 + $0x18] sm:$0xf]
                %510 = vst [vmem:[%s504 + $0x8] sm:$0xf] %v509
                %v511 = vld [vmem:[%s503 + $0x24] sm:$0xf]
                %512 = vst [vmem:[%s504 + $0xc] sm:$0xf] %v511
                %v513 = vld [vmem:[%s503 + $0x30] sm:$0xf]
                %514 = vst [vmem:[%s504 + $0x10] sm:$0xf] %v513
                %v515 = vld [vmem:[%s503 + $0x3c] sm:$0xf]
                %516 = vst [vmem:[%s504 + $0x14] sm:$0xf] %v515
                %v517 = vld [vmem:[%s503 + $0x48] sm:$0xf]
                %518 = vst [vmem:[%s504 + $0x18] sm:$0xf] %v517
                %v519 = vld [vmem:[%s503 + $0x54] sm:$0xf]
                %520 = vst [vmem:[%s504 + $0x1c] sm:$0xf] %v519
                %v521 = vld [vmem:[%s503 + $0x60] sm:$0xf]
                %522 = vst [vmem:[%s504 + $0x20] sm:$0xf] %v521
                %v523 = vld [vmem:[%s503 + $0x6c] sm:$0xf]
                %524 = vst [vmem:[%s504 + $0x24] sm:$0xf] %v523
                %v525 = vld [vmem:[%s503 + $0x78] sm:$0xf]
                %526 = vst [vmem:[%s504 + $0x28] sm:$0xf] %v525
                %v527 = vld [vmem:[%s503 + $0x84] sm:$0xf]
                %528 = vst [vmem:[%s504 + $0x2c] sm:$0xf] %v527
                %v529 = vld [vmem:[%s503 + $0x90] sm:$0xf]
                %530 = vst [vmem:[%s504 + $0x30] sm:$0xf] %v529
                %v531 = vld [vmem:[%s503 + $0x9c] sm:$0xf]
                %532 = vst [vmem:[%s504 + $0x34] sm:$0xf] %v531
                %v533 = vld [vmem:[%s503 + $0xa8] sm:$0xf]
                %534 = vst [vmem:[%s504 + $0x38] sm:$0xf] %v533
                %v535 = vld [vmem:[%s503 + $0xb4] sm:$0xf]
                %536 = vst [vmem:[%s504 + $0x3c] sm:$0xf] %v535
              $region131: #{spatial_self_attention.5} parent=125 // loop_footer
                %s502 = sadd.s32 1, %s498
              $region132: #{spatial_self_attention.5} parent=125 // loop_footer_branch
                %497 = sbr.rel target = $region128
              $region133: #{spatial_self_attention.5} parent=125 // loop_exit
                _
            $region126: #{spatial_self_attention.5} parent=117 // pred_fallthru
              _
          $region118: #{spatial_self_attention.5} parent=113 // pred_fallthru
            _
          %588 = vnop
        $region114: #{spatial_self_attention.5} parent=23 // pred_fallthru
          _
      $region24: #{spatial_self_attention.5} parent=5 // pred_fallthru
        _
      %p589 = scmp.le.s32.totalorder 1, %s12
      %p590 = scmp.lt.s32.totalorder %s12, 9
      %p591 = pnand %p589, %p590
      %p592 = pneg %p591
      // Predicated region
      $region152: #{spatial_self_attention.5} parent=5 // pred_check
        _
      $region153: #{spatial_self_attention.5} parent=5 // pred_check_branch
        %594 = sbr.rel (%p591) target = $region155
      $region154: #{spatial_self_attention.5} parent=5 // pred_region
        %s595 = ssub.s32 %s12, 1
        %s596 = sand.u32 %s74, 1
        %s597 = sand.u32 %s74, 1
        %s598 = smul.addr %s597, 64
        %s599 = scalar_lea.vmem [#allocation5], %s598
        // Predicated region
        $region156: #{spatial_self_attention.5} parent=154 // pred_check
          %p600 = pneg %p87
        $region157: #{spatial_self_attention.5} parent=154 // pred_check_branch
          %602 = sbr.rel (%p600) target = $region159
        $region158: #{spatial_self_attention.5} parent=154 // pred_region
          _
        $region159: #{spatial_self_attention.5} parent=154 // pred_fallthru
          _
        %s603 = sand.u32 %s102, 1
        %s604 = sand.u32 %s102, 1
        %s605 = smul.addr %s604, 64
        %s606 = scalar_lea.vmem [#allocation6], %s605
        // Predicated region
        $region160: #{spatial_self_attention.5} parent=154 // pred_check
          %p607 = pneg %p115
        $region161: #{spatial_self_attention.5} parent=154 // pred_check_branch
          %609 = sbr.rel (%p607) target = $region163
        $region162: #{spatial_self_attention.5} parent=154 // pred_region
          _
        $region163: #{spatial_self_attention.5} parent=154 // pred_fallthru
          _
        %s610 = sand.u32 %s130, 1
        %s611 = sand.u32 %s130, 1
        %s612 = smul.addr %s611, 64
        %s613 = scalar_lea.vmem [#allocation7], %s612
        // Predicated region
        $region164: #{spatial_self_attention.5} parent=154 // pred_check
          %p614 = pneg %p143
        $region165: #{spatial_self_attention.5} parent=154 // pred_check_branch
          %616 = sbr.rel (%p614) target = $region167
        $region166: #{spatial_self_attention.5} parent=154 // pred_region
          _
        $region167: #{spatial_self_attention.5} parent=154 // pred_fallthru
          _
        %s617 = smul.u32 16, %s23
        %p618 = scmp.lt.s32.totalorder %s22, 1
        %s619 = scalar_select %p618, %s22, 1
        %p620 = scmp.lt.s32.totalorder %s617, 31
        %s621 = scalar_select %p620, %s617, 31
        %s622 = smul.addr %s619, 32
        %s623 = sadd.s32 %s621, %s622
        %s624 = smul.addr %s623, 8
        %s625 = scalar_lea.vmem %s0, %s624
        %p626 = pneg %p59
        %p627 = pneg %p56
        %s628 = sand.u32 %s74, 1
        %s629 = sand.u32 %s74, 1
        %s630 = smul.addr %s629, 64
        %s631 = scalar_lea.vmem [#allocation5], %s630
        %p632 = pneg %p87
        %p633 = pneg %p84
        %s634 = sand.u32 %s102, 1
        %s635 = sand.u32 %s102, 1
        %s636 = smul.addr %s635, 64
        %s637 = scalar_lea.vmem [#allocation6], %s636
        %p638 = pneg %p115
        %p639 = pneg %p112
        %s640 = sand.u32 %s130, 1
        %s641 = sand.u32 %s130, 1
        %s642 = smul.addr %s641, 64
        %s643 = scalar_lea.vmem [#allocation7], %s642
        %p644 = pneg %p143
        %p645 = pneg %p140
        %p646 = pneg %p164
        %p647 = pneg %p161
        %p648 = pneg %p185
        %p649 = pneg %p182
        %p650 = pneg %p213
        %p651 = pneg %p210
        %s652 = smul.u32 16, %s23
        %p653 = scmp.lt.s32.totalorder %s22, 1
        %s654 = scalar_select %p653, %s22, 1
        %p655 = scmp.lt.s32.totalorder %s652, 31
        %s656 = scalar_select %p655, %s652, 31
        %s657 = smul.addr %s654, 32
        %s658 = sadd.s32 %s656, %s657
        %s659 = smul.addr %s658, 8
        %s660 = scalar_lea.vmem %s6, %s659
        %s661 = smul.u32 16, %s23
        %p662 = scmp.lt.s32.totalorder %s22, 1
        %s663 = scalar_select %p662, %s22, 1
        %p664 = scmp.lt.s32.totalorder %s661, 31
        %s665 = scalar_select %p664, %s661, 31
        %s666 = smul.addr %s663, 32
        %s667 = sadd.s32 %s665, %s666
        %s668 = smul.addr %s667, 8
        %s669 = scalar_lea.vmem %s0, %s668
        %s670 = smul.u32 16, %s23
        %s671 = smul.u32 16, %s23
        %s672 = smul.u32 16, %s24
        %s673 = smul.u32 16, %s24
        %s674 = smul.u32 16, %s23
        %p675 = scmp.lt.s32.totalorder %s22, 1
        %s676 = scalar_select %p675, %s22, 1
        %p677 = scmp.lt.s32.totalorder %s674, 31
        %s678 = scalar_select %p677, %s674, 31
        %s679 = smul.addr %s676, 32
        %s680 = sadd.s32 %s678, %s679
        %s681 = smul.addr %s680, 8
        %s682 = scalar_lea.vmem %s6, %s681
        %s683 = smul.u32 16, %s23
        %p685 = scmp.eq.s32.totalorder %s24, 0
        // Predicated region
        $region168: #{spatial_self_attention.5} parent=154 // pred_check
          %p686 = pneg %p685
        $region169: #{spatial_self_attention.5} parent=154 // pred_check_branch
          %688 = sbr.rel (%p686) target = $region171
        $region170: #{spatial_self_attention.5} parent=154 // pred_region
          %vm689 = vcmask 7168
          %690 = vst.msk [vmem:[#allocation2] sm:$0xff] %vm689, -inf
          %691 = vst.msk [vmem:[#allocation2 + $0x8] sm:$0xff] %vm689, -inf
          %692 = vst.msk [vmem:[#allocation2 + $0x10] sm:$0xff] %vm689, -inf
          %693 = vst.msk [vmem:[#allocation2 + $0x18] sm:$0xff] %vm689, -inf
          %694 = vst.msk [vmem:[#allocation2 + $0x20] sm:$0xff] %vm689, -inf
          %695 = vst.msk [vmem:[#allocation2 + $0x28] sm:$0xff] %vm689, -inf
          %696 = vst.msk [vmem:[#allocation2 + $0x30] sm:$0xff] %vm689, -inf
          %697 = vst.msk [vmem:[#allocation2 + $0x38] sm:$0xff] %vm689, -inf
          %698 = vst.msk [vmem:[#allocation2 + $0x40] sm:$0xff] %vm689, -inf
          %699 = vst.msk [vmem:[#allocation2 + $0x48] sm:$0xff] %vm689, -inf
          %700 = vst.msk [vmem:[#allocation2 + $0x50] sm:$0xff] %vm689, -inf
          %701 = vst.msk [vmem:[#allocation2 + $0x58] sm:$0xff] %vm689, -inf
          %702 = vst.msk [vmem:[#allocation2 + $0x60] sm:$0xff] %vm689, -inf
          %703 = vst.msk [vmem:[#allocation2 + $0x68] sm:$0xff] %vm689, -inf
          %704 = vst.msk [vmem:[#allocation2 + $0x70] sm:$0xff] %vm689, -inf
          %705 = vst.msk [vmem:[#allocation2 + $0x78] sm:$0xff] %vm689, -inf
          %706 = vst.msk [vmem:[#allocation3] sm:$0xff] %vm689, 0.0
          %707 = vst.msk [vmem:[#allocation3 + $0x8] sm:$0xff] %vm689, 0.0
          %708 = vst.msk [vmem:[#allocation3 + $0x10] sm:$0xff] %vm689, 0.0
          %709 = vst.msk [vmem:[#allocation3 + $0x18] sm:$0xff] %vm689, 0.0
          %710 = vst.msk [vmem:[#allocation3 + $0x20] sm:$0xff] %vm689, 0.0
          %711 = vst.msk [vmem:[#allocation3 + $0x28] sm:$0xff] %vm689, 0.0
          %712 = vst.msk [vmem:[#allocation3 + $0x30] sm:$0xff] %vm689, 0.0
          %713 = vst.msk [vmem:[#allocation3 + $0x38] sm:$0xff] %vm689, 0.0
          %714 = vst.msk [vmem:[#allocation3 + $0x40] sm:$0xff] %vm689, 0.0
          %715 = vst.msk [vmem:[#allocation3 + $0x48] sm:$0xff] %vm689, 0.0
          %716 = vst.msk [vmem:[#allocation3 + $0x50] sm:$0xff] %vm689, 0.0
          %717 = vst.msk [vmem:[#allocation3 + $0x58] sm:$0xff] %vm689, 0.0
          %718 = vst.msk [vmem:[#allocation3 + $0x60] sm:$0xff] %vm689, 0.0
          %719 = vst.msk [vmem:[#allocation3 + $0x68] sm:$0xff] %vm689, 0.0
          %720 = vst.msk [vmem:[#allocation3 + $0x70] sm:$0xff] %vm689, 0.0
          %721 = vst.msk [vmem:[#allocation3 + $0x78] sm:$0xff] %vm689, 0.0
          %722 = vst [vmem:[#allocation4] sm:$0xff] 0.0
          %723 = vst [vmem:[#allocation4 + $0x8] sm:$0xff] 0.0
          %724 = vst [vmem:[#allocation4 + $0x10] sm:$0xff] 0.0
          %725 = vst [vmem:[#allocation4 + $0x18] sm:$0xff] 0.0
          %726 = vst [vmem:[#allocation4 + $0x20] sm:$0xff] 0.0
          %727 = vst [vmem:[#allocation4 + $0x28] sm:$0xff] 0.0
          %728 = vst [vmem:[#allocation4 + $0x30] sm:$0xff] 0.0
          %729 = vst [vmem:[#allocation4 + $0x38] sm:$0xff] 0.0
          %730 = vst [vmem:[#allocation4 + $0x40] sm:$0xff] 0.0
          %731 = vst [vmem:[#allocation4 + $0x48] sm:$0xff] 0.0
          %732 = vst [vmem:[#allocation4 + $0x50] sm:$0xff] 0.0
          %733 = vst [vmem:[#allocation4 + $0x58] sm:$0xff] 0.0
          %734 = vst [vmem:[#allocation4 + $0x60] sm:$0xff] 0.0
          %735 = vst [vmem:[#allocation4 + $0x68] sm:$0xff] 0.0
          %736 = vst [vmem:[#allocation4 + $0x70] sm:$0xff] 0.0
          %737 = vst [vmem:[#allocation4 + $0x78] sm:$0xff] 0.0
        $region171: #{spatial_self_attention.5} parent=154 // pred_fallthru
          _
        %v738 = vld [vmem:[%s599] sm:$0xf]
        %v739 = vld [vmem:[%s599 + $0x4] sm:$0xf]
        %v740 = vld [vmem:[%s599 + $0x8] sm:$0xf]
        %v741 = vld [vmem:[%s599 + $0xc] sm:$0xf]
        %v742 = vld [vmem:[%s599 + $0x10] sm:$0xf]
        %v743 = vld [vmem:[%s599 + $0x14] sm:$0xf]
        %v744 = vld [vmem:[%s599 + $0x18] sm:$0xf]
        %v745 = vld [vmem:[%s599 + $0x1c] sm:$0xf]
        %v746 = vld [vmem:[%s599 + $0x20] sm:$0xf]
        %v747 = vld [vmem:[%s599 + $0x24] sm:$0xf]
        %v748 = vld [vmem:[%s599 + $0x28] sm:$0xf]
        %v749 = vld [vmem:[%s599 + $0x2c] sm:$0xf]
        %v750 = vld [vmem:[%s599 + $0x30] sm:$0xf]
        %v751 = vld [vmem:[%s599 + $0x34] sm:$0xf]
        %v752 = vld [vmem:[%s599 + $0x38] sm:$0xf]
        %v753 = vld [vmem:[%s599 + $0x3c] sm:$0xf]
        %v754 = vld [vmem:[%s606] sm:$0xf]
        %v755 = vld [vmem:[%s606 + $0x4] sm:$0xf]
        %v756 = vld [vmem:[%s606 + $0x8] sm:$0xf]
        %v757 = vld [vmem:[%s606 + $0xc] sm:$0xf]
        %v758 = vld [vmem:[%s606 + $0x10] sm:$0xf]
        %v759 = vld [vmem:[%s606 + $0x14] sm:$0xf]
        %v760 = vld [vmem:[%s606 + $0x18] sm:$0xf]
        %v761 = vld [vmem:[%s606 + $0x1c] sm:$0xf]
        %v762 = vld [vmem:[%s606 + $0x20] sm:$0xf]
        %v763 = vld [vmem:[%s606 + $0x24] sm:$0xf]
        %v764 = vld [vmem:[%s606 + $0x28] sm:$0xf]
        %v765 = vld [vmem:[%s606 + $0x2c] sm:$0xf]
        %v766 = vld [vmem:[%s606 + $0x30] sm:$0xf]
        %v767 = vld [vmem:[%s606 + $0x34] sm:$0xf]
        %v768 = vld [vmem:[%s606 + $0x38] sm:$0xf]
        %v769 = vld [vmem:[%s606 + $0x3c] sm:$0xf]
        %v770 = vld [vmem:[%s613] sm:$0xf]
        %v771 = vld [vmem:[%s613 + $0x4] sm:$0xf]
        %v772 = vld [vmem:[%s613 + $0x8] sm:$0xf]
        %v773 = vld [vmem:[%s613 + $0xc] sm:$0xf]
        %v774 = vld [vmem:[%s613 + $0x10] sm:$0xf]
        %v775 = vld [vmem:[%s613 + $0x14] sm:$0xf]
        %v776 = vld [vmem:[%s613 + $0x18] sm:$0xf]
        %v777 = vld [vmem:[%s613 + $0x1c] sm:$0xf]
        %v778 = vld [vmem:[%s613 + $0x20] sm:$0xf]
        %v779 = vld [vmem:[%s613 + $0x24] sm:$0xf]
        %v780 = vld [vmem:[%s613 + $0x28] sm:$0xf]
        %v781 = vld [vmem:[%s613 + $0x2c] sm:$0xf]
        %v782 = vld [vmem:[%s613 + $0x30] sm:$0xf]
        %v783 = vld [vmem:[%s613 + $0x34] sm:$0xf]
        %v784 = vld [vmem:[%s613 + $0x38] sm:$0xf]
        %v785 = vld [vmem:[%s613 + $0x3c] sm:$0xf]
        %v802 = vunpack.c.l.b16 %v738
        %v803 = vunpack.c.l.b16 %v739
        %v804 = vunpack.c.l.b16 %v740
        %v805 = vunpack.c.l.b16 %v741
        %v806 = vunpack.c.l.b16 %v742
        %v807 = vunpack.c.l.b16 %v743
        %v808 = vunpack.c.l.b16 %v744
        %v809 = vunpack.c.l.b16 %v745
        %v810 = vunpack.c.l.b16 %v746
        %v811 = vunpack.c.l.b16 %v747
        %v812 = vunpack.c.l.b16 %v748
        %v813 = vunpack.c.l.b16 %v749
        %v814 = vunpack.c.l.b16 %v750
        %v815 = vunpack.c.l.b16 %v751
        %v816 = vunpack.c.l.b16 %v752
        %v817 = vunpack.c.l.b16 %v753
        %v818 = vpack.c.b16 %v803, %v802
        %v819 = vpack.c.b16 %v805, %v804
        %v820 = vpack.c.b16 %v807, %v806
        %v821 = vpack.c.b16 %v809, %v808
        %v822 = vpack.c.b16 %v811, %v810
        %v823 = vpack.c.b16 %v813, %v812
        %v824 = vpack.c.b16 %v815, %v814
        %v825 = vpack.c.b16 %v817, %v816
        %v850 = vunpack.c.l.b16 %v754
        %v851 = vunpack.c.l.b16 %v755
        %v852 = vunpack.c.l.b16 %v756
        %v853 = vunpack.c.l.b16 %v757
        %v854 = vunpack.c.l.b16 %v758
        %v855 = vunpack.c.l.b16 %v759
        %v856 = vunpack.c.l.b16 %v760
        %v857 = vunpack.c.l.b16 %v761
        %v858 = vunpack.c.l.b16 %v762
        %v859 = vunpack.c.l.b16 %v763
        %v860 = vunpack.c.l.b16 %v764
        %v861 = vunpack.c.l.b16 %v765
        %v862 = vunpack.c.l.b16 %v766
        %v863 = vunpack.c.l.b16 %v767
        %v864 = vunpack.c.l.b16 %v768
        %v865 = vunpack.c.l.b16 %v769
        %v866 = vpack.c.b16 %v851, %v850
        %v867 = vpack.c.b16 %v853, %v852
        %v868 = vpack.c.b16 %v855, %v854
        %v869 = vpack.c.b16 %v857, %v856
        %v870 = vpack.c.b16 %v859, %v858
        %v871 = vpack.c.b16 %v861, %v860
        %v872 = vpack.c.b16 %v863, %v862
        %v873 = vpack.c.b16 %v865, %v864
        %882 = vmatprep.subr.bf16.mxu0 0
        %883 = vmatpush1.bf16.xpose.msra.mxu0 %v866
        %884 = vmatprep.subr.bf16.mxu0 0
        %885 = vmatpush1.bf16.xpose.msra.mxu0 %v867
        %886 = vmatprep.subr.bf16.mxu0 0
        %887 = vmatpush1.bf16.xpose.msra.mxu0 %v868
        %888 = vmatprep.subr.bf16.mxu0 0
        %889 = vmatpush1.bf16.xpose.msra.mxu0 %v869
        %890 = vmatprep.subr.bf16.mxu0 0
        %891 = vmatpush1.bf16.xpose.msra.mxu0 %v870
        %892 = vmatprep.subr.bf16.mxu0 0
        %893 = vmatpush1.bf16.xpose.msra.mxu0 %v871
        %894 = vmatprep.subr.bf16.mxu0 0
        %895 = vmatpush1.bf16.xpose.msra.mxu0 %v872
        %896 = vmatprep.subr.bf16.mxu0 0
        %897 = vmatpush1.bf16.xpose.msra.mxu0 %v873
        %898 = vmatprep.subr.bf16.mxu0 0
        %899 = vmatpush1.bf16.xpose.msra.mxu0 0
        %900 = vmatprep.subr.bf16.mxu0 0
        %901 = vmatpush1.bf16.xpose.msra.mxu0 0
        %902 = vmatprep.subr.bf16.mxu0 0
        %903 = vmatpush1.bf16.xpose.msra.mxu0 0
        %904 = vmatprep.subr.bf16.mxu0 0
        %905 = vmatpush1.bf16.xpose.msra.mxu0 0
        %906 = vmatprep.subr.bf16.mxu0 0
        %907 = vmatpush1.bf16.xpose.msra.mxu0 0
        %908 = vmatprep.subr.bf16.mxu0 0
        %909 = vmatpush1.bf16.xpose.msra.mxu0 0
        %910 = vmatprep.subr.bf16.mxu0 0
        %911 = vmatpush1.bf16.xpose.msra.mxu0 0
        %912 = vmatprep.subr.bf16.mxu0 0
        %913 = vmatpush1.bf16.xpose.msra.mxu0 0
        %914 = vmatprep.mubr.bf16.mxu0 0
        %915 = vmatmul.mubr.bf16.gmra.mrb[0].mxu0 %v818
        %v916 = vpop.f32.mrb[0].mxu0
        %v917 = vadd.f32 0.0, %v916
        %v918 = vpop.f32.mrb[0].mxu0
        %v919 = vpop.f32.mrb[0].mxu0
        %v920 = vadd.f32 0.0, %v919
        %v921 = vpop.f32.mrb[0].mxu0
        %922 = vmatprep.mubr.bf16.mxu0 0
        %923 = vmatmul.mubr.bf16.gmra.mrb[0].mxu0 %v819
        %v924 = vpop.f32.mrb[0].mxu0
        %v925 = vadd.f32 0.0, %v924
        %v926 = vpop.f32.mrb[0].mxu0
        %v927 = vpop.f32.mrb[0].mxu0
        %v928 = vadd.f32 0.0, %v927
        %v929 = vpop.f32.mrb[0].mxu0
        %930 = vmatprep.mubr.bf16.mxu0 0
        %931 = vmatmul.mubr.bf16.gmra.mrb[0].mxu0 %v820
        %v932 = vpop.f32.mrb[0].mxu0
        %v933 = vadd.f32 0.0, %v932
        %v934 = vpop.f32.mrb[0].mxu0
        %v935 = vpop.f32.mrb[0].mxu0
        %v936 = vadd.f32 0.0, %v935
        %v937 = vpop.f32.mrb[0].mxu0
        %938 = vmatprep.mubr.bf16.mxu0 0
        %939 = vmatmul.mubr.bf16.gmra.mrb[0].mxu0 %v821
        %v940 = vpop.f32.mrb[0].mxu0
        %v941 = vadd.f32 0.0, %v940
        %v942 = vpop.f32.mrb[0].mxu0
        %v943 = vpop.f32.mrb[0].mxu0
        %v944 = vadd.f32 0.0, %v943
        %v945 = vpop.f32.mrb[0].mxu0
        %946 = vmatprep.mubr.bf16.mxu0 0
        %947 = vmatmul.mubr.bf16.gmra.mrb[0].mxu0 %v822
        %v948 = vpop.f32.mrb[0].mxu0
        %v949 = vadd.f32 0.0, %v948
        %v950 = vpop.f32.mrb[0].mxu0
        %v951 = vpop.f32.mrb[0].mxu0
        %v952 = vadd.f32 0.0, %v951
        %v953 = vpop.f32.mrb[0].mxu0
        %954 = vmatprep.mubr.bf16.mxu0 0
        %955 = vmatmul.mubr.bf16.gmra.mrb[0].mxu0 %v823
        %v956 = vpop.f32.mrb[0].mxu0
        %v957 = vadd.f32 0.0, %v956
        %v958 = vpop.f32.mrb[0].mxu0
        %v959 = vpop.f32.mrb[0].mxu0
        %v960 = vadd.f32 0.0, %v959
        %v961 = vpop.f32.mrb[0].mxu0
        %962 = vmatprep.mubr.bf16.mxu0 0
        %963 = vmatmul.mubr.bf16.gmra.mrb[0].mxu0 %v824
        %v964 = vpop.f32.mrb[0].mxu0
        %v965 = vadd.f32 0.0, %v964
        %v966 = vpop.f32.mrb[0].mxu0
        %v967 = vpop.f32.mrb[0].mxu0
        %v968 = vadd.f32 0.0, %v967
        %v969 = vpop.f32.mrb[0].mxu0
        %970 = vmatprep.mubr.bf16.mxu0 0
        %971 = vmatmul.mubr.bf16.gmra.mrb[0].mxu0 %v825
        %v972 = vpop.f32.mrb[0].mxu0
        %v973 = vadd.f32 0.0, %v972
        %v974 = vpop.f32.mrb[0].mxu0
        %v975 = vpop.f32.mrb[0].mxu0
        %v976 = vadd.f32 0.0, %v975
        %v977 = vpop.f32.mrb[0].mxu0
        %978 = vdwg.mxu0
        %v979 = vld [vmem:[#allocation2] sm:$0xff]
        %v980 = vld [vmem:[#allocation2 + $0x8] sm:$0xff]
        %v981 = vld [vmem:[#allocation2 + $0x10] sm:$0xff]
        %v982 = vld [vmem:[#allocation2 + $0x18] sm:$0xff]
        %v983 = vld [vmem:[#allocation2 + $0x20] sm:$0xff]
        %v984 = vld [vmem:[#allocation2 + $0x28] sm:$0xff]
        %v985 = vld [vmem:[#allocation2 + $0x30] sm:$0xff]
        %v986 = vld [vmem:[#allocation2 + $0x38] sm:$0xff]
        %v987 = vld [vmem:[#allocation2 + $0x40] sm:$0xff]
        %v988 = vld [vmem:[#allocation2 + $0x48] sm:$0xff]
        %v989 = vld [vmem:[#allocation2 + $0x50] sm:$0xff]
        %v990 = vld [vmem:[#allocation2 + $0x58] sm:$0xff]
        %v991 = vld [vmem:[#allocation2 + $0x60] sm:$0xff]
        %v992 = vld [vmem:[#allocation2 + $0x68] sm:$0xff]
        %v993 = vld [vmem:[#allocation2 + $0x70] sm:$0xff]
        %v994 = vld [vmem:[#allocation2 + $0x78] sm:$0xff]
        %995 = vmax.xlane.f32.xlu0 %v917
        %v996 = vpop.xlane.xlu0 %995
        %997 = vmax.xlane.f32.xlu0 %v920
        %v998 = vpop.xlane.xlu0 %997
        %999 = vmax.xlane.f32.xlu0 %v925
        %v1000 = vpop.xlane.xlu0 %999
        %1001 = vmax.xlane.f32.xlu0 %v928
        %v1002 = vpop.xlane.xlu0 %1001
        %1003 = vmax.xlane.f32.xlu0 %v933
        %v1004 = vpop.xlane.xlu0 %1003
        %1005 = vmax.xlane.f32.xlu0 %v936
        %v1006 = vpop.xlane.xlu0 %1005
        %1007 = vmax.xlane.f32.xlu0 %v941
        %v1008 = vpop.xlane.xlu0 %1007
        %1009 = vmax.xlane.f32.xlu0 %v944
        %v1010 = vpop.xlane.xlu0 %1009
        %1011 = vmax.xlane.f32.xlu0 %v949
        %v1012 = vpop.xlane.xlu0 %1011
        %1013 = vmax.xlane.f32.xlu0 %v952
        %v1014 = vpop.xlane.xlu0 %1013
        %1015 = vmax.xlane.f32.xlu0 %v957
        %v1016 = vpop.xlane.xlu0 %1015
        %1017 = vmax.xlane.f32.xlu0 %v960
        %v1018 = vpop.xlane.xlu0 %1017
        %1019 = vmax.xlane.f32.xlu0 %v965
        %v1020 = vpop.xlane.xlu0 %1019
        %1021 = vmax.xlane.f32.xlu0 %v968
        %v1022 = vpop.xlane.xlu0 %1021
        %1023 = vmax.xlane.f32.xlu0 %v973
        %v1024 = vpop.xlane.xlu0 %1023
        %1025 = vmax.xlane.f32.xlu0 %v976
        %v1026 = vpop.xlane.xlu0 %1025
        %v1027 = vmax.f32 %v979, %v996
        %v1028 = vmax.f32 %v980, %v998
        %v1029 = vmax.f32 %v981, %v1000
        %v1030 = vmax.f32 %v982, %v1002
        %v1031 = vmax.f32 %v983, %v1004
        %v1032 = vmax.f32 %v984, %v1006
        %v1033 = vmax.f32 %v985, %v1008
        %v1034 = vmax.f32 %v986, %v1010
        %v1035 = vmax.f32 %v987, %v1012
        %v1036 = vmax.f32 %v988, %v1014
        %v1037 = vmax.f32 %v989, %v1016
        %v1038 = vmax.f32 %v990, %v1018
        %v1039 = vmax.f32 %v991, %v1020
        %v1040 = vmax.f32 %v992, %v1022
        %v1041 = vmax.f32 %v993, %v1024
        %v1042 = vmax.f32 %v994, %v1026
        %v1043 = vsub.f32 %v979, %v1027
        %v1044 = vsub.f32 %v980, %v1028
        %v1045 = vsub.f32 %v981, %v1029
        %v1046 = vsub.f32 %v982, %v1030
        %v1047 = vsub.f32 %v983, %v1031
        %v1048 = vsub.f32 %v984, %v1032
        %v1049 = vsub.f32 %v985, %v1033
        %v1050 = vsub.f32 %v986, %v1034
        %v1051 = vsub.f32 %v987, %v1035
        %v1052 = vsub.f32 %v988, %v1036
        %v1053 = vsub.f32 %v989, %v1037
        %v1054 = vsub.f32 %v990, %v1038
        %v1055 = vsub.f32 %v991, %v1039
        %v1056 = vsub.f32 %v992, %v1040
        %v1057 = vsub.f32 %v993, %v1041
        %v1058 = vsub.f32 %v994, %v1042
        %v1059 = vmul.f32 %v1043, 1.442695
        %v1060 = vpow.pop %v1059
        %v1061 = vmul.f32 %v1044, 1.442695
        %v1062 = vpow.pop %v1061
        %v1063 = vmul.f32 %v1045, 1.442695
        %v1064 = vpow.pop %v1063
        %v1065 = vmul.f32 %v1046, 1.442695
        %v1066 = vpow.pop %v1065
        %v1067 = vmul.f32 %v1047, 1.442695
        %v1068 = vpow.pop %v1067
        %v1069 = vmul.f32 %v1048, 1.442695
        %v1070 = vpow.pop %v1069
        %v1071 = vmul.f32 %v1049, 1.442695
        %v1072 = vpow.pop %v1071
        %v1073 = vmul.f32 %v1050, 1.442695
        %v1074 = vpow.pop %v1073
        %v1075 = vmul.f32 %v1051, 1.442695
        %v1076 = vpow.pop %v1075
        %v1077 = vmul.f32 %v1052, 1.442695
        %v1078 = vpow.pop %v1077
        %v1079 = vmul.f32 %v1053, 1.442695
        %v1080 = vpow.pop %v1079
        %v1081 = vmul.f32 %v1054, 1.442695
        %v1082 = vpow.pop %v1081
        %v1083 = vmul.f32 %v1055, 1.442695
        %v1084 = vpow.pop %v1083
        %v1085 = vmul.f32 %v1056, 1.442695
        %v1086 = vpow.pop %v1085
        %v1087 = vmul.f32 %v1057, 1.442695
        %v1088 = vpow.pop %v1087
        %v1089 = vmul.f32 %v1058, 1.442695
        %v1090 = vpow.pop %v1089
        %1092 = vset.pattern.permute.xlu0 0
        %1093 = vperm.xlu0 %1092, %v1027
        %v1094 = vpop.permute.xlu0 %1093
        %1097 = vset.pattern.permute.xlu0 0
        %1098 = vperm.xlu0 %1097, %v1028
        %v1099 = vpop.permute.xlu0 %1098
        %1102 = vset.pattern.permute.xlu0 0
        %1103 = vperm.xlu0 %1102, %v1029
        %v1104 = vpop.permute.xlu0 %1103
        %1107 = vset.pattern.permute.xlu0 0
        %1108 = vperm.xlu0 %1107, %v1030
        %v1109 = vpop.permute.xlu0 %1108
        %1112 = vset.pattern.permute.xlu0 0
        %1113 = vperm.xlu0 %1112, %v1031
        %v1114 = vpop.permute.xlu0 %1113
        %1117 = vset.pattern.permute.xlu0 0
        %1118 = vperm.xlu0 %1117, %v1032
        %v1119 = vpop.permute.xlu0 %1118
        %1122 = vset.pattern.permute.xlu0 0
        %1123 = vperm.xlu0 %1122, %v1033
        %v1124 = vpop.permute.xlu0 %1123
        %1127 = vset.pattern.permute.xlu0 0
        %1128 = vperm.xlu0 %1127, %v1034
        %v1129 = vpop.permute.xlu0 %1128
        %1132 = vset.pattern.permute.xlu0 0
        %1133 = vperm.xlu0 %1132, %v1035
        %v1134 = vpop.permute.xlu0 %1133
        %1137 = vset.pattern.permute.xlu0 0
        %1138 = vperm.xlu0 %1137, %v1036
        %v1139 = vpop.permute.xlu0 %1138
        %1142 = vset.pattern.permute.xlu0 0
        %1143 = vperm.xlu0 %1142, %v1037
        %v1144 = vpop.permute.xlu0 %1143
        %1147 = vset.pattern.permute.xlu0 0
        %1148 = vperm.xlu0 %1147, %v1038
        %v1149 = vpop.permute.xlu0 %1148
        %1152 = vset.pattern.permute.xlu0 0
        %1153 = vperm.xlu0 %1152, %v1039
        %v1154 = vpop.permute.xlu0 %1153
        %1157 = vset.pattern.permute.xlu0 0
        %1158 = vperm.xlu0 %1157, %v1040
        %v1159 = vpop.permute.xlu0 %1158
        %1162 = vset.pattern.permute.xlu0 0
        %1163 = vperm.xlu0 %1162, %v1041
        %v1164 = vpop.permute.xlu0 %1163
        %1167 = vset.pattern.permute.xlu0 0
        %1168 = vperm.xlu0 %1167, %v1042
        %v1169 = vpop.permute.xlu0 %1168
        %v1171 = vsub.f32 %v917, %v1094
        %v1172 = vsub.f32 %v920, %v1099
        %v1173 = vsub.f32 %v925, %v1104
        %v1174 = vsub.f32 %v928, %v1109
        %v1175 = vsub.f32 %v933, %v1114
        %v1176 = vsub.f32 %v936, %v1119
        %v1177 = vsub.f32 %v941, %v1124
        %v1178 = vsub.f32 %v944, %v1129
        %v1179 = vsub.f32 %v949, %v1134
        %v1180 = vsub.f32 %v952, %v1139
        %v1181 = vsub.f32 %v957, %v1144
        %v1182 = vsub.f32 %v960, %v1149
        %v1183 = vsub.f32 %v965, %v1154
        %v1184 = vsub.f32 %v968, %v1159
        %v1185 = vsub.f32 %v973, %v1164
        %v1186 = vsub.f32 %v976, %v1169
        %v1187 = vmul.f32 %v1171, 1.442695
        %v1188 = vpow.pop %v1187
        %v1189 = vmul.f32 %v1172, 1.442695
        %v1190 = vpow.pop %v1189
        %v1191 = vmul.f32 %v1173, 1.442695
        %v1192 = vpow.pop %v1191
        %v1193 = vmul.f32 %v1174, 1.442695
        %v1194 = vpow.pop %v1193
        %v1195 = vmul.f32 %v1175, 1.442695
        %v1196 = vpow.pop %v1195
        %v1197 = vmul.f32 %v1176, 1.442695
        %v1198 = vpow.pop %v1197
        %v1199 = vmul.f32 %v1177, 1.442695
        %v1200 = vpow.pop %v1199
        %v1201 = vmul.f32 %v1178, 1.442695
        %v1202 = vpow.pop %v1201
        %v1203 = vmul.f32 %v1179, 1.442695
        %v1204 = vpow.pop %v1203
        %v1205 = vmul.f32 %v1180, 1.442695
        %v1206 = vpow.pop %v1205
        %v1207 = vmul.f32 %v1181, 1.442695
        %v1208 = vpow.pop %v1207
        %v1209 = vmul.f32 %v1182, 1.442695
        %v1210 = vpow.pop %v1209
        %v1211 = vmul.f32 %v1183, 1.442695
        %v1212 = vpow.pop %v1211
        %v1213 = vmul.f32 %v1184, 1.442695
        %v1214 = vpow.pop %v1213
        %v1215 = vmul.f32 %v1185, 1.442695
        %v1216 = vpow.pop %v1215
        %v1217 = vmul.f32 %v1186, 1.442695
        %v1218 = vpow.pop %v1217
        %v1219 = vld [vmem:[#allocation3] sm:$0xff]
        %v1220 = vld [vmem:[#allocation3 + $0x8] sm:$0xff]
        %v1221 = vld [vmem:[#allocation3 + $0x10] sm:$0xff]
        %v1222 = vld [vmem:[#allocation3 + $0x18] sm:$0xff]
        %v1223 = vld [vmem:[#allocation3 + $0x20] sm:$0xff]
        %v1224 = vld [vmem:[#allocation3 + $0x28] sm:$0xff]
        %v1225 = vld [vmem:[#allocation3 + $0x30] sm:$0xff]
        %v1226 = vld [vmem:[#allocation3 + $0x38] sm:$0xff]
        %v1227 = vld [vmem:[#allocation3 + $0x40] sm:$0xff]
        %v1228 = vld [vmem:[#allocation3 + $0x48] sm:$0xff]
        %v1229 = vld [vmem:[#allocation3 + $0x50] sm:$0xff]
        %v1230 = vld [vmem:[#allocation3 + $0x58] sm:$0xff]
        %v1231 = vld [vmem:[#allocation3 + $0x60] sm:$0xff]
        %v1232 = vld [vmem:[#allocation3 + $0x68] sm:$0xff]
        %v1233 = vld [vmem:[#allocation3 + $0x70] sm:$0xff]
        %v1234 = vld [vmem:[#allocation3 + $0x78] sm:$0xff]
        %v1235 = vmul.f32 %v1060, %v1219
        %v1236 = vmul.f32 %v1062, %v1220
        %v1237 = vmul.f32 %v1064, %v1221
        %v1238 = vmul.f32 %v1066, %v1222
        %v1239 = vmul.f32 %v1068, %v1223
        %v1240 = vmul.f32 %v1070, %v1224
        %v1241 = vmul.f32 %v1072, %v1225
        %v1242 = vmul.f32 %v1074, %v1226
        %v1243 = vmul.f32 %v1076, %v1227
        %v1244 = vmul.f32 %v1078, %v1228
        %v1245 = vmul.f32 %v1080, %v1229
        %v1246 = vmul.f32 %v1082, %v1230
        %v1247 = vmul.f32 %v1084, %v1231
        %v1248 = vmul.f32 %v1086, %v1232
        %v1249 = vmul.f32 %v1088, %v1233
        %v1250 = vmul.f32 %v1090, %v1234
        %1251 = vadd.xlane.f32.xlu0 %v1188
        %v1252 = vpop.xlane.xlu0 %1251
        %1253 = vadd.xlane.f32.xlu0 %v1190
        %v1254 = vpop.xlane.xlu0 %1253
        %1255 = vadd.xlane.f32.xlu0 %v1192
        %v1256 = vpop.xlane.xlu0 %1255
        %1257 = vadd.xlane.f32.xlu0 %v1194
        %v1258 = vpop.xlane.xlu0 %1257
        %1259 = vadd.xlane.f32.xlu0 %v1196
        %v1260 = vpop.xlane.xlu0 %1259
        %1261 = vadd.xlane.f32.xlu0 %v1198
        %v1262 = vpop.xlane.xlu0 %1261
        %1263 = vadd.xlane.f32.xlu0 %v1200
        %v1264 = vpop.xlane.xlu0 %1263
        %1265 = vadd.xlane.f32.xlu0 %v1202
        %v1266 = vpop.xlane.xlu0 %1265
        %1267 = vadd.xlane.f32.xlu0 %v1204
        %v1268 = vpop.xlane.xlu0 %1267
        %1269 = vadd.xlane.f32.xlu0 %v1206
        %v1270 = vpop.xlane.xlu0 %1269
        %1271 = vadd.xlane.f32.xlu0 %v1208
        %v1272 = vpop.xlane.xlu0 %1271
        %1273 = vadd.xlane.f32.xlu0 %v1210
        %v1274 = vpop.xlane.xlu0 %1273
        %1275 = vadd.xlane.f32.xlu0 %v1212
        %v1276 = vpop.xlane.xlu0 %1275
        %1277 = vadd.xlane.f32.xlu0 %v1214
        %v1278 = vpop.xlane.xlu0 %1277
        %1279 = vadd.xlane.f32.xlu0 %v1216
        %v1280 = vpop.xlane.xlu0 %1279
        %1281 = vadd.xlane.f32.xlu0 %v1218
        %v1282 = vpop.xlane.xlu0 %1281
        %v1283 = vadd.f32 %v1235, %v1252
        %v1284 = vadd.f32 %v1236, %v1254
        %v1285 = vadd.f32 %v1237, %v1256
        %v1286 = vadd.f32 %v1238, %v1258
        %v1287 = vadd.f32 %v1239, %v1260
        %v1288 = vadd.f32 %v1240, %v1262
        %v1289 = vadd.f32 %v1241, %v1264
        %v1290 = vadd.f32 %v1242, %v1266
        %v1291 = vadd.f32 %v1243, %v1268
        %v1292 = vadd.f32 %v1244, %v1270
        %v1293 = vadd.f32 %v1245, %v1272
        %v1294 = vadd.f32 %v1246, %v1274
        %v1295 = vadd.f32 %v1247, %v1276
        %v1296 = vadd.f32 %v1248, %v1278
        %v1297 = vadd.f32 %v1249, %v1280
        %v1298 = vadd.f32 %v1250, %v1282
        %vm1299 = vcmask 7168
        %1300 = vst.msk [vmem:[#allocation3] sm:$0xff] %vm1299, %v1283
        %1301 = vst.msk [vmem:[#allocation3 + $0x8] sm:$0xff] %vm1299, %v1284
        %1302 = vst.msk [vmem:[#allocation3 + $0x10] sm:$0xff] %vm1299, %v1285
        %1303 = vst.msk [vmem:[#allocation3 + $0x18] sm:$0xff] %vm1299, %v1286
        %1304 = vst.msk [vmem:[#allocation3 + $0x20] sm:$0xff] %vm1299, %v1287
        %1305 = vst.msk [vmem:[#allocation3 + $0x28] sm:$0xff] %vm1299, %v1288
        %1306 = vst.msk [vmem:[#allocation3 + $0x30] sm:$0xff] %vm1299, %v1289
        %1307 = vst.msk [vmem:[#allocation3 + $0x38] sm:$0xff] %vm1299, %v1290
        %1308 = vst.msk [vmem:[#allocation3 + $0x40] sm:$0xff] %vm1299, %v1291
        %1309 = vst.msk [vmem:[#allocation3 + $0x48] sm:$0xff] %vm1299, %v1292
        %1310 = vst.msk [vmem:[#allocation3 + $0x50] sm:$0xff] %vm1299, %v1293
        %1311 = vst.msk [vmem:[#allocation3 + $0x58] sm:$0xff] %vm1299, %v1294
        %1312 = vst.msk [vmem:[#allocation3 + $0x60] sm:$0xff] %vm1299, %v1295
        %1313 = vst.msk [vmem:[#allocation3 + $0x68] sm:$0xff] %vm1299, %v1296
        %1314 = vst.msk [vmem:[#allocation3 + $0x70] sm:$0xff] %vm1299, %v1297
        %1315 = vst.msk [vmem:[#allocation3 + $0x78] sm:$0xff] %vm1299, %v1298
        %v1316 = vld [vmem:[#allocation4] sm:$0xff]
        %v1317 = vld [vmem:[#allocation4 + $0x8] sm:$0xff]
        %v1318 = vld [vmem:[#allocation4 + $0x10] sm:$0xff]
        %v1319 = vld [vmem:[#allocation4 + $0x18] sm:$0xff]
        %v1320 = vld [vmem:[#allocation4 + $0x20] sm:$0xff]
        %v1321 = vld [vmem:[#allocation4 + $0x28] sm:$0xff]
        %v1322 = vld [vmem:[#allocation4 + $0x30] sm:$0xff]
        %v1323 = vld [vmem:[#allocation4 + $0x38] sm:$0xff]
        %v1324 = vld [vmem:[#allocation4 + $0x40] sm:$0xff]
        %v1325 = vld [vmem:[#allocation4 + $0x48] sm:$0xff]
        %v1326 = vld [vmem:[#allocation4 + $0x50] sm:$0xff]
        %v1327 = vld [vmem:[#allocation4 + $0x58] sm:$0xff]
        %v1328 = vld [vmem:[#allocation4 + $0x60] sm:$0xff]
        %v1329 = vld [vmem:[#allocation4 + $0x68] sm:$0xff]
        %v1330 = vld [vmem:[#allocation4 + $0x70] sm:$0xff]
        %v1331 = vld [vmem:[#allocation4 + $0x78] sm:$0xff]
        %1333 = vset.pattern.permute.xlu0 0
        %1334 = vperm.xlu0 %1333, %v1060
        %v1335 = vpop.permute.xlu0 %1334
        %1338 = vset.pattern.permute.xlu0 0
        %1339 = vperm.xlu0 %1338, %v1062
        %v1340 = vpop.permute.xlu0 %1339
        %1343 = vset.pattern.permute.xlu0 0
        %1344 = vperm.xlu0 %1343, %v1064
        %v1345 = vpop.permute.xlu0 %1344
        %1348 = vset.pattern.permute.xlu0 0
        %1349 = vperm.xlu0 %1348, %v1066
        %v1350 = vpop.permute.xlu0 %1349
        %1353 = vset.pattern.permute.xlu0 0
        %1354 = vperm.xlu0 %1353, %v1068
        %v1355 = vpop.permute.xlu0 %1354
        %1358 = vset.pattern.permute.xlu0 0
        %1359 = vperm.xlu0 %1358, %v1070
        %v1360 = vpop.permute.xlu0 %1359
        %1363 = vset.pattern.permute.xlu0 0
        %1364 = vperm.xlu0 %1363, %v1072
        %v1365 = vpop.permute.xlu0 %1364
        %1368 = vset.pattern.permute.xlu0 0
        %1369 = vperm.xlu0 %1368, %v1074
        %v1370 = vpop.permute.xlu0 %1369
        %1373 = vset.pattern.permute.xlu0 0
        %1374 = vperm.xlu0 %1373, %v1076
        %v1375 = vpop.permute.xlu0 %1374
        %1378 = vset.pattern.permute.xlu0 0
        %1379 = vperm.xlu0 %1378, %v1078
        %v1380 = vpop.permute.xlu0 %1379
        %1383 = vset.pattern.permute.xlu0 0
        %1384 = vperm.xlu0 %1383, %v1080
        %v1385 = vpop.permute.xlu0 %1384
        %1388 = vset.pattern.permute.xlu0 0
        %1389 = vperm.xlu0 %1388, %v1082
        %v1390 = vpop.permute.xlu0 %1389
        %1393 = vset.pattern.permute.xlu0 0
        %1394 = vperm.xlu0 %1393, %v1084
        %v1395 = vpop.permute.xlu0 %1394
        %1398 = vset.pattern.permute.xlu0 0
        %1399 = vperm.xlu0 %1398, %v1086
        %v1400 = vpop.permute.xlu0 %1399
        %1403 = vset.pattern.permute.xlu0 0
        %1404 = vperm.xlu0 %1403, %v1088
        %v1405 = vpop.permute.xlu0 %1404
        %1408 = vset.pattern.permute.xlu0 0
        %1409 = vperm.xlu0 %1408, %v1090
        %v1410 = vpop.permute.xlu0 %1409
        %v1412 = vmul.f32 %v1335, %v1316
        %v1413 = vmul.f32 %v1340, %v1317
        %v1414 = vmul.f32 %v1345, %v1318
        %v1415 = vmul.f32 %v1350, %v1319
        %v1416 = vmul.f32 %v1355, %v1320
        %v1417 = vmul.f32 %v1360, %v1321
        %v1418 = vmul.f32 %v1365, %v1322
        %v1419 = vmul.f32 %v1370, %v1323
        %v1420 = vmul.f32 %v1375, %v1324
        %v1421 = vmul.f32 %v1380, %v1325
        %v1422 = vmul.f32 %v1385, %v1326
        %v1423 = vmul.f32 %v1390, %v1327
        %v1424 = vmul.f32 %v1395, %v1328
        %v1425 = vmul.f32 %v1400, %v1329
        %v1426 = vmul.f32 %v1405, %v1330
        %v1427 = vmul.f32 %v1410, %v1331
        %v1428 = vpack.c.bf16 %v1190, %v1188
        %v1429 = vpack.c.bf16 %v1194, %v1192
        %v1430 = vpack.c.bf16 %v1198, %v1196
        %v1431 = vpack.c.bf16 %v1202, %v1200
        %v1432 = vpack.c.bf16 %v1206, %v1204
        %v1433 = vpack.c.bf16 %v1210, %v1208
        %v1434 = vpack.c.bf16 %v1214, %v1212
        %v1435 = vpack.c.bf16 %v1218, %v1216
        %v1452 = vunpack.c.l.b16 %v770
        %v1453 = vunpack.c.l.b16 %v771
        %v1454 = vunpack.c.l.b16 %v772
        %v1455 = vunpack.c.l.b16 %v773
        %v1456 = vunpack.c.l.b16 %v774
        %v1457 = vunpack.c.l.b16 %v775
        %v1458 = vunpack.c.l.b16 %v776
        %v1459 = vunpack.c.l.b16 %v777
        %v1460 = vunpack.c.l.b16 %v778
        %v1461 = vunpack.c.l.b16 %v779
        %v1462 = vunpack.c.l.b16 %v780
        %v1463 = vunpack.c.l.b16 %v781
        %v1464 = vunpack.c.l.b16 %v782
        %v1465 = vunpack.c.l.b16 %v783
        %v1466 = vunpack.c.l.b16 %v784
        %v1467 = vunpack.c.l.b16 %v785
        %v1468 = vpack.c.b16 %v1453, %v1452
        %v1469 = vpack.c.b16 %v1455, %v1454
        %v1470 = vpack.c.b16 %v1457, %v1456
        %v1471 = vpack.c.b16 %v1459, %v1458
        %v1472 = vpack.c.b16 %v1461, %v1460
        %v1473 = vpack.c.b16 %v1463, %v1462
        %v1474 = vpack.c.b16 %v1465, %v1464
        %v1475 = vpack.c.b16 %v1467, %v1466
        %1484 = vmatprep.subr.bf16.mxu0 0
        %1485 = vmatpush1.bf16.msra.mxu0 %v1468
        %1486 = vmatprep.subr.bf16.mxu0 0
        %1487 = vmatpush1.bf16.msra.mxu0 %v1469
        %1488 = vmatprep.subr.bf16.mxu0 0
        %1489 = vmatpush1.bf16.msra.mxu0 %v1470
        %1490 = vmatprep.subr.bf16.mxu0 0
        %1491 = vmatpush1.bf16.msra.mxu0 %v1471
        %1492 = vmatprep.subr.bf16.mxu0 0
        %1493 = vmatpush1.bf16.msra.mxu0 %v1472
        %1494 = vmatprep.subr.bf16.mxu0 0
        %1495 = vmatpush1.bf16.msra.mxu0 %v1473
        %1496 = vmatprep.subr.bf16.mxu0 0
        %1497 = vmatpush1.bf16.msra.mxu0 %v1474
        %1498 = vmatprep.subr.bf16.mxu0 0
        %1499 = vmatpush1.bf16.msra.mxu0 %v1475
        %1500 = vmatprep.subr.bf16.mxu0 0
        %1501 = vmatpush1.bf16.msra.mxu0 0
        %1502 = vmatprep.subr.bf16.mxu0 0
        %1503 = vmatpush1.bf16.msra.mxu0 0
        %1504 = vmatprep.subr.bf16.mxu0 0
        %1505 = vmatpush1.bf16.msra.mxu0 0
        %1506 = vmatprep.subr.bf16.mxu0 0
        %1507 = vmatpush1.bf16.msra.mxu0 0
        %1508 = vmatprep.subr.bf16.mxu0 0
        %1509 = vmatpush1.bf16.msra.mxu0 0
        %1510 = vmatprep.subr.bf16.mxu0 0
        %1511 = vmatpush1.bf16.msra.mxu0 0
        %1512 = vmatprep.subr.bf16.mxu0 0
        %1513 = vmatpush1.bf16.msra.mxu0 0
        %1514 = vmatprep.subr.bf16.mxu0 0
        %1515 = vmatpush1.bf16.msra.mxu0 0
        %1516 = vmatprep.mubr.bf16.mxu0 0
        %1517 = vmatmul.mubr.bf16.gmra.mrb[0].mxu0 %v1428
        %v1518 = vpop.f32.mrb[0].mxu0
        %v1519 = vadd.f32 0.0, %v1518
        %v1520 = vpop.f32.mrb[0].mxu0
        %v1521 = vpop.f32.mrb[0].mxu0
        %v1522 = vadd.f32 0.0, %v1521
        %v1523 = vpop.f32.mrb[0].mxu0
        %1524 = vmatprep.mubr.bf16.mxu0 0
        %1525 = vmatmul.mubr.bf16.gmra.mrb[0].mxu0 %v1429
        %v1526 = vpop.f32.mrb[0].mxu0
        %v1527 = vadd.f32 0.0, %v1526
        %v1528 = vpop.f32.mrb[0].mxu0
        %v1529 = vpop.f32.mrb[0].mxu0
        %v1530 = vadd.f32 0.0, %v1529
        %v1531 = vpop.f32.mrb[0].mxu0
        %1532 = vmatprep.mubr.bf16.mxu0 0
        %1533 = vmatmul.mubr.bf16.gmra.mrb[0].mxu0 %v1430
        %v1534 = vpop.f32.mrb[0].mxu0
        %v1535 = vadd.f32 0.0, %v1534
        %v1536 = vpop.f32.mrb[0].mxu0
        %v1537 = vpop.f32.mrb[0].mxu0
        %v1538 = vadd.f32 0.0, %v1537
        %v1539 = vpop.f32.mrb[0].mxu0
        %1540 = vmatprep.mubr.bf16.mxu0 0
        %1541 = vmatmul.mubr.bf16.gmra.mrb[0].mxu0 %v1431
        %v1542 = vpop.f32.mrb[0].mxu0
        %v1543 = vadd.f32 0.0, %v1542
        %v1544 = vpop.f32.mrb[0].mxu0
        %v1545 = vpop.f32.mrb[0].mxu0
        %v1546 = vadd.f32 0.0, %v1545
        %v1547 = vpop.f32.mrb[0].mxu0
        %1548 = vmatprep.mubr.bf16.mxu0 0
        %1549 = vmatmul.mubr.bf16.gmra.mrb[0].mxu0 %v1432
        %v1550 = vpop.f32.mrb[0].mxu0
        %v1551 = vadd.f32 0.0, %v1550
        %v1552 = vpop.f32.mrb[0].mxu0
        %v1553 = vpop.f32.mrb[0].mxu0
        %v1554 = vadd.f32 0.0, %v1553
        %v1555 = vpop.f32.mrb[0].mxu0
        %1556 = vmatprep.mubr.bf16.mxu0 0
        %1557 = vmatmul.mubr.bf16.gmra.mrb[0].mxu0 %v1433
        %v1558 = vpop.f32.mrb[0].mxu0
        %v1559 = vadd.f32 0.0, %v1558
        %v1560 = vpop.f32.mrb[0].mxu0
        %v1561 = vpop.f32.mrb[0].mxu0
        %v1562 = vadd.f32 0.0, %v1561
        %v1563 = vpop.f32.mrb[0].mxu0
        %1564 = vmatprep.mubr.bf16.mxu0 0
        %1565 = vmatmul.mubr.bf16.gmra.mrb[0].mxu0 %v1434
        %v1566 = vpop.f32.mrb[0].mxu0
        %v1567 = vadd.f32 0.0, %v1566
        %v1568 = vpop.f32.mrb[0].mxu0
        %v1569 = vpop.f32.mrb[0].mxu0
        %v1570 = vadd.f32 0.0, %v1569
        %v1571 = vpop.f32.mrb[0].mxu0
        %1572 = vmatprep.mubr.bf16.mxu0 0
        %1573 = vmatmul.mubr.bf16.gmra.mrb[0].mxu0 %v1435
        %v1574 = vpop.f32.mrb[0].mxu0
        %v1575 = vadd.f32 0.0, %v1574
        %v1576 = vpop.f32.mrb[0].mxu0
        %v1577 = vpop.f32.mrb[0].mxu0
        %v1578 = vadd.f32 0.0, %v1577
        %v1579 = vpop.f32.mrb[0].mxu0
        %1580 = vdwg.mxu0
        %v1581 = vadd.f32 %v1412, %v1519
        %v1582 = vadd.f32 %v1413, %v1522
        %v1583 = vadd.f32 %v1414, %v1527
        %v1584 = vadd.f32 %v1415, %v1530
        %v1585 = vadd.f32 %v1416, %v1535
        %v1586 = vadd.f32 %v1417, %v1538
        %v1587 = vadd.f32 %v1418, %v1543
        %v1588 = vadd.f32 %v1419, %v1546
        %v1589 = vadd.f32 %v1420, %v1551
        %v1590 = vadd.f32 %v1421, %v1554
        %v1591 = vadd.f32 %v1422, %v1559
        %v1592 = vadd.f32 %v1423, %v1562
        %v1593 = vadd.f32 %v1424, %v1567
        %v1594 = vadd.f32 %v1425, %v1570
        %v1595 = vadd.f32 %v1426, %v1575
        %v1596 = vadd.f32 %v1427, %v1578
        %1597 = vst [vmem:[#allocation4] sm:$0xff] %v1581
        %1598 = vst [vmem:[#allocation4 + $0x8] sm:$0xff] %v1582
        %1599 = vst [vmem:[#allocation4 + $0x10] sm:$0xff] %v1583
        %1600 = vst [vmem:[#allocation4 + $0x18] sm:$0xff] %v1584
        %1601 = vst [vmem:[#allocation4 + $0x20] sm:$0xff] %v1585
        %1602 = vst [vmem:[#allocation4 + $0x28] sm:$0xff] %v1586
        %1603 = vst [vmem:[#allocation4 + $0x30] sm:$0xff] %v1587
        %1604 = vst [vmem:[#allocation4 + $0x38] sm:$0xff] %v1588
        %1605 = vst [vmem:[#allocation4 + $0x40] sm:$0xff] %v1589
        %1606 = vst [vmem:[#allocation4 + $0x48] sm:$0xff] %v1590
        %1607 = vst [vmem:[#allocation4 + $0x50] sm:$0xff] %v1591
        %1608 = vst [vmem:[#allocation4 + $0x58] sm:$0xff] %v1592
        %1609 = vst [vmem:[#allocation4 + $0x60] sm:$0xff] %v1593
        %1610 = vst [vmem:[#allocation4 + $0x68] sm:$0xff] %v1594
        %1611 = vst [vmem:[#allocation4 + $0x70] sm:$0xff] %v1595
        %1612 = vst [vmem:[#allocation4 + $0x78] sm:$0xff] %v1596
        %1613 = vst.msk [vmem:[#allocation2] sm:$0xff] %vm1299, %v1027
        %1614 = vst.msk [vmem:[#allocation2 + $0x8] sm:$0xff] %vm1299, %v1028
        %1615 = vst.msk [vmem:[#allocation2 + $0x10] sm:$0xff] %vm1299, %v1029
        %1616 = vst.msk [vmem:[#allocation2 + $0x18] sm:$0xff] %vm1299, %v1030
        %1617 = vst.msk [vmem:[#allocation2 + $0x20] sm:$0xff] %vm1299, %v1031
        %1618 = vst.msk [vmem:[#allocation2 + $0x28] sm:$0xff] %vm1299, %v1032
        %1619 = vst.msk [vmem:[#allocation2 + $0x30] sm:$0xff] %vm1299, %v1033
        %1620 = vst.msk [vmem:[#allocation2 + $0x38] sm:$0xff] %vm1299, %v1034
        %1621 = vst.msk [vmem:[#allocation2 + $0x40] sm:$0xff] %vm1299, %v1035
        %1622 = vst.msk [vmem:[#allocation2 + $0x48] sm:$0xff] %vm1299, %v1036
        %1623 = vst.msk [vmem:[#allocation2 + $0x50] sm:$0xff] %vm1299, %v1037
        %1624 = vst.msk [vmem:[#allocation2 + $0x58] sm:$0xff] %vm1299, %v1038
        %1625 = vst.msk [vmem:[#allocation2 + $0x60] sm:$0xff] %vm1299, %v1039
        %1626 = vst.msk [vmem:[#allocation2 + $0x68] sm:$0xff] %vm1299, %v1040
        %1627 = vst.msk [vmem:[#allocation2 + $0x70] sm:$0xff] %vm1299, %v1041
        %1628 = vst.msk [vmem:[#allocation2 + $0x78] sm:$0xff] %vm1299, %v1042
        %p1629 = scmp.eq.s32.totalorder %s24, 1
        // Predicated region
        $region172: #{spatial_self_attention.5} parent=154 // pred_check
          %p1630 = pneg %p1629
        $region173: #{spatial_self_attention.5} parent=154 // pred_check_branch
          %1632 = sbr.rel (%p1630) target = $region175
        $region174: #{spatial_self_attention.5} parent=154 // pred_region
          %v1633 = vld [vmem:[#allocation4] sm:$0xff]
          %v1634 = vld [vmem:[#allocation4 + $0x8] sm:$0xff]
          %v1635 = vld [vmem:[#allocation4 + $0x10] sm:$0xff]
          %v1636 = vld [vmem:[#allocation4 + $0x18] sm:$0xff]
          %v1637 = vld [vmem:[#allocation4 + $0x20] sm:$0xff]
          %v1638 = vld [vmem:[#allocation4 + $0x28] sm:$0xff]
          %v1639 = vld [vmem:[#allocation4 + $0x30] sm:$0xff]
          %v1640 = vld [vmem:[#allocation4 + $0x38] sm:$0xff]
          %v1641 = vld [vmem:[#allocation4 + $0x40] sm:$0xff]
          %v1642 = vld [vmem:[#allocation4 + $0x48] sm:$0xff]
          %v1643 = vld [vmem:[#allocation4 + $0x50] sm:$0xff]
          %v1644 = vld [vmem:[#allocation4 + $0x58] sm:$0xff]
          %v1645 = vld [vmem:[#allocation4 + $0x60] sm:$0xff]
          %v1646 = vld [vmem:[#allocation4 + $0x68] sm:$0xff]
          %v1647 = vld [vmem:[#allocation4 + $0x70] sm:$0xff]
          %v1648 = vld [vmem:[#allocation4 + $0x78] sm:$0xff]
          %v1649 = vld [vmem:[#allocation3] sm:$0xff]
          %v1650 = vld [vmem:[#allocation3 + $0x8] sm:$0xff]
          %v1651 = vld [vmem:[#allocation3 + $0x10] sm:$0xff]
          %v1652 = vld [vmem:[#allocation3 + $0x18] sm:$0xff]
          %v1653 = vld [vmem:[#allocation3 + $0x20] sm:$0xff]
          %v1654 = vld [vmem:[#allocation3 + $0x28] sm:$0xff]
          %v1655 = vld [vmem:[#allocation3 + $0x30] sm:$0xff]
          %v1656 = vld [vmem:[#allocation3 + $0x38] sm:$0xff]
          %v1657 = vld [vmem:[#allocation3 + $0x40] sm:$0xff]
          %v1658 = vld [vmem:[#allocation3 + $0x48] sm:$0xff]
          %v1659 = vld [vmem:[#allocation3 + $0x50] sm:$0xff]
          %v1660 = vld [vmem:[#allocation3 + $0x58] sm:$0xff]
          %v1661 = vld [vmem:[#allocation3 + $0x60] sm:$0xff]
          %v1662 = vld [vmem:[#allocation3 + $0x68] sm:$0xff]
          %v1663 = vld [vmem:[#allocation3 + $0x70] sm:$0xff]
          %v1664 = vld [vmem:[#allocation3 + $0x78] sm:$0xff]
          %v1665 = vrcp.pop %v1649
          %v1666 = vrcp.pop %v1650
          %v1667 = vrcp.pop %v1651
          %v1668 = vrcp.pop %v1652
          %v1669 = vrcp.pop %v1653
          %v1670 = vrcp.pop %v1654
          %v1671 = vrcp.pop %v1655
          %v1672 = vrcp.pop %v1656
          %v1673 = vrcp.pop %v1657
          %v1674 = vrcp.pop %v1658
          %v1675 = vrcp.pop %v1659
          %v1676 = vrcp.pop %v1660
          %v1677 = vrcp.pop %v1661
          %v1678 = vrcp.pop %v1662
          %v1679 = vrcp.pop %v1663
          %v1680 = vrcp.pop %v1664
          %1682 = vset.pattern.permute.xlu0 0
          %1683 = vperm.xlu0 %1682, %v1665
          %v1684 = vpop.permute.xlu0 %1683
          %1687 = vset.pattern.permute.xlu0 0
          %1688 = vperm.xlu0 %1687, %v1666
          %v1689 = vpop.permute.xlu0 %1688
          %1692 = vset.pattern.permute.xlu0 0
          %1693 = vperm.xlu0 %1692, %v1667
          %v1694 = vpop.permute.xlu0 %1693
          %1697 = vset.pattern.permute.xlu0 0
          %1698 = vperm.xlu0 %1697, %v1668
          %v1699 = vpop.permute.xlu0 %1698
          %1702 = vset.pattern.permute.xlu0 0
          %1703 = vperm.xlu0 %1702, %v1669
          %v1704 = vpop.permute.xlu0 %1703
          %1707 = vset.pattern.permute.xlu0 0
          %1708 = vperm.xlu0 %1707, %v1670
          %v1709 = vpop.permute.xlu0 %1708
          %1712 = vset.pattern.permute.xlu0 0
          %1713 = vperm.xlu0 %1712, %v1671
          %v1714 = vpop.permute.xlu0 %1713
          %1717 = vset.pattern.permute.xlu0 0
          %1718 = vperm.xlu0 %1717, %v1672
          %v1719 = vpop.permute.xlu0 %1718
          %1722 = vset.pattern.permute.xlu0 0
          %1723 = vperm.xlu0 %1722, %v1673
          %v1724 = vpop.permute.xlu0 %1723
          %1727 = vset.pattern.permute.xlu0 0
          %1728 = vperm.xlu0 %1727, %v1674
          %v1729 = vpop.permute.xlu0 %1728
          %1732 = vset.pattern.permute.xlu0 0
          %1733 = vperm.xlu0 %1732, %v1675
          %v1734 = vpop.permute.xlu0 %1733
          %1737 = vset.pattern.permute.xlu0 0
          %1738 = vperm.xlu0 %1737, %v1676
          %v1739 = vpop.permute.xlu0 %1738
          %1742 = vset.pattern.permute.xlu0 0
          %1743 = vperm.xlu0 %1742, %v1677
          %v1744 = vpop.permute.xlu0 %1743
          %1747 = vset.pattern.permute.xlu0 0
          %1748 = vperm.xlu0 %1747, %v1678
          %v1749 = vpop.permute.xlu0 %1748
          %1752 = vset.pattern.permute.xlu0 0
          %1753 = vperm.xlu0 %1752, %v1679
          %v1754 = vpop.permute.xlu0 %1753
          %1757 = vset.pattern.permute.xlu0 0
          %1758 = vperm.xlu0 %1757, %v1680
          %v1759 = vpop.permute.xlu0 %1758
          %v1761 = vmul.f32 %v1633, %v1684
          %v1762 = vmul.f32 %v1634, %v1689
          %v1763 = vmul.f32 %v1635, %v1694
          %v1764 = vmul.f32 %v1636, %v1699
          %v1765 = vmul.f32 %v1637, %v1704
          %v1766 = vmul.f32 %v1638, %v1709
          %v1767 = vmul.f32 %v1639, %v1714
          %v1768 = vmul.f32 %v1640, %v1719
          %v1769 = vmul.f32 %v1641, %v1724
          %v1770 = vmul.f32 %v1642, %v1729
          %v1771 = vmul.f32 %v1643, %v1734
          %v1772 = vmul.f32 %v1644, %v1739
          %v1773 = vmul.f32 %v1645, %v1744
          %v1774 = vmul.f32 %v1646, %v1749
          %v1775 = vmul.f32 %v1647, %v1754
          %v1776 = vmul.f32 %v1648, %v1759
          %v1777 = vpack.c.bf16 %v1762, %v1761
          %v1778 = vpack.c.bf16 %v1764, %v1763
          %v1779 = vpack.c.bf16 %v1766, %v1765
          %v1780 = vpack.c.bf16 %v1768, %v1767
          %v1781 = vpack.c.bf16 %v1770, %v1769
          %v1782 = vpack.c.bf16 %v1772, %v1771
          %v1783 = vpack.c.bf16 %v1774, %v1773
          %v1784 = vpack.c.bf16 %v1776, %v1775
          %v1785 = vld [vmem:[%s4] sm:$0xf]
          %v1786 = vld [vmem:[%s4 + $0x4] sm:$0xf]
          %v1787 = vld [vmem:[%s4 + $0x8] sm:$0xf]
          %v1788 = vld [vmem:[%s4 + $0xc] sm:$0xf]
          %v1789 = vld [vmem:[%s4 + $0x10] sm:$0xf]
          %v1790 = vld [vmem:[%s4 + $0x14] sm:$0xf]
          %v1791 = vld [vmem:[%s4 + $0x18] sm:$0xf]
          %v1792 = vld [vmem:[%s4 + $0x1c] sm:$0xf]
          %v1793 = vld [vmem:[%s4 + $0x20] sm:$0xf]
          %v1794 = vld [vmem:[%s4 + $0x24] sm:$0xf]
          %v1795 = vld [vmem:[%s4 + $0x28] sm:$0xf]
          %v1796 = vld [vmem:[%s4 + $0x2c] sm:$0xf]
          %v1797 = vld [vmem:[%s4 + $0x30] sm:$0xf]
          %v1798 = vld [vmem:[%s4 + $0x34] sm:$0xf]
          %v1799 = vld [vmem:[%s4 + $0x38] sm:$0xf]
          %v1800 = vld [vmem:[%s4 + $0x3c] sm:$0xf]
          %v1801 = vld [vmem:[%s5] sm:$0x1]
          %v1803 = vlaneseq
          %v1804 = vshrl.u32 %v1803, 7
          %v1805 = vsub.s32 0, %v1804
          %v1806 = vrot.slane %v1801, %v1805
          %v1824 = vunpack.c.l.b16 %v1785
          %v1825 = vunpack.c.l.b16 %v1786
          %v1826 = vunpack.c.l.b16 %v1787
          %v1827 = vunpack.c.l.b16 %v1788
          %v1828 = vunpack.c.l.b16 %v1789
          %v1829 = vunpack.c.l.b16 %v1790
          %v1830 = vunpack.c.l.b16 %v1791
          %v1831 = vunpack.c.l.b16 %v1792
          %v1832 = vunpack.c.l.b16 %v1793
          %v1833 = vunpack.c.l.b16 %v1794
          %v1834 = vunpack.c.l.b16 %v1795
          %v1835 = vunpack.c.l.b16 %v1796
          %v1836 = vunpack.c.l.b16 %v1797
          %v1837 = vunpack.c.l.b16 %v1798
          %v1838 = vunpack.c.l.b16 %v1799
          %v1839 = vunpack.c.l.b16 %v1800
          %v1840 = vpack.c.b16 %v1825, %v1824
          %v1841 = vpack.c.b16 %v1827, %v1826
          %v1842 = vpack.c.b16 %v1829, %v1828
          %v1843 = vpack.c.b16 %v1831, %v1830
          %v1844 = vpack.c.b16 %v1833, %v1832
          %v1845 = vpack.c.b16 %v1835, %v1834
          %v1846 = vpack.c.b16 %v1837, %v1836
          %v1847 = vpack.c.b16 %v1839, %v1838
          %1856 = vmatprep.subr.bf16.mxu0 0
          %1857 = vmatpush1.bf16.msra.mxu0 %v1840
          %1858 = vmatprep.subr.bf16.mxu0 0
          %1859 = vmatpush1.bf16.msra.mxu0 %v1841
          %1860 = vmatprep.subr.bf16.mxu0 0
          %1861 = vmatpush1.bf16.msra.mxu0 %v1842
          %1862 = vmatprep.subr.bf16.mxu0 0
          %1863 = vmatpush1.bf16.msra.mxu0 %v1843
          %1864 = vmatprep.subr.bf16.mxu0 0
          %1865 = vmatpush1.bf16.msra.mxu0 %v1844
          %1866 = vmatprep.subr.bf16.mxu0 0
          %1867 = vmatpush1.bf16.msra.mxu0 %v1845
          %1868 = vmatprep.subr.bf16.mxu0 0
          %1869 = vmatpush1.bf16.msra.mxu0 %v1846
          %1870 = vmatprep.subr.bf16.mxu0 0
          %1871 = vmatpush1.bf16.msra.mxu0 %v1847
          %1872 = vmatprep.subr.bf16.mxu0 0
          %1873 = vmatpush1.bf16.msra.mxu0 0
          %1874 = vmatprep.subr.bf16.mxu0 0
          %1875 = vmatpush1.bf16.msra.mxu0 0
          %1876 = vmatprep.subr.bf16.mxu0 0
          %1877 = vmatpush1.bf16.msra.mxu0 0
          %1878 = vmatprep.subr.bf16.mxu0 0
          %1879 = vmatpush1.bf16.msra.mxu0 0
          %1880 = vmatprep.subr.bf16.mxu0 0
          %1881 = vmatpush1.bf16.msra.mxu0 0
          %1882 = vmatprep.subr.bf16.mxu0 0
          %1883 = vmatpush1.bf16.msra.mxu0 0
          %1884 = vmatprep.subr.bf16.mxu0 0
          %1885 = vmatpush1.bf16.msra.mxu0 0
          %1886 = vmatprep.subr.bf16.mxu0 0
          %1887 = vmatpush1.bf16.msra.mxu0 0
          %1888 = vmatprep.mubr.bf16.mxu0 0
          %1889 = vmatmul.mubr.bf16.gmra.mrb[0].mxu0 %v1777
          %v1890 = vpop.f32.mrb[0].mxu0
          %v1891 = vadd.f32 %v1806, %v1890
          %v1892 = vpop.f32.mrb[0].mxu0
          %v1893 = vpop.f32.mrb[0].mxu0
          %v1894 = vadd.f32 %v1806, %v1893
          %v1895 = vpop.f32.mrb[0].mxu0
          %1896 = vmatprep.mubr.bf16.mxu0 0
          %1897 = vmatmul.mubr.bf16.gmra.mrb[0].mxu0 %v1778
          %v1898 = vpop.f32.mrb[0].mxu0
          %v1899 = vadd.f32 %v1806, %v1898
          %v1900 = vpop.f32.mrb[0].mxu0
          %v1901 = vpop.f32.mrb[0].mxu0
          %v1902 = vadd.f32 %v1806, %v1901
          %v1903 = vpop.f32.mrb[0].mxu0
          %1904 = vmatprep.mubr.bf16.mxu0 0
          %1905 = vmatmul.mubr.bf16.gmra.mrb[0].mxu0 %v1779
          %v1906 = vpop.f32.mrb[0].mxu0
          %v1907 = vadd.f32 %v1806, %v1906
          %v1908 = vpop.f32.mrb[0].mxu0
          %v1909 = vpop.f32.mrb[0].mxu0
          %v1910 = vadd.f32 %v1806, %v1909
          %v1911 = vpop.f32.mrb[0].mxu0
          %1912 = vmatprep.mubr.bf16.mxu0 0
          %1913 = vmatmul.mubr.bf16.gmra.mrb[0].mxu0 %v1780
          %v1914 = vpop.f32.mrb[0].mxu0
          %v1915 = vadd.f32 %v1806, %v1914
          %v1916 = vpop.f32.mrb[0].mxu0
          %v1917 = vpop.f32.mrb[0].mxu0
          %v1918 = vadd.f32 %v1806, %v1917
          %v1919 = vpop.f32.mrb[0].mxu0
          %1920 = vmatprep.mubr.bf16.mxu0 0
          %1921 = vmatmul.mubr.bf16.gmra.mrb[0].mxu0 %v1781
          %v1922 = vpop.f32.mrb[0].mxu0
          %v1923 = vadd.f32 %v1806, %v1922
          %v1924 = vpop.f32.mrb[0].mxu0
          %v1925 = vpop.f32.mrb[0].mxu0
          %v1926 = vadd.f32 %v1806, %v1925
          %v1927 = vpop.f32.mrb[0].mxu0
          %1928 = vmatprep.mubr.bf16.mxu0 0
          %1929 = vmatmul.mubr.bf16.gmra.mrb[0].mxu0 %v1782
          %v1930 = vpop.f32.mrb[0].mxu0
          %v1931 = vadd.f32 %v1806, %v1930
          %v1932 = vpop.f32.mrb[0].mxu0
          %v1933 = vpop.f32.mrb[0].mxu0
          %v1934 = vadd.f32 %v1806, %v1933
          %v1935 = vpop.f32.mrb[0].mxu0
          %1936 = vmatprep.mubr.bf16.mxu0 0
          %1937 = vmatmul.mubr.bf16.gmra.mrb[0].mxu0 %v1783
          %v1938 = vpop.f32.mrb[0].mxu0
          %v1939 = vadd.f32 %v1806, %v1938
          %v1940 = vpop.f32.mrb[0].mxu0
          %v1941 = vpop.f32.mrb[0].mxu0
          %v1942 = vadd.f32 %v1806, %v1941
          %v1943 = vpop.f32.mrb[0].mxu0
          %1944 = vmatprep.mubr.bf16.mxu0 0
          %1945 = vmatmul.mubr.bf16.gmra.mrb[0].mxu0 %v1784
          %v1946 = vpop.f32.mrb[0].mxu0
          %v1947 = vadd.f32 %v1806, %v1946
          %v1948 = vpop.f32.mrb[0].mxu0
          %v1949 = vpop.f32.mrb[0].mxu0
          %v1950 = vadd.f32 %v1806, %v1949
          %v1951 = vpop.f32.mrb[0].mxu0
          %1952 = vdwg.mxu0
          %v1953 = vld [vmem:[%s669] sm:$0xff]
          %v1954 = vld [vmem:[%s669 + $0x8] sm:$0xff]
          %v1955 = vld [vmem:[%s669 + $0x10] sm:$0xff]
          %v1956 = vld [vmem:[%s669 + $0x18] sm:$0xff]
          %v1957 = vld [vmem:[%s669 + $0x20] sm:$0xff]
          %v1958 = vld [vmem:[%s669 + $0x28] sm:$0xff]
          %v1959 = vld [vmem:[%s669 + $0x30] sm:$0xff]
          %v1960 = vld [vmem:[%s669 + $0x38] sm:$0xff]
          %v1961 = vld [vmem:[%s669 + $0x40] sm:$0xff]
          %v1962 = vld [vmem:[%s669 + $0x48] sm:$0xff]
          %v1963 = vld [vmem:[%s669 + $0x50] sm:$0xff]
          %v1964 = vld [vmem:[%s669 + $0x58] sm:$0xff]
          %v1965 = vld [vmem:[%s669 + $0x60] sm:$0xff]
          %v1966 = vld [vmem:[%s669 + $0x68] sm:$0xff]
          %v1967 = vld [vmem:[%s669 + $0x70] sm:$0xff]
          %v1968 = vld [vmem:[%s669 + $0x78] sm:$0xff]
          %v1969 = vadd.f32 %v1953, %v1891
          %v1970 = vadd.f32 %v1954, %v1894
          %v1971 = vadd.f32 %v1955, %v1899
          %v1972 = vadd.f32 %v1956, %v1902
          %v1973 = vadd.f32 %v1957, %v1907
          %v1974 = vadd.f32 %v1958, %v1910
          %v1975 = vadd.f32 %v1959, %v1915
          %v1976 = vadd.f32 %v1960, %v1918
          %v1977 = vadd.f32 %v1961, %v1923
          %v1978 = vadd.f32 %v1962, %v1926
          %v1979 = vadd.f32 %v1963, %v1931
          %v1980 = vadd.f32 %v1964, %v1934
          %v1981 = vadd.f32 %v1965, %v1939
          %v1982 = vadd.f32 %v1966, %v1942
          %v1983 = vadd.f32 %v1967, %v1947
          %v1984 = vadd.f32 %v1968, %v1950
          %1985 = vst [vmem:[%s682] sm:$0xff] %v1969
          %1986 = vst [vmem:[%s682 + $0x8] sm:$0xff] %v1970
          %1987 = vst [vmem:[%s682 + $0x10] sm:$0xff] %v1971
          %1988 = vst [vmem:[%s682 + $0x18] sm:$0xff] %v1972
          %1989 = vst [vmem:[%s682 + $0x20] sm:$0xff] %v1973
          %1990 = vst [vmem:[%s682 + $0x28] sm:$0xff] %v1974
          %1991 = vst [vmem:[%s682 + $0x30] sm:$0xff] %v1975
          %1992 = vst [vmem:[%s682 + $0x38] sm:$0xff] %v1976
          %1993 = vst [vmem:[%s682 + $0x40] sm:$0xff] %v1977
          %1994 = vst [vmem:[%s682 + $0x48] sm:$0xff] %v1978
          %1995 = vst [vmem:[%s682 + $0x50] sm:$0xff] %v1979
          %1996 = vst [vmem:[%s682 + $0x58] sm:$0xff] %v1980
          %1997 = vst [vmem:[%s682 + $0x60] sm:$0xff] %v1981
          %1998 = vst [vmem:[%s682 + $0x68] sm:$0xff] %v1982
          %1999 = vst [vmem:[%s682 + $0x70] sm:$0xff] %v1983
          %2000 = vst [vmem:[%s682 + $0x78] sm:$0xff] %v1984
        $region175: #{spatial_self_attention.5} parent=154 // pred_fallthru
          _
        %s2001 = smul.u32 16, %s23
        %p2002 = scmp.lt.s32.totalorder %s22, 1
        %s2003 = scalar_select %p2002, %s22, 1
        %p2004 = scmp.lt.s32.totalorder %s2001, 31
        %s2005 = scalar_select %p2004, %s2001, 31
        %s2006 = smul.addr %s2003, 32
        %s2007 = sadd.s32 %s2005, %s2006
        %s2008 = smul.addr %s2007, 8
        %s2009 = scalar_lea.vmem %s6, %s2008
        // Predicated region
        $region176: #{spatial_self_attention.5} parent=154 // pred_check
          %p2010 = pneg %p210
        $region177: #{spatial_self_attention.5} parent=154 // pred_check_branch
          %2012 = sbr.rel (%p2010) target = $region179
        $region178: #{spatial_self_attention.5} parent=154 // pred_region
          %s2013 = smul.u32 16, %s23
        $region179: #{spatial_self_attention.5} parent=154 // pred_fallthru
          _
      $region155: #{spatial_self_attention.5} parent=5 // pred_fallthru
        _
      %p2014 = scmp.le.s32.totalorder 2, %s12
      // Predicated region
      $region180: #{spatial_self_attention.5} parent=5 // pred_check
        %p2015 = pneg %p2014
      $region181: #{spatial_self_attention.5} parent=5 // pred_check_branch
        %2017 = sbr.rel (%p2015) target = $region183
      $region182: #{spatial_self_attention.5} parent=5 // pred_region
        %s2018 = ssub.s32 %s12, 2
        // Predicated region
        $region184: #{spatial_self_attention.5} parent=182 // pred_check
          %p2019 = pneg %p216
        $region185: #{spatial_self_attention.5} parent=182 // pred_check_branch
          %2021 = sbr.rel (%p2019) target = $region187
        $region186: #{spatial_self_attention.5} parent=182 // pred_region
          %s2022 = smul.u32 16, %s26
          %p2023 = scmp.lt.s32.totalorder %s25, 1
          %s2024 = scalar_select %p2023, %s25, 1
          %p2025 = scmp.lt.s32.totalorder %s2022, 31
          %s2026 = scalar_select %p2025, %s2022, 31
          %s2027 = smul.addr %s2024, 32
          %s2028 = sadd.s32 %s2026, %s2027
          %s2029 = smul.addr %s2028, 8
          %s2030 = scalar_lea.vmem %s6, %s2029
        $region187: #{spatial_self_attention.5} parent=182 // pred_fallthru
          _
      $region183: #{spatial_self_attention.5} parent=5 // pred_fallthru
        _
    $region6: #{spatial_self_attention.5} parent=1 // loop_footer
      %s16 = sadd.s32 1, %s12
    $region7: #{spatial_self_attention.5} parent=1 // loop_footer_branch
      %11 = sbr.rel target = $region3
    $region8: #{spatial_self_attention.5} parent=1 // loop_exit
      _

</llo_original>
